<compile_context>
chip_gen: v6e
topology: v6e:2x2x1
jax: 0.10.0
libtpu: 0.0.40
codegen_flags: <defaults>
</compile_context>

<pallas_src>
import functools

import jax
import jax.numpy as jnp
from jax.experimental import pallas as pl
from jax.experimental.pallas import tpu as pltpu


# ---------------------------------------------------------------------------
# Pallas kernel: one bidirectional LSTM layer, whole sequence resident in VMEM.
# ---------------------------------------------------------------------------
def _bilstm_layer_kernel(xg_ref, whh_ref, out_f_ref, out_b_ref, hN_ref, cN_ref):
    """Fused fwd+bwd LSTM layer.

    xg_ref : (T, B, 8H) precomputed x @ W_ih + b for both directions, gate
             columns interleaved [i_f,i_b,f_f,f_b,g_f,g_b,o_f,o_b].  The
             backward part is already time-reversed: row s holds the backward
             gates for time T-1-s.
    whh_ref: (2H, 8H) block-diagonal fused recurrent weights (same column
             order as xg; rows 0:H act on h_fwd, rows H:2H on h_bwd).
    out_f_ref: (T, B, H) forward hidden states, natural time order.
    out_b_ref: (T, B, H) backward hidden states, natural time order.
    hN_ref/cN_ref: (B, 2H) final [fwd | bwd] hidden / cell state.
    """
    T, B, _ = xg_ref.shape
    H2 = whh_ref.shape[0]          # 2*H (fwd + bwd fused along lanes)
    H = H2 // 2

    def step(s, carry):
        h_prev, c_prev = carry     # (B, 2H) each, [fwd | bwd]
        # One MXU dot covers both directions: (B, 2H) @ (2H, 8H) -> (B, 8H).
        gates = xg_ref[s] + jnp.dot(h_prev, whh_ref[...],
                                    preferred_element_type=jnp.float32)
        i_g = jax.nn.sigmoid(gates[:, 0 * H2:1 * H2])
        f_g = jax.nn.sigmoid(gates[:, 1 * H2:2 * H2])
        g_g = jnp.tanh(gates[:, 2 * H2:3 * H2])
        o_g = jax.nn.sigmoid(gates[:, 3 * H2:4 * H2])
        c_new = f_g * c_prev + i_g * g_g
        h_new = o_g * jnp.tanh(c_new)
        out_f_ref[s] = h_new[:, :H]            # fwd output for time s
        out_b_ref[T - 1 - s] = h_new[:, H:]    # bwd output for time T-1-s
        return h_new, c_new

    h0 = jnp.zeros((B, H2), jnp.float32)
    c0 = jnp.zeros((B, H2), jnp.float32)
    hN, cN = jax.lax.fori_loop(0, T, step, (h0, c0), unroll=True)
    hN_ref[...] = hN
    cN_ref[...] = cN


def fuse_direction_params(p_fwd, p_bwd, hid_dim):
    """One-time weight fusion (done outside the recurrence / the kernel)."""
    H = hid_dim
    w_ih_f, w_hh_f, b_f = p_fwd
    w_ih_b, w_hh_b, b_b = p_bwd
    # Input projection: concatenated columns [fwd 4H | bwd 4H].
    w_ih_cat = jnp.concatenate([w_ih_f, w_ih_b], axis=1)           # (D, 8H)
    b_cat = jnp.concatenate([b_f, b_b], axis=1)                    # (1, 8H)
    # Recurrent weights: block-diagonal with gate-interleaved columns
    # [i_f,i_b,f_f,f_b,g_f,g_b,o_f,o_b].
    zeros = jnp.zeros((H, 4, H), jnp.float32)
    top = jnp.stack([w_hh_f.reshape(H, 4, H), zeros], axis=2).reshape(H, 8 * H)
    bot = jnp.stack([zeros, w_hh_b.reshape(H, 4, H)], axis=2).reshape(H, 8 * H)
    whh = jnp.concatenate([top, bot], axis=0)                      # (2H, 8H)
    return w_ih_cat, b_cat, whh


def bilstm_layer(x, fused, hid_dim):
    """One bidirectional LSTM layer: XLA input projection + Pallas recurrence."""
    T, B, _ = x.shape
    H = hid_dim
    w_ih_cat, b_cat, whh = fused

    # Hoisted input projection for the whole sequence and both directions:
    # a single (T*B, D) @ (D, 8H) matmul instead of T tiny per-step matmuls.
    xg_cat = jnp.einsum('tbd,dg->tbg', x, w_ih_cat) + b_cat        # (T, B, 8H)
    xg_f = xg_cat[..., :4 * H]
    xg_bR = xg_cat[..., 4 * H:][::-1]          # time-reversed backward gates
    # Interleave per-gate blocks -> [i_f,i_b,f_f,f_b,g_f,g_b,o_f,o_b].
    xg = jnp.stack([xg_f.reshape(T, B, 4, H),
                    xg_bR.reshape(T, B, 4, H)], axis=3).reshape(T, B, 8 * H)

    vmem = pl.BlockSpec(memory_space=pltpu.MemorySpace.VMEM)
    out_f, out_b, hN, cN = pl.pallas_call(
        _bilstm_layer_kernel,
        out_shape=(
            jax.ShapeDtypeStruct((T, B, H), jnp.float32),
            jax.ShapeDtypeStruct((T, B, H), jnp.float32),
            jax.ShapeDtypeStruct((B, 2 * H), jnp.float32),
            jax.ShapeDtypeStruct((B, 2 * H), jnp.float32),
        ),
        in_specs=[vmem, vmem],                 # whole arrays resident in VMEM
        out_specs=(vmem, vmem, vmem, vmem),
    )(xg, whh)
    return out_f, out_b, hN, cN


# ---------------------------------------------------------------------------
# Encoder (bidirectional, n_layers) -- glue in plain JAX.
# ---------------------------------------------------------------------------
def init_encoder_params(key, input_dim, hid_dim, n_layers):
    """Deterministic init matching PyTorch nn.LSTM shapes (U(-k, k), k=1/sqrt(H)).

    Weights are stored transposed vs. PyTorch (W_ih: (in, 4H), W_hh: (H, 4H)),
    gate order (i, f, g, o); the two PyTorch biases are pre-summed.
    """
    k = 1.0 / jnp.sqrt(jnp.float32(hid_dim))
    params = {}
    for layer in range(n_layers):
        in_dim = input_dim if layer == 0 else 2 * hid_dim
        for direction in range(2):
            key, k1, k2, k3, k4 = jax.random.split(key, 5)
            w_ih = jax.random.uniform(k1, (in_dim, 4 * hid_dim),
                                      jnp.float32, -k, k)
            w_hh = jax.random.uniform(k2, (hid_dim, 4 * hid_dim),
                                      jnp.float32, -k, k)
            b_ih = jax.random.uniform(k3, (4 * hid_dim,), jnp.float32, -k, k)
            b_hh = jax.random.uniform(k4, (4 * hid_dim,), jnp.float32, -k, k)
            params[(layer, direction)] = (w_ih, w_hh,
                                          (b_ih + b_hh).reshape(1, 4 * hid_dim))
    return params


def encoder_forward(src, fused_params, hid_dim, n_layers):
    """Equivalent of Encoder.forward: returns (hidden, cell)."""
    x = src
    hiddens, cells = [], []
    for layer in range(n_layers):
        out_f, out_b, hN, cN = bilstm_layer(x, fused_params[layer], hid_dim)
        hiddens += [hN[:, :hid_dim], hN[:, hid_dim:]]   # [l_fwd, l_bwd] order
        cells += [cN[:, :hid_dim], cN[:, hid_dim:]]
        x = jnp.concatenate([out_f, out_b], axis=-1)    # (T, B, 2H) next input
        # TODO(synk): nn.LSTM inter-layer dropout is train-only; inference path omits it.
    hidden = jnp.stack(hiddens, axis=0)                 # (n_layers*2, B, H)
    cell = jnp.stack(cells, axis=0)                     # (n_layers*2, B, H)
    return hidden, cell


# ---------------------------------------------------------------------------
# Pure-JAX reference (lax.scan) for a correctness check.
# ---------------------------------------------------------------------------
def _ref_direction(x, w_ih, w_hh, b, hid_dim, reverse):
    T, B, _ = x.shape
    xs = x[::-1] if reverse else x

    def step(carry, x_t):
        h, c = carry
        gates = x_t @ w_ih + h @ w_hh + b
        H = hid_dim
        i = jax.nn.sigmoid(gates[:, 0 * H:1 * H])
        f = jax.nn.sigmoid(gates[:, 1 * H:2 * H])
        g = jnp.tanh(gates[:, 2 * H:3 * H])
        o = jax.nn.sigmoid(gates[:, 3 * H:4 * H])
        c = f * c + i * g
        h = o * jnp.tanh(c)
        return (h, c), h

    init = (jnp.zeros((B, hid_dim), jnp.float32),
            jnp.zeros((B, hid_dim), jnp.float32))
    (hN, cN), outs = jax.lax.scan(step, init, xs)
    if reverse:
        outs = outs[::-1]
    return outs, hN, cN


def encoder_forward_ref(src, params, hid_dim, n_layers):
    x = src
    hiddens, cells = [], []
    for layer in range(n_layers):
        outs = []
        for direction in range(2):
            w_ih, w_hh, b = params[(layer, direction)]
            o, hN, cN = _ref_direction(x, w_ih, w_hh, b, hid_dim,
                                       reverse=(direction == 1))
            outs.append(o)
            hiddens.append(hN)
            cells.append(cN)
        x = jnp.concatenate(outs, axis=-1)
    return jnp.stack(hiddens, 0), jnp.stack(cells, 0)


if __name__ == "__main__":
    # Module hyper-params (emb_dim is forced to input_dim inside __init__).
    input_dim = 16
    hid_dim = 32
    n_layers = 2
    seq_len = 8
    batch = 2

    key = jax.random.PRNGKey(0)
    key, k_src = jax.random.split(key)
    src = jax.random.normal(k_src, (seq_len, batch, input_dim), jnp.float32)

    raw_params = init_encoder_params(key, input_dim, hid_dim, n_layers)
    fused_params = [
        fuse_direction_params(raw_params[(l, 0)], raw_params[(l, 1)], hid_dim)
        for l in range(n_layers)
    ]

    fwd = jax.jit(functools.partial(encoder_forward,
                                    hid_dim=hid_dim, n_layers=n_layers))
    hidden, cell = fwd(src, fused_params)
    hidden = jax.block_until_ready(hidden)
    cell = jax.block_until_ready(cell)

    assert hidden.shape == (n_layers * 2, batch, hid_dim)
    assert cell.shape == (n_layers * 2, batch, hid_dim)

    h_ref, c_ref = encoder_forward_ref(src, raw_params, hid_dim, n_layers)
    assert jnp.allclose(hidden, h_ref, atol=2e-5, rtol=2e-5), \
        float(jnp.max(jnp.abs(hidden - h_ref)))
    assert jnp.allclose(cell, c_ref, atol=2e-5, rtol=2e-5), \
        float(jnp.max(jnp.abs(cell - c_ref)))

    print("KERNEL_OK")
</pallas_src>

<mosaic_0001>
module attributes {stable_mosaic.version = 11 : i64} {
  func.func @_bilstm_layer_kernel(%arg0: memref<8x2x256xf32, #tpu.memory_space<vmem>>, %arg1: memref<64x256xf32, #tpu.memory_space<vmem>>, %arg2: memref<8x2x32xf32, #tpu.memory_space<vmem>>, %arg3: memref<8x2x32xf32, #tpu.memory_space<vmem>>, %arg4: memref<2x64xf32, #tpu.memory_space<vmem>>, %arg5: memref<2x64xf32, #tpu.memory_space<vmem>>) attributes {dimension_semantics = [], scalar_prefetch = 0 : i64, scratch_operands = 0 : i64, tpu.core_type = #tpu.core_type<tc>} {
    %cst = arith.constant 0.000000e+00 : f32
    %0 = vector.broadcast %cst : f32 to vector<2x64xf32>
    %cst_0 = arith.constant 0.000000e+00 : f32
    %1 = vector.broadcast %cst_0 : f32 to vector<2x64xf32>
    %c0_i32 = arith.constant 0 : i32
    %2 = arith.index_cast %c0_i32 : i32 to index
    %c0 = arith.constant 0 : index
    %c0_1 = arith.constant 0 : index
    %3 = vector.load %arg0[%2, %c0, %c0_1] : memref<8x2x256xf32, #tpu.memory_space<vmem>>, vector<1x2x256xf32>
    %4 = vector.shape_cast %3 : vector<1x2x256xf32> to vector<2x256xf32>
    %c0_2 = arith.constant 0 : index
    %c0_3 = arith.constant 0 : index
    %5 = vector.load %arg1[%c0_2, %c0_3] : memref<64x256xf32, #tpu.memory_space<vmem>>, vector<64x256xf32>
    %cst_4 = arith.constant dense<0.000000e+00> : vector<2x256xf32>
    %6 = tpu.matmul %0, %5, %cst_4 {dimension_numbers = #tpu.dot_dimension_numbers<[1], [0], [0], [1], [0, 0, 1, 1], [], []>} : vector<2x64xf32>, vector<64x256xf32>, vector<2x256xf32> -> vector<2x256xf32>
    %7 = arith.addf %4, %6 : vector<2x256xf32>
    %8 = vector.extract_strided_slice %7 {offsets = [0, 0], sizes = [2, 64], strides = [1, 1]} : vector<2x256xf32> to vector<2x64xf32>
    %9 = arith.negf %8 : vector<2x64xf32>
    %10 = math.exp %9 : vector<2x64xf32>
    %cst_5 = arith.constant 1.000000e+00 : f32
    %11 = vector.broadcast %cst_5 : f32 to vector<2x64xf32>
    %12 = arith.addf %11, %10 : vector<2x64xf32>
    %13 = arith.divf %11, %12 : vector<2x64xf32>
    %14 = vector.extract_strided_slice %7 {offsets = [0, 64], sizes = [2, 64], strides = [1, 1]} : vector<2x256xf32> to vector<2x64xf32>
    %15 = arith.negf %14 : vector<2x64xf32>
    %16 = math.exp %15 : vector<2x64xf32>
    %cst_6 = arith.constant 1.000000e+00 : f32
    %17 = vector.broadcast %cst_6 : f32 to vector<2x64xf32>
    %18 = arith.addf %17, %16 : vector<2x64xf32>
    %19 = arith.divf %17, %18 : vector<2x64xf32>
    %20 = vector.extract_strided_slice %7 {offsets = [0, 128], sizes = [2, 64], strides = [1, 1]} : vector<2x256xf32> to vector<2x64xf32>
    %21 = math.tanh %20 : vector<2x64xf32>
    %22 = vector.extract_strided_slice %7 {offsets = [0, 192], sizes = [2, 64], strides = [1, 1]} : vector<2x256xf32> to vector<2x64xf32>
    %23 = arith.negf %22 : vector<2x64xf32>
    %24 = math.exp %23 : vector<2x64xf32>
    %cst_7 = arith.constant 1.000000e+00 : f32
    %25 = vector.broadcast %cst_7 : f32 to vector<2x64xf32>
    %26 = arith.addf %25, %24 : vector<2x64xf32>
    %27 = arith.divf %25, %26 : vector<2x64xf32>
    %28 = arith.mulf %19, %1 : vector<2x64xf32>
    %29 = arith.mulf %13, %21 : vector<2x64xf32>
    %30 = arith.addf %28, %29 : vector<2x64xf32>
    %31 = math.tanh %30 : vector<2x64xf32>
    %32 = arith.mulf %27, %31 : vector<2x64xf32>
    %33 = vector.extract_strided_slice %32 {offsets = [0, 0], sizes = [2, 32], strides = [1, 1]} : vector<2x64xf32> to vector<2x32xf32>
    %34 = arith.index_cast %c0_i32 : i32 to index
    %c0_8 = arith.constant 0 : index
    %c0_9 = arith.constant 0 : index
    %35 = vector.load %arg2[%34, %c0_8, %c0_9] : memref<8x2x32xf32, #tpu.memory_space<vmem>>, vector<1x2x32xf32>
    %36 = vector.shape_cast %35 : vector<1x2x32xf32> to vector<2x32xf32>
    %37 = vector.shape_cast %33 : vector<2x32xf32> to vector<1x2x32xf32>
    tpu.vector_store %arg2[%34, %c0_8, %c0_9], %37 {strides = array<i32>} : memref<8x2x32xf32, #tpu.memory_space<vmem>>, vector<1x2x32xf32>,
    %38 = vector.extract_strided_slice %32 {offsets = [0, 32], sizes = [2, 32], strides = [1, 1]} : vector<2x64xf32> to vector<2x32xf32>
    %c7_i32 = arith.constant 7 : i32
    %39 = arith.subi %c7_i32, %c0_i32 : i32
    %40 = arith.index_cast %39 : i32 to index
    %c0_10 = arith.constant 0 : index
    %c0_11 = arith.constant 0 : index
    %41 = vector.load %arg3[%40, %c0_10, %c0_11] : memref<8x2x32xf32, #tpu.memory_space<vmem>>, vector<1x2x32xf32>
    %42 = vector.shape_cast %41 : vector<1x2x32xf32> to vector<2x32xf32>
    %43 = vector.shape_cast %38 : vector<2x32xf32> to vector<1x2x32xf32>
    tpu.vector_store %arg3[%40, %c0_10, %c0_11], %43 {strides = array<i32>} : memref<8x2x32xf32, #tpu.memory_space<vmem>>, vector<1x2x32xf32>,
    %c1_i32 = arith.constant 1 : i32
    %44 = arith.index_cast %c1_i32 : i32 to index
    %c0_12 = arith.constant 0 : index
    %c0_13 = arith.constant 0 : index
    %45 = vector.load %arg0[%44, %c0_12, %c0_13] : memref<8x2x256xf32, #tpu.memory_space<vmem>>, vector<1x2x256xf32>
    %46 = vector.shape_cast %45 : vector<1x2x256xf32> to vector<2x256xf32>
    %c0_14 = arith.constant 0 : index
    %c0_15 = arith.constant 0 : index
    %47 = vector.load %arg1[%c0_14, %c0_15] : memref<64x256xf32, #tpu.memory_space<vmem>>, vector<64x256xf32>
    %cst_16 = arith.constant dense<0.000000e+00> : vector<2x256xf32>
    %48 = tpu.matmul %32, %47, %cst_16 {dimension_numbers = #tpu.dot_dimension_numbers<[1], [0], [0], [1], [0, 0, 1, 1], [], []>} : vector<2x64xf32>, vector<64x256xf32>, vector<2x256xf32> -> vector<2x256xf32>
    %49 = arith.addf %46, %48 : vector<2x256xf32>
    %50 = vector.extract_strided_slice %49 {offsets = [0, 0], sizes = [2, 64], strides = [1, 1]} : vector<2x256xf32> to vector<2x64xf32>
    %51 = arith.negf %50 : vector<2x64xf32>
    %52 = math.exp %51 : vector<2x64xf32>
    %cst_17 = arith.constant 1.000000e+00 : f32
    %53 = vector.broadcast %cst_17 : f32 to vector<2x64xf32>
    %54 = arith.addf %53, %52 : vector<2x64xf32>
    %55 = arith.divf %53, %54 : vector<2x64xf32>
    %56 = vector.extract_strided_slice %49 {offsets = [0, 64], sizes = [2, 64], strides = [1, 1]} : vector<2x256xf32> to vector<2x64xf32>
    %57 = arith.negf %56 : vector<2x64xf32>
    %58 = math.exp %57 : vector<2x64xf32>
    %cst_18 = arith.constant 1.000000e+00 : f32
    %59 = vector.broadcast %cst_18 : f32 to vector<2x64xf32>
    %60 = arith.addf %59, %58 : vector<2x64xf32>
    %61 = arith.divf %59, %60 : vector<2x64xf32>
    %62 = vector.extract_strided_slice %49 {offsets = [0, 128], sizes = [2, 64], strides = [1, 1]} : vector<2x256xf32> to vector<2x64xf32>
    %63 = math.tanh %62 : vector<2x64xf32>
    %64 = vector.extract_strided_slice %49 {offsets = [0, 192], sizes = [2, 64], strides = [1, 1]} : vector<2x256xf32> to vector<2x64xf32>
    %65 = arith.negf %64 : vector<2x64xf32>
    %66 = math.exp %65 : vector<2x64xf32>
    %cst_19 = arith.constant 1.000000e+00 : f32
    %67 = vector.broadcast %cst_19 : f32 to vector<2x64xf32>
    %68 = arith.addf %67, %66 : vector<2x64xf32>
    %69 = arith.divf %67, %68 : vector<2x64xf32>
    %70 = arith.mulf %61, %30 : vector<2x64xf32>
    %71 = arith.mulf %55, %63 : vector<2x64xf32>
    %72 = arith.addf %70, %71 : vector<2x64xf32>
    %73 = math.tanh %72 : vector<2x64xf32>
    %74 = arith.mulf %69, %73 : vector<2x64xf32>
    %75 = vector.extract_strided_slice %74 {offsets = [0, 0], sizes = [2, 32], strides = [1, 1]} : vector<2x64xf32> to vector<2x32xf32>
    %76 = arith.index_cast %c1_i32 : i32 to index
    %c0_20 = arith.constant 0 : index
    %c0_21 = arith.constant 0 : index
    %77 = vector.load %arg2[%76, %c0_20, %c0_21] : memref<8x2x32xf32, #tpu.memory_space<vmem>>, vector<1x2x32xf32>
    %78 = vector.shape_cast %77 : vector<1x2x32xf32> to vector<2x32xf32>
    %79 = vector.shape_cast %75 : vector<2x32xf32> to vector<1x2x32xf32>
    tpu.vector_store %arg2[%76, %c0_20, %c0_21], %79 {strides = array<i32>} : memref<8x2x32xf32, #tpu.memory_space<vmem>>, vector<1x2x32xf32>,
    %80 = vector.extract_strided_slice %74 {offsets = [0, 32], sizes = [2, 32], strides = [1, 1]} : vector<2x64xf32> to vector<2x32xf32>
    %c7_i32_22 = arith.constant 7 : i32
    %81 = arith.subi %c7_i32_22, %c1_i32 : i32
    %82 = arith.index_cast %81 : i32 to index
    %c0_23 = arith.constant 0 : index
    %c0_24 = arith.constant 0 : index
    %83 = vector.load %arg3[%82, %c0_23, %c0_24] : memref<8x2x32xf32, #tpu.memory_space<vmem>>, vector<1x2x32xf32>
    %84 = vector.shape_cast %83 : vector<1x2x32xf32> to vector<2x32xf32>
    %85 = vector.shape_cast %80 : vector<2x32xf32> to vector<1x2x32xf32>
    tpu.vector_store %arg3[%82, %c0_23, %c0_24], %85 {strides = array<i32>} : memref<8x2x32xf32, #tpu.memory_space<vmem>>, vector<1x2x32xf32>,
    %c2_i32 = arith.constant 2 : i32
    %86 = arith.index_cast %c2_i32 : i32 to index
    %c0_25 = arith.constant 0 : index
    %c0_26 = arith.constant 0 : index
    %87 = vector.load %arg0[%86, %c0_25, %c0_26] : memref<8x2x256xf32, #tpu.memory_space<vmem>>, vector<1x2x256xf32>
    %88 = vector.shape_cast %87 : vector<1x2x256xf32> to vector<2x256xf32>
    %c0_27 = arith.constant 0 : index
    %c0_28 = arith.constant 0 : index
    %89 = vector.load %arg1[%c0_27, %c0_28] : memref<64x256xf32, #tpu.memory_space<vmem>>, vector<64x256xf32>
    %cst_29 = arith.constant dense<0.000000e+00> : vector<2x256xf32>
    %90 = tpu.matmul %74, %89, %cst_29 {dimension_numbers = #tpu.dot_dimension_numbers<[1], [0], [0], [1], [0, 0, 1, 1], [], []>} : vector<2x64xf32>, vector<64x256xf32>, vector<2x256xf32> -> vector<2x256xf32>
    %91 = arith.addf %88, %90 : vector<2x256xf32>
    %92 = vector.extract_strided_slice %91 {offsets = [0, 0], sizes = [2, 64], strides = [1, 1]} : vector<2x256xf32> to vector<2x64xf32>
    %93 = arith.negf %92 : vector<2x64xf32>
    %94 = math.exp %93 : vector<2x64xf32>
    %cst_30 = arith.constant 1.000000e+00 : f32
    %95 = vector.broadcast %cst_30 : f32 to vector<2x64xf32>
    %96 = arith.addf %95, %94 : vector<2x64xf32>
    %97 = arith.divf %95, %96 : vector<2x64xf32>
    %98 = vector.extract_strided_slice %91 {offsets = [0, 64], sizes = [2, 64], strides = [1, 1]} : vector<2x256xf32> to vector<2x64xf32>
    %99 = arith.negf %98 : vector<2x64xf32>
    %100 = math.exp %99 : vector<2x64xf32>
    %cst_31 = arith.constant 1.000000e+00 : f32
    %101 = vector.broadcast %cst_31 : f32 to vector<2x64xf32>
    %102 = arith.addf %101, %100 : vector<2x64xf32>
    %103 = arith.divf %101, %102 : vector<2x64xf32>
    %104 = vector.extract_strided_slice %91 {offsets = [0, 128], sizes = [2, 64], strides = [1, 1]} : vector<2x256xf32> to vector<2x64xf32>
    %105 = math.tanh %104 : vector<2x64xf32>
    %106 = vector.extract_strided_slice %91 {offsets = [0, 192], sizes = [2, 64], strides = [1, 1]} : vector<2x256xf32> to vector<2x64xf32>
    %107 = arith.negf %106 : vector<2x64xf32>
    %108 = math.exp %107 : vector<2x64xf32>
    %cst_32 = arith.constant 1.000000e+00 : f32
    %109 = vector.broadcast %cst_32 : f32 to vector<2x64xf32>
    %110 = arith.addf %109, %108 : vector<2x64xf32>
    %111 = arith.divf %109, %110 : vector<2x64xf32>
    %112 = arith.mulf %103, %72 : vector<2x64xf32>
    %113 = arith.mulf %97, %105 : vector<2x64xf32>
    %114 = arith.addf %112, %113 : vector<2x64xf32>
    %115 = math.tanh %114 : vector<2x64xf32>
    %116 = arith.mulf %111, %115 : vector<2x64xf32>
    %117 = vector.extract_strided_slice %116 {offsets = [0, 0], sizes = [2, 32], strides = [1, 1]} : vector<2x64xf32> to vector<2x32xf32>
    %118 = arith.index_cast %c2_i32 : i32 to index
    %c0_33 = arith.constant 0 : index
    %c0_34 = arith.constant 0 : index
    %119 = vector.load %arg2[%118, %c0_33, %c0_34] : memref<8x2x32xf32, #tpu.memory_space<vmem>>, vector<1x2x32xf32>
    %120 = vector.shape_cast %119 : vector<1x2x32xf32> to vector<2x32xf32>
    %121 = vector.shape_cast %117 : vector<2x32xf32> to vector<1x2x32xf32>
    tpu.vector_store %arg2[%118, %c0_33, %c0_34], %121 {strides = array<i32>} : memref<8x2x32xf32, #tpu.memory_space<vmem>>, vector<1x2x32xf32>,
    %122 = vector.extract_strided_slice %116 {offsets = [0, 32], sizes = [2, 32], strides = [1, 1]} : vector<2x64xf32> to vector<2x32xf32>
    %c7_i32_35 = arith.constant 7 : i32
    %123 = arith.subi %c7_i32_35, %c2_i32 : i32
    %124 = arith.index_cast %123 : i32 to index
    %c0_36 = arith.constant 0 : index
    %c0_37 = arith.constant 0 : index
    %125 = vector.load %arg3[%124, %c0_36, %c0_37] : memref<8x2x32xf32, #tpu.memory_space<vmem>>, vector<1x2x32xf32>
    %126 = vector.shape_cast %125 : vector<1x2x32xf32> to vector<2x32xf32>
    %127 = vector.shape_cast %122 : vector<2x32xf32> to vector<1x2x32xf32>
    tpu.vector_store %arg3[%124, %c0_36, %c0_37], %127 {strides = array<i32>} : memref<8x2x32xf32, #tpu.memory_space<vmem>>, vector<1x2x32xf32>,
    %c3_i32 = arith.constant 3 : i32
    %128 = arith.index_cast %c3_i32 : i32 to index
    %c0_38 = arith.constant 0 : index
    %c0_39 = arith.constant 0 : index
    %129 = vector.load %arg0[%128, %c0_38, %c0_39] : memref<8x2x256xf32, #tpu.memory_space<vmem>>, vector<1x2x256xf32>
    %130 = vector.shape_cast %129 : vector<1x2x256xf32> to vector<2x256xf32>
    %c0_40 = arith.constant 0 : index
    %c0_41 = arith.constant 0 : index
    %131 = vector.load %arg1[%c0_40, %c0_41] : memref<64x256xf32, #tpu.memory_space<vmem>>, vector<64x256xf32>
    %cst_42 = arith.constant dense<0.000000e+00> : vector<2x256xf32>
    %132 = tpu.matmul %116, %131, %cst_42 {dimension_numbers = #tpu.dot_dimension_numbers<[1], [0], [0], [1], [0, 0, 1, 1], [], []>} : vector<2x64xf32>, vector<64x256xf32>, vector<2x256xf32> -> vector<2x256xf32>
    %133 = arith.addf %130, %132 : vector<2x256xf32>
    %134 = vector.extract_strided_slice %133 {offsets = [0, 0], sizes = [2, 64], strides = [1, 1]} : vector<2x256xf32> to vector<2x64xf32>
    %135 = arith.negf %134 : vector<2x64xf32>
    %136 = math.exp %135 : vector<2x64xf32>
    %cst_43 = arith.constant 1.000000e+00 : f32
    %137 = vector.broadcast %cst_43 : f32 to vector<2x64xf32>
    %138 = arith.addf %137, %136 : vector<2x64xf32>
    %139 = arith.divf %137, %138 : vector<2x64xf32>
    %140 = vector.extract_strided_slice %133 {offsets = [0, 64], sizes = [2, 64], strides = [1, 1]} : vector<2x256xf32> to vector<2x64xf32>
    %141 = arith.negf %140 : vector<2x64xf32>
    %142 = math.exp %141 : vector<2x64xf32>
    %cst_44 = arith.constant 1.000000e+00 : f32
    %143 = vector.broadcast %cst_44 : f32 to vector<2x64xf32>
    %144 = arith.addf %143, %142 : vector<2x64xf32>
    %145 = arith.divf %143, %144 : vector<2x64xf32>
    %146 = vector.extract_strided_slice %133 {offsets = [0, 128], sizes = [2, 64], strides = [1, 1]} : vector<2x256xf32> to vector<2x64xf32>
    %147 = math.tanh %146 : vector<2x64xf32>
    %148 = vector.extract_strided_slice %133 {offsets = [0, 192], sizes = [2, 64], strides = [1, 1]} : vector<2x256xf32> to vector<2x64xf32>
    %149 = arith.negf %148 : vector<2x64xf32>
    %150 = math.exp %149 : vector<2x64xf32>
    %cst_45 = arith.constant 1.000000e+00 : f32
    %151 = vector.broadcast %cst_45 : f32 to vector<2x64xf32>
    %152 = arith.addf %151, %150 : vector<2x64xf32>
    %153 = arith.divf %151, %152 : vector<2x64xf32>
    %154 = arith.mulf %145, %114 : vector<2x64xf32>
    %155 = arith.mulf %139, %147 : vector<2x64xf32>
    %156 = arith.addf %154, %155 : vector<2x64xf32>
    %157 = math.tanh %156 : vector<2x64xf32>
    %158 = arith.mulf %153, %157 : vector<2x64xf32>
    %159 = vector.extract_strided_slice %158 {offsets = [0, 0], sizes = [2, 32], strides = [1, 1]} : vector<2x64xf32> to vector<2x32xf32>
    %160 = arith.index_cast %c3_i32 : i32 to index
    %c0_46 = arith.constant 0 : index
    %c0_47 = arith.constant 0 : index
    %161 = vector.load %arg2[%160, %c0_46, %c0_47] : memref<8x2x32xf32, #tpu.memory_space<vmem>>, vector<1x2x32xf32>
    %162 = vector.shape_cast %161 : vector<1x2x32xf32> to vector<2x32xf32>
    %163 = vector.shape_cast %159 : vector<2x32xf32> to vector<1x2x32xf32>
    tpu.vector_store %arg2[%160, %c0_46, %c0_47], %163 {strides = array<i32>} : memref<8x2x32xf32, #tpu.memory_space<vmem>>, vector<1x2x32xf32>,
    %164 = vector.extract_strided_slice %158 {offsets = [0, 32], sizes = [2, 32], strides = [1, 1]} : vector<2x64xf32> to vector<2x32xf32>
    %c7_i32_48 = arith.constant 7 : i32
    %165 = arith.subi %c7_i32_48, %c3_i32 : i32
    %166 = arith.index_cast %165 : i32 to index
    %c0_49 = arith.constant 0 : index
    %c0_50 = arith.constant 0 : index
    %167 = vector.load %arg3[%166, %c0_49, %c0_50] : memref<8x2x32xf32, #tpu.memory_space<vmem>>, vector<1x2x32xf32>
    %168 = vector.shape_cast %167 : vector<1x2x32xf32> to vector<2x32xf32>
    %169 = vector.shape_cast %164 : vector<2x32xf32> to vector<1x2x32xf32>
    tpu.vector_store %arg3[%166, %c0_49, %c0_50], %169 {strides = array<i32>} : memref<8x2x32xf32, #tpu.memory_space<vmem>>, vector<1x2x32xf32>,
    %c4_i32 = arith.constant 4 : i32
    %170 = arith.index_cast %c4_i32 : i32 to index
    %c0_51 = arith.constant 0 : index
    %c0_52 = arith.constant 0 : index
    %171 = vector.load %arg0[%170, %c0_51, %c0_52] : memref<8x2x256xf32, #tpu.memory_space<vmem>>, vector<1x2x256xf32>
    %172 = vector.shape_cast %171 : vector<1x2x256xf32> to vector<2x256xf32>
    %c0_53 = arith.constant 0 : index
    %c0_54 = arith.constant 0 : index
    %173 = vector.load %arg1[%c0_53, %c0_54] : memref<64x256xf32, #tpu.memory_space<vmem>>, vector<64x256xf32>
    %cst_55 = arith.constant dense<0.000000e+00> : vector<2x256xf32>
    %174 = tpu.matmul %158, %173, %cst_55 {dimension_numbers = #tpu.dot_dimension_numbers<[1], [0], [0], [1], [0, 0, 1, 1], [], []>} : vector<2x64xf32>, vector<64x256xf32>, vector<2x256xf32> -> vector<2x256xf32>
    %175 = arith.addf %172, %174 : vector<2x256xf32>
    %176 = vector.extract_strided_slice %175 {offsets = [0, 0], sizes = [2, 64], strides = [1, 1]} : vector<2x256xf32> to vector<2x64xf32>
    %177 = arith.negf %176 : vector<2x64xf32>
    %178 = math.exp %177 : vector<2x64xf32>
    %cst_56 = arith.constant 1.000000e+00 : f32
    %179 = vector.broadcast %cst_56 : f32 to vector<2x64xf32>
    %180 = arith.addf %179, %178 : vector<2x64xf32>
    %181 = arith.divf %179, %180 : vector<2x64xf32>
    %182 = vector.extract_strided_slice %175 {offsets = [0, 64], sizes = [2, 64], strides = [1, 1]} : vector<2x256xf32> to vector<2x64xf32>
    %183 = arith.negf %182 : vector<2x64xf32>
    %184 = math.exp %183 : vector<2x64xf32>
    %cst_57 = arith.constant 1.000000e+00 : f32
    %185 = vector.broadcast %cst_57 : f32 to vector<2x64xf32>
    %186 = arith.addf %185, %184 : vector<2x64xf32>
    %187 = arith.divf %185, %186 : vector<2x64xf32>
    %188 = vector.extract_strided_slice %175 {offsets = [0, 128], sizes = [2, 64], strides = [1, 1]} : vector<2x256xf32> to vector<2x64xf32>
    %189 = math.tanh %188 : vector<2x64xf32>
    %190 = vector.extract_strided_slice %175 {offsets = [0, 192], sizes = [2, 64], strides = [1, 1]} : vector<2x256xf32> to vector<2x64xf32>
    %191 = arith.negf %190 : vector<2x64xf32>
    %192 = math.exp %191 : vector<2x64xf32>
    %cst_58 = arith.constant 1.000000e+00 : f32
    %193 = vector.broadcast %cst_58 : f32 to vector<2x64xf32>
    %194 = arith.addf %193, %192 : vector<2x64xf32>
    %195 = arith.divf %193, %194 : vector<2x64xf32>
    %196 = arith.mulf %187, %156 : vector<2x64xf32>
    %197 = arith.mulf %181, %189 : vector<2x64xf32>
    %198 = arith.addf %196, %197 : vector<2x64xf32>
    %199 = math.tanh %198 : vector<2x64xf32>
    %200 = arith.mulf %195, %199 : vector<2x64xf32>
    %201 = vector.extract_strided_slice %200 {offsets = [0, 0], sizes = [2, 32], strides = [1, 1]} : vector<2x64xf32> to vector<2x32xf32>
    %202 = arith.index_cast %c4_i32 : i32 to index
    %c0_59 = arith.constant 0 : index
    %c0_60 = arith.constant 0 : index
    %203 = vector.load %arg2[%202, %c0_59, %c0_60] : memref<8x2x32xf32, #tpu.memory_space<vmem>>, vector<1x2x32xf32>
    %204 = vector.shape_cast %203 : vector<1x2x32xf32> to vector<2x32xf32>
    %205 = vector.shape_cast %201 : vector<2x32xf32> to vector<1x2x32xf32>
    tpu.vector_store %arg2[%202, %c0_59, %c0_60], %205 {strides = array<i32>} : memref<8x2x32xf32, #tpu.memory_space<vmem>>, vector<1x2x32xf32>,
    %206 = vector.extract_strided_slice %200 {offsets = [0, 32], sizes = [2, 32], strides = [1, 1]} : vector<2x64xf32> to vector<2x32xf32>
    %c7_i32_61 = arith.constant 7 : i32
    %207 = arith.subi %c7_i32_61, %c4_i32 : i32
    %208 = arith.index_cast %207 : i32 to index
    %c0_62 = arith.constant 0 : index
    %c0_63 = arith.constant 0 : index
    %209 = vector.load %arg3[%208, %c0_62, %c0_63] : memref<8x2x32xf32, #tpu.memory_space<vmem>>, vector<1x2x32xf32>
    %210 = vector.shape_cast %209 : vector<1x2x32xf32> to vector<2x32xf32>
    %211 = vector.shape_cast %206 : vector<2x32xf32> to vector<1x2x32xf32>
    tpu.vector_store %arg3[%208, %c0_62, %c0_63], %211 {strides = array<i32>} : memref<8x2x32xf32, #tpu.memory_space<vmem>>, vector<1x2x32xf32>,
    %c5_i32 = arith.constant 5 : i32
    %212 = arith.index_cast %c5_i32 : i32 to index
    %c0_64 = arith.constant 0 : index
    %c0_65 = arith.constant 0 : index
    %213 = vector.load %arg0[%212, %c0_64, %c0_65] : memref<8x2x256xf32, #tpu.memory_space<vmem>>, vector<1x2x256xf32>
    %214 = vector.shape_cast %213 : vector<1x2x256xf32> to vector<2x256xf32>
    %c0_66 = arith.constant 0 : index
    %c0_67 = arith.constant 0 : index
    %215 = vector.load %arg1[%c0_66, %c0_67] : memref<64x256xf32, #tpu.memory_space<vmem>>, vector<64x256xf32>
    %cst_68 = arith.constant dense<0.000000e+00> : vector<2x256xf32>
    %216 = tpu.matmul %200, %215, %cst_68 {dimension_numbers = #tpu.dot_dimension_numbers<[1], [0], [0], [1], [0, 0, 1, 1], [], []>} : vector<2x64xf32>, vector<64x256xf32>, vector<2x256xf32> -> vector<2x256xf32>
    %217 = arith.addf %214, %216 : vector<2x256xf32>
    %218 = vector.extract_strided_slice %217 {offsets = [0, 0], sizes = [2, 64], strides = [1, 1]} : vector<2x256xf32> to vector<2x64xf32>
    %219 = arith.negf %218 : vector<2x64xf32>
    %220 = math.exp %219 : vector<2x64xf32>
    %cst_69 = arith.constant 1.000000e+00 : f32
    %221 = vector.broadcast %cst_69 : f32 to vector<2x64xf32>
    %222 = arith.addf %221, %220 : vector<2x64xf32>
    %223 = arith.divf %221, %222 : vector<2x64xf32>
    %224 = vector.extract_strided_slice %217 {offsets = [0, 64], sizes = [2, 64], strides = [1, 1]} : vector<2x256xf32> to vector<2x64xf32>
    %225 = arith.negf %224 : vector<2x64xf32>
    %226 = math.exp %225 : vector<2x64xf32>
    %cst_70 = arith.constant 1.000000e+00 : f32
    %227 = vector.broadcast %cst_70 : f32 to vector<2x64xf32>
    %228 = arith.addf %227, %226 : vector<2x64xf32>
    %229 = arith.divf %227, %228 : vector<2x64xf32>
    %230 = vector.extract_strided_slice %217 {offsets = [0, 128], sizes = [2, 64], strides = [1, 1]} : vector<2x256xf32> to vector<2x64xf32>
    %231 = math.tanh %230 : vector<2x64xf32>
    %232 = vector.extract_strided_slice %217 {offsets = [0, 192], sizes = [2, 64], strides = [1, 1]} : vector<2x256xf32> to vector<2x64xf32>
    %233 = arith.negf %232 : vector<2x64xf32>
    %234 = math.exp %233 : vector<2x64xf32>
    %cst_71 = arith.constant 1.000000e+00 : f32
    %235 = vector.broadcast %cst_71 : f32 to vector<2x64xf32>
    %236 = arith.addf %235, %234 : vector<2x64xf32>
    %237 = arith.divf %235, %236 : vector<2x64xf32>
    %238 = arith.mulf %229, %198 : vector<2x64xf32>
    %239 = arith.mulf %223, %231 : vector<2x64xf32>
    %240 = arith.addf %238, %239 : vector<2x64xf32>
    %241 = math.tanh %240 : vector<2x64xf32>
    %242 = arith.mulf %237, %241 : vector<2x64xf32>
    %243 = vector.extract_strided_slice %242 {offsets = [0, 0], sizes = [2, 32], strides = [1, 1]} : vector<2x64xf32> to vector<2x32xf32>
    %244 = arith.index_cast %c5_i32 : i32 to index
    %c0_72 = arith.constant 0 : index
    %c0_73 = arith.constant 0 : index
    %245 = vector.load %arg2[%244, %c0_72, %c0_73] : memref<8x2x32xf32, #tpu.memory_space<vmem>>, vector<1x2x32xf32>
    %246 = vector.shape_cast %245 : vector<1x2x32xf32> to vector<2x32xf32>
    %247 = vector.shape_cast %243 : vector<2x32xf32> to vector<1x2x32xf32>
    tpu.vector_store %arg2[%244, %c0_72, %c0_73], %247 {strides = array<i32>} : memref<8x2x32xf32, #tpu.memory_space<vmem>>, vector<1x2x32xf32>,
    %248 = vector.extract_strided_slice %242 {offsets = [0, 32], sizes = [2, 32], strides = [1, 1]} : vector<2x64xf32> to vector<2x32xf32>
    %c7_i32_74 = arith.constant 7 : i32
    %249 = arith.subi %c7_i32_74, %c5_i32 : i32
    %250 = arith.index_cast %249 : i32 to index
    %c0_75 = arith.constant 0 : index
    %c0_76 = arith.constant 0 : index
    %251 = vector.load %arg3[%250, %c0_75, %c0_76] : memref<8x2x32xf32, #tpu.memory_space<vmem>>, vector<1x2x32xf32>
    %252 = vector.shape_cast %251 : vector<1x2x32xf32> to vector<2x32xf32>
    %253 = vector.shape_cast %248 : vector<2x32xf32> to vector<1x2x32xf32>
    tpu.vector_store %arg3[%250, %c0_75, %c0_76], %253 {strides = array<i32>} : memref<8x2x32xf32, #tpu.memory_space<vmem>>, vector<1x2x32xf32>,
    %c6_i32 = arith.constant 6 : i32
    %254 = arith.index_cast %c6_i32 : i32 to index
    %c0_77 = arith.constant 0 : index
    %c0_78 = arith.constant 0 : index
    %255 = vector.load %arg0[%254, %c0_77, %c0_78] : memref<8x2x256xf32, #tpu.memory_space<vmem>>, vector<1x2x256xf32>
    %256 = vector.shape_cast %255 : vector<1x2x256xf32> to vector<2x256xf32>
    %c0_79 = arith.constant 0 : index
    %c0_80 = arith.constant 0 : index
    %257 = vector.load %arg1[%c0_79, %c0_80] : memref<64x256xf32, #tpu.memory_space<vmem>>, vector<64x256xf32>
    %cst_81 = arith.constant dense<0.000000e+00> : vector<2x256xf32>
    %258 = tpu.matmul %242, %257, %cst_81 {dimension_numbers = #tpu.dot_dimension_numbers<[1], [0], [0], [1], [0, 0, 1, 1], [], []>} : vector<2x64xf32>, vector<64x256xf32>, vector<2x256xf32> -> vector<2x256xf32>
    %259 = arith.addf %256, %258 : vector<2x256xf32>
    %260 = vector.extract_strided_slice %259 {offsets = [0, 0], sizes = [2, 64], strides = [1, 1]} : vector<2x256xf32> to vector<2x64xf32>
    %261 = arith.negf %260 : vector<2x64xf32>
    %262 = math.exp %261 : vector<2x64xf32>
    %cst_82 = arith.constant 1.000000e+00 : f32
    %263 = vector.broadcast %cst_82 : f32 to vector<2x64xf32>
    %264 = arith.addf %263, %262 : vector<2x64xf32>
    %265 = arith.divf %263, %264 : vector<2x64xf32>
    %266 = vector.extract_strided_slice %259 {offsets = [0, 64], sizes = [2, 64], strides = [1, 1]} : vector<2x256xf32> to vector<2x64xf32>
    %267 = arith.negf %266 : vector<2x64xf32>
    %268 = math.exp %267 : vector<2x64xf32>
    %cst_83 = arith.constant 1.000000e+00 : f32
    %269 = vector.broadcast %cst_83 : f32 to vector<2x64xf32>
    %270 = arith.addf %269, %268 : vector<2x64xf32>
    %271 = arith.divf %269, %270 : vector<2x64xf32>
    %272 = vector.extract_strided_slice %259 {offsets = [0, 128], sizes = [2, 64], strides = [1, 1]} : vector<2x256xf32> to vector<2x64xf32>
    %273 = math.tanh %272 : vector<2x64xf32>
    %274 = vector.extract_strided_slice %259 {offsets = [0, 192], sizes = [2, 64], strides = [1, 1]} : vector<2x256xf32> to vector<2x64xf32>
    %275 = arith.negf %274 : vector<2x64xf32>
    %276 = math.exp %275 : vector<2x64xf32>
    %cst_84 = arith.constant 1.000000e+00 : f32
    %277 = vector.broadcast %cst_84 : f32 to vector<2x64xf32>
    %278 = arith.addf %277, %276 : vector<2x64xf32>
    %279 = arith.divf %277, %278 : vector<2x64xf32>
    %280 = arith.mulf %271, %240 : vector<2x64xf32>
    %281 = arith.mulf %265, %273 : vector<2x64xf32>
    %282 = arith.addf %280, %281 : vector<2x64xf32>
    %283 = math.tanh %282 : vector<2x64xf32>
    %284 = arith.mulf %279, %283 : vector<2x64xf32>
    %285 = vector.extract_strided_slice %284 {offsets = [0, 0], sizes = [2, 32], strides = [1, 1]} : vector<2x64xf32> to vector<2x32xf32>
    %286 = arith.index_cast %c6_i32 : i32 to index
    %c0_85 = arith.constant 0 : index
    %c0_86 = arith.constant 0 : index
    %287 = vector.load %arg2[%286, %c0_85, %c0_86] : memref<8x2x32xf32, #tpu.memory_space<vmem>>, vector<1x2x32xf32>
    %288 = vector.shape_cast %287 : vector<1x2x32xf32> to vector<2x32xf32>
    %289 = vector.shape_cast %285 : vector<2x32xf32> to vector<1x2x32xf32>
    tpu.vector_store %arg2[%286, %c0_85, %c0_86], %289 {strides = array<i32>} : memref<8x2x32xf32, #tpu.memory_space<vmem>>, vector<1x2x32xf32>,
    %290 = vector.extract_strided_slice %284 {offsets = [0, 32], sizes = [2, 32], strides = [1, 1]} : vector<2x64xf32> to vector<2x32xf32>
    %c7_i32_87 = arith.constant 7 : i32
    %291 = arith.subi %c7_i32_87, %c6_i32 : i32
    %292 = arith.index_cast %291 : i32 to index
    %c0_88 = arith.constant 0 : index
    %c0_89 = arith.constant 0 : index
    %293 = vector.load %arg3[%292, %c0_88, %c0_89] : memref<8x2x32xf32, #tpu.memory_space<vmem>>, vector<1x2x32xf32>
    %294 = vector.shape_cast %293 : vector<1x2x32xf32> to vector<2x32xf32>
    %295 = vector.shape_cast %290 : vector<2x32xf32> to vector<1x2x32xf32>
    tpu.vector_store %arg3[%292, %c0_88, %c0_89], %295 {strides = array<i32>} : memref<8x2x32xf32, #tpu.memory_space<vmem>>, vector<1x2x32xf32>,
    %c7_i32_90 = arith.constant 7 : i32
    %296 = arith.index_cast %c7_i32_90 : i32 to index
    %c0_91 = arith.constant 0 : index
    %c0_92 = arith.constant 0 : index
    %297 = vector.load %arg0[%296, %c0_91, %c0_92] : memref<8x2x256xf32, #tpu.memory_space<vmem>>, vector<1x2x256xf32>
    %298 = vector.shape_cast %297 : vector<1x2x256xf32> to vector<2x256xf32>
    %c0_93 = arith.constant 0 : index
    %c0_94 = arith.constant 0 : index
    %299 = vector.load %arg1[%c0_93, %c0_94] : memref<64x256xf32, #tpu.memory_space<vmem>>, vector<64x256xf32>
    %cst_95 = arith.constant dense<0.000000e+00> : vector<2x256xf32>
    %300 = tpu.matmul %284, %299, %cst_95 {dimension_numbers = #tpu.dot_dimension_numbers<[1], [0], [0], [1], [0, 0, 1, 1], [], []>} : vector<2x64xf32>, vector<64x256xf32>, vector<2x256xf32> -> vector<2x256xf32>
    %301 = arith.addf %298, %300 : vector<2x256xf32>
    %302 = vector.extract_strided_slice %301 {offsets = [0, 0], sizes = [2, 64], strides = [1, 1]} : vector<2x256xf32> to vector<2x64xf32>
    %303 = arith.negf %302 : vector<2x64xf32>
    %304 = math.exp %303 : vector<2x64xf32>
    %cst_96 = arith.constant 1.000000e+00 : f32
    %305 = vector.broadcast %cst_96 : f32 to vector<2x64xf32>
    %306 = arith.addf %305, %304 : vector<2x64xf32>
    %307 = arith.divf %305, %306 : vector<2x64xf32>
    %308 = vector.extract_strided_slice %301 {offsets = [0, 64], sizes = [2, 64], strides = [1, 1]} : vector<2x256xf32> to vector<2x64xf32>
    %309 = arith.negf %308 : vector<2x64xf32>
    %310 = math.exp %309 : vector<2x64xf32>
    %cst_97 = arith.constant 1.000000e+00 : f32
    %311 = vector.broadcast %cst_97 : f32 to vector<2x64xf32>
    %312 = arith.addf %311, %310 : vector<2x64xf32>
    %313 = arith.divf %311, %312 : vector<2x64xf32>
    %314 = vector.extract_strided_slice %301 {offsets = [0, 128], sizes = [2, 64], strides = [1, 1]} : vector<2x256xf32> to vector<2x64xf32>
    %315 = math.tanh %314 : vector<2x64xf32>
    %316 = vector.extract_strided_slice %301 {offsets = [0, 192], sizes = [2, 64], strides = [1, 1]} : vector<2x256xf32> to vector<2x64xf32>
    %317 = arith.negf %316 : vector<2x64xf32>
    %318 = math.exp %317 : vector<2x64xf32>
    %cst_98 = arith.constant 1.000000e+00 : f32
    %319 = vector.broadcast %cst_98 : f32 to vector<2x64xf32>
    %320 = arith.addf %319, %318 : vector<2x64xf32>
    %321 = arith.divf %319, %320 : vector<2x64xf32>
    %322 = arith.mulf %313, %282 : vector<2x64xf32>
    %323 = arith.mulf %307, %315 : vector<2x64xf32>
    %324 = arith.addf %322, %323 : vector<2x64xf32>
    %325 = math.tanh %324 : vector<2x64xf32>
    %326 = arith.mulf %321, %325 : vector<2x64xf32>
    %327 = vector.extract_strided_slice %326 {offsets = [0, 0], sizes = [2, 32], strides = [1, 1]} : vector<2x64xf32> to vector<2x32xf32>
    %328 = arith.index_cast %c7_i32_90 : i32 to index
    %c0_99 = arith.constant 0 : index
    %c0_100 = arith.constant 0 : index
    %329 = vector.load %arg2[%328, %c0_99, %c0_100] : memref<8x2x32xf32, #tpu.memory_space<vmem>>, vector<1x2x32xf32>
    %330 = vector.shape_cast %329 : vector<1x2x32xf32> to vector<2x32xf32>
    %331 = vector.shape_cast %327 : vector<2x32xf32> to vector<1x2x32xf32>
    tpu.vector_store %arg2[%328, %c0_99, %c0_100], %331 {strides = array<i32>} : memref<8x2x32xf32, #tpu.memory_space<vmem>>, vector<1x2x32xf32>,
    %332 = vector.extract_strided_slice %326 {offsets = [0, 32], sizes = [2, 32], strides = [1, 1]} : vector<2x64xf32> to vector<2x32xf32>
    %c7_i32_101 = arith.constant 7 : i32
    %333 = arith.subi %c7_i32_101, %c7_i32_90 : i32
    %334 = arith.index_cast %333 : i32 to index
    %c0_102 = arith.constant 0 : index
    %c0_103 = arith.constant 0 : index
    %335 = vector.load %arg3[%334, %c0_102, %c0_103] : memref<8x2x32xf32, #tpu.memory_space<vmem>>, vector<1x2x32xf32>
    %336 = vector.shape_cast %335 : vector<1x2x32xf32> to vector<2x32xf32>
    %337 = vector.shape_cast %332 : vector<2x32xf32> to vector<1x2x32xf32>
    tpu.vector_store %arg3[%334, %c0_102, %c0_103], %337 {strides = array<i32>} : memref<8x2x32xf32, #tpu.memory_space<vmem>>, vector<1x2x32xf32>,
    %c8_i32 = arith.constant 8 : i32
    %c0_104 = arith.constant 0 : index
    %c0_105 = arith.constant 0 : index
    %338 = vector.load %arg4[%c0_104, %c0_105] : memref<2x64xf32, #tpu.memory_space<vmem>>, vector<2x64xf32>
    tpu.vector_store %arg4[%c0_104, %c0_105], %326 {strides = array<i32>} : memref<2x64xf32, #tpu.memory_space<vmem>>, vector<2x64xf32>,
    %c0_106 = arith.constant 0 : index
    %c0_107 = arith.constant 0 : index
    %339 = vector.load %arg5[%c0_106, %c0_107] : memref<2x64xf32, #tpu.memory_space<vmem>>, vector<2x64xf32>
    tpu.vector_store %arg5[%c0_106, %c0_107], %324 {strides = array<i32>} : memref<2x64xf32, #tpu.memory_space<vmem>>, vector<2x64xf32>,
    return
  }
}

module attributes {stable_mosaic.version = 11 : i64} {
  func.func @_bilstm_layer_kernel(%arg0: memref<8x2x256xf32, #tpu.memory_space<vmem>>, %arg1: memref<64x256xf32, #tpu.memory_space<vmem>>, %arg2: memref<8x2x32xf32, #tpu.memory_space<vmem>>, %arg3: memref<8x2x32xf32, #tpu.memory_space<vmem>>, %arg4: memref<2x64xf32, #tpu.memory_space<vmem>>, %arg5: memref<2x64xf32, #tpu.memory_space<vmem>>) attributes {dimension_semantics = [], scalar_prefetch = 0 : i64, scratch_operands = 0 : i64, tpu.core_type = #tpu.core_type<tc>} {
    %cst = arith.constant 0.000000e+00 : f32
    %0 = vector.broadcast %cst : f32 to vector<2x64xf32>
    %cst_0 = arith.constant 0.000000e+00 : f32
    %1 = vector.broadcast %cst_0 : f32 to vector<2x64xf32>
    %c0_i32 = arith.constant 0 : i32
    %2 = arith.index_cast %c0_i32 : i32 to index
    %c0 = arith.constant 0 : index
    %c0_1 = arith.constant 0 : index
    %3 = vector.load %arg0[%2, %c0, %c0_1] : memref<8x2x256xf32, #tpu.memory_space<vmem>>, vector<1x2x256xf32>
    %4 = vector.shape_cast %3 : vector<1x2x256xf32> to vector<2x256xf32>
    %c0_2 = arith.constant 0 : index
    %c0_3 = arith.constant 0 : index
    %5 = vector.load %arg1[%c0_2, %c0_3] : memref<64x256xf32, #tpu.memory_space<vmem>>, vector<64x256xf32>
    %cst_4 = arith.constant dense<0.000000e+00> : vector<2x256xf32>
    %6 = tpu.matmul %0, %5, %cst_4 {dimension_numbers = #tpu.dot_dimension_numbers<[1], [0], [0], [1], [0, 0, 1, 1], [], []>} : vector<2x64xf32>, vector<64x256xf32>, vector<2x256xf32> -> vector<2x256xf32>
    %7 = arith.addf %4, %6 : vector<2x256xf32>
    %8 = vector.extract_strided_slice %7 {offsets = [0, 0], sizes = [2, 64], strides = [1, 1]} : vector<2x256xf32> to vector<2x64xf32>
    %9 = arith.negf %8 : vector<2x64xf32>
    %10 = math.exp %9 : vector<2x64xf32>
    %cst_5 = arith.constant 1.000000e+00 : f32
    %11 = vector.broadcast %cst_5 : f32 to vector<2x64xf32>
    %12 = arith.addf %11, %10 : vector<2x64xf32>
    %13 = arith.divf %11, %12 : vector<2x64xf32>
    %14 = vector.extract_strided_slice %7 {offsets = [0, 64], sizes = [2, 64], strides = [1, 1]} : vector<2x256xf32> to vector<2x64xf32>
    %15 = arith.negf %14 : vector<2x64xf32>
    %16 = math.exp %15 : vector<2x64xf32>
    %cst_6 = arith.constant 1.000000e+00 : f32
    %17 = vector.broadcast %cst_6 : f32 to vector<2x64xf32>
    %18 = arith.addf %17, %16 : vector<2x64xf32>
    %19 = arith.divf %17, %18 : vector<2x64xf32>
    %20 = vector.extract_strided_slice %7 {offsets = [0, 128], sizes = [2, 64], strides = [1, 1]} : vector<2x256xf32> to vector<2x64xf32>
    %21 = math.tanh %20 : vector<2x64xf32>
    %22 = vector.extract_strided_slice %7 {offsets = [0, 192], sizes = [2, 64], strides = [1, 1]} : vector<2x256xf32> to vector<2x64xf32>
    %23 = arith.negf %22 : vector<2x64xf32>
    %24 = math.exp %23 : vector<2x64xf32>
    %cst_7 = arith.constant 1.000000e+00 : f32
    %25 = vector.broadcast %cst_7 : f32 to vector<2x64xf32>
    %26 = arith.addf %25, %24 : vector<2x64xf32>
    %27 = arith.divf %25, %26 : vector<2x64xf32>
    %28 = arith.mulf %19, %1 : vector<2x64xf32>
    %29 = arith.mulf %13, %21 : vector<2x64xf32>
    %30 = arith.addf %28, %29 : vector<2x64xf32>
    %31 = math.tanh %30 : vector<2x64xf32>
    %32 = arith.mulf %27, %31 : vector<2x64xf32>
    %33 = vector.extract_strided_slice %32 {offsets = [0, 0], sizes = [2, 32], strides = [1, 1]} : vector<2x64xf32> to vector<2x32xf32>
    %34 = arith.index_cast %c0_i32 : i32 to index
    %c0_8 = arith.constant 0 : index
    %c0_9 = arith.constant 0 : index
    %35 = vector.load %arg2[%34, %c0_8, %c0_9] : memref<8x2x32xf32, #tpu.memory_space<vmem>>, vector<1x2x32xf32>
    %36 = vector.shape_cast %35 : vector<1x2x32xf32> to vector<2x32xf32>
    %37 = vector.shape_cast %33 : vector<2x32xf32> to vector<1x2x32xf32>
    tpu.vector_store %arg2[%34, %c0_8, %c0_9], %37 {strides = array<i32>} : memref<8x2x32xf32, #tpu.memory_space<vmem>>, vector<1x2x32xf32>,
    %38 = vector.extract_strided_slice %32 {offsets = [0, 32], sizes = [2, 32], strides = [1, 1]} : vector<2x64xf32> to vector<2x32xf32>
    %c7_i32 = arith.constant 7 : i32
    %39 = arith.subi %c7_i32, %c0_i32 : i32
    %40 = arith.index_cast %39 : i32 to index
    %c0_10 = arith.constant 0 : index
    %c0_11 = arith.constant 0 : index
    %41 = vector.load %arg3[%40, %c0_10, %c0_11] : memref<8x2x32xf32, #tpu.memory_space<vmem>>, vector<1x2x32xf32>
    %42 = vector.shape_cast %41 : vector<1x2x32xf32> to vector<2x32xf32>
    %43 = vector.shape_cast %38 : vector<2x32xf32> to vector<1x2x32xf32>
    tpu.vector_store %arg3[%40, %c0_10, %c0_11], %43 {strides = array<i32>} : memref<8x2x32xf32, #tpu.memory_space<vmem>>, vector<1x2x32xf32>,
    %c1_i32 = arith.constant 1 : i32
    %44 = arith.index_cast %c1_i32 : i32 to index
    %c0_12 = arith.constant 0 : index
    %c0_13 = arith.constant 0 : index
    %45 = vector.load %arg0[%44, %c0_12, %c0_13] : memref<8x2x256xf32, #tpu.memory_space<vmem>>, vector<1x2x256xf32>
    %46 = vector.shape_cast %45 : vector<1x2x256xf32> to vector<2x256xf32>
    %c0_14 = arith.constant 0 : index
    %c0_15 = arith.constant 0 : index
    %47 = vector.load %arg1[%c0_14, %c0_15] : memref<64x256xf32, #tpu.memory_space<vmem>>, vector<64x256xf32>
    %cst_16 = arith.constant dense<0.000000e+00> : vector<2x256xf32>
    %48 = tpu.matmul %32, %47, %cst_16 {dimension_numbers = #tpu.dot_dimension_numbers<[1], [0], [0], [1], [0, 0, 1, 1], [], []>} : vector<2x64xf32>, vector<64x256xf32>, vector<2x256xf32> -> vector<2x256xf32>
    %49 = arith.addf %46, %48 : vector<2x256xf32>
    %50 = vector.extract_strided_slice %49 {offsets = [0, 0], sizes = [2, 64], strides = [1, 1]} : vector<2x256xf32> to vector<2x64xf32>
    %51 = arith.negf %50 : vector<2x64xf32>
    %52 = math.exp %51 : vector<2x64xf32>
    %cst_17 = arith.constant 1.000000e+00 : f32
    %53 = vector.broadcast %cst_17 : f32 to vector<2x64xf32>
    %54 = arith.addf %53, %52 : vector<2x64xf32>
    %55 = arith.divf %53, %54 : vector<2x64xf32>
    %56 = vector.extract_strided_slice %49 {offsets = [0, 64], sizes = [2, 64], strides = [1, 1]} : vector<2x256xf32> to vector<2x64xf32>
    %57 = arith.negf %56 : vector<2x64xf32>
    %58 = math.exp %57 : vector<2x64xf32>
    %cst_18 = arith.constant 1.000000e+00 : f32
    %59 = vector.broadcast %cst_18 : f32 to vector<2x64xf32>
    %60 = arith.addf %59, %58 : vector<2x64xf32>
    %61 = arith.divf %59, %60 : vector<2x64xf32>
    %62 = vector.extract_strided_slice %49 {offsets = [0, 128], sizes = [2, 64], strides = [1, 1]} : vector<2x256xf32> to vector<2x64xf32>
    %63 = math.tanh %62 : vector<2x64xf32>
    %64 = vector.extract_strided_slice %49 {offsets = [0, 192], sizes = [2, 64], strides = [1, 1]} : vector<2x256xf32> to vector<2x64xf32>
    %65 = arith.negf %64 : vector<2x64xf32>
    %66 = math.exp %65 : vector<2x64xf32>
    %cst_19 = arith.constant 1.000000e+00 : f32
    %67 = vector.broadcast %cst_19 : f32 to vector<2x64xf32>
    %68 = arith.addf %67, %66 : vector<2x64xf32>
    %69 = arith.divf %67, %68 : vector<2x64xf32>
    %70 = arith.mulf %61, %30 : vector<2x64xf32>
    %71 = arith.mulf %55, %63 : vector<2x64xf32>
    %72 = arith.addf %70, %71 : vector<2x64xf32>
    %73 = math.tanh %72 : vector<2x64xf32>
    %74 = arith.mulf %69, %73 : vector<2x64xf32>
    %75 = vector.extract_strided_slice %74 {offsets = [0, 0], sizes = [2, 32], strides = [1, 1]} : vector<2x64xf32> to vector<2x32xf32>
    %76 = arith.index_cast %c1_i32 : i32 to index
    %c0_20 = arith.constant 0 : index
    %c0_21 = arith.constant 0 : index
    %77 = vector.load %arg2[%76, %c0_20, %c0_21] : memref<8x2x32xf32, #tpu.memory_space<vmem>>, vector<1x2x32xf32>
    %78 = vector.shape_cast %77 : vector<1x2x32xf32> to vector<2x32xf32>
    %79 = vector.shape_cast %75 : vector<2x32xf32> to vector<1x2x32xf32>
    tpu.vector_store %arg2[%76, %c0_20, %c0_21], %79 {strides = array<i32>} : memref<8x2x32xf32, #tpu.memory_space<vmem>>, vector<1x2x32xf32>,
    %80 = vector.extract_strided_slice %74 {offsets = [0, 32], sizes = [2, 32], strides = [1, 1]} : vector<2x64xf32> to vector<2x32xf32>
    %c7_i32_22 = arith.constant 7 : i32
    %81 = arith.subi %c7_i32_22, %c1_i32 : i32
    %82 = arith.index_cast %81 : i32 to index
    %c0_23 = arith.constant 0 : index
    %c0_24 = arith.constant 0 : index
    %83 = vector.load %arg3[%82, %c0_23, %c0_24] : memref<8x2x32xf32, #tpu.memory_space<vmem>>, vector<1x2x32xf32>
    %84 = vector.shape_cast %83 : vector<1x2x32xf32> to vector<2x32xf32>
    %85 = vector.shape_cast %80 : vector<2x32xf32> to vector<1x2x32xf32>
    tpu.vector_store %arg3[%82, %c0_23, %c0_24], %85 {strides = array<i32>} : memref<8x2x32xf32, #tpu.memory_space<vmem>>, vector<1x2x32xf32>,
    %c2_i32 = arith.constant 2 : i32
    %86 = arith.index_cast %c2_i32 : i32 to index
    %c0_25 = arith.constant 0 : index
    %c0_26 = arith.constant 0 : index
    %87 = vector.load %arg0[%86, %c0_25, %c0_26] : memref<8x2x256xf32, #tpu.memory_space<vmem>>, vector<1x2x256xf32>
    %88 = vector.shape_cast %87 : vector<1x2x256xf32> to vector<2x256xf32>
    %c0_27 = arith.constant 0 : index
    %c0_28 = arith.constant 0 : index
    %89 = vector.load %arg1[%c0_27, %c0_28] : memref<64x256xf32, #tpu.memory_space<vmem>>, vector<64x256xf32>
    %cst_29 = arith.constant dense<0.000000e+00> : vector<2x256xf32>
    %90 = tpu.matmul %74, %89, %cst_29 {dimension_numbers = #tpu.dot_dimension_numbers<[1], [0], [0], [1], [0, 0, 1, 1], [], []>} : vector<2x64xf32>, vector<64x256xf32>, vector<2x256xf32> -> vector<2x256xf32>
    %91 = arith.addf %88, %90 : vector<2x256xf32>
    %92 = vector.extract_strided_slice %91 {offsets = [0, 0], sizes = [2, 64], strides = [1, 1]} : vector<2x256xf32> to vector<2x64xf32>
    %93 = arith.negf %92 : vector<2x64xf32>
    %94 = math.exp %93 : vector<2x64xf32>
    %cst_30 = arith.constant 1.000000e+00 : f32
    %95 = vector.broadcast %cst_30 : f32 to vector<2x64xf32>
    %96 = arith.addf %95, %94 : vector<2x64xf32>
    %97 = arith.divf %95, %96 : vector<2x64xf32>
    %98 = vector.extract_strided_slice %91 {offsets = [0, 64], sizes = [2, 64], strides = [1, 1]} : vector<2x256xf32> to vector<2x64xf32>
    %99 = arith.negf %98 : vector<2x64xf32>
    %100 = math.exp %99 : vector<2x64xf32>
    %cst_31 = arith.constant 1.000000e+00 : f32
    %101 = vector.broadcast %cst_31 : f32 to vector<2x64xf32>
    %102 = arith.addf %101, %100 : vector<2x64xf32>
    %103 = arith.divf %101, %102 : vector<2x64xf32>
    %104 = vector.extract_strided_slice %91 {offsets = [0, 128], sizes = [2, 64], strides = [1, 1]} : vector<2x256xf32> to vector<2x64xf32>
    %105 = math.tanh %104 : vector<2x64xf32>
    %106 = vector.extract_strided_slice %91 {offsets = [0, 192], sizes = [2, 64], strides = [1, 1]} : vector<2x256xf32> to vector<2x64xf32>
    %107 = arith.negf %106 : vector<2x64xf32>
    %108 = math.exp %107 : vector<2x64xf32>
    %cst_32 = arith.constant 1.000000e+00 : f32
    %109 = vector.broadcast %cst_32 : f32 to vector<2x64xf32>
    %110 = arith.addf %109, %108 : vector<2x64xf32>
    %111 = arith.divf %109, %110 : vector<2x64xf32>
    %112 = arith.mulf %103, %72 : vector<2x64xf32>
    %113 = arith.mulf %97, %105 : vector<2x64xf32>
    %114 = arith.addf %112, %113 : vector<2x64xf32>
    %115 = math.tanh %114 : vector<2x64xf32>
    %116 = arith.mulf %111, %115 : vector<2x64xf32>
    %117 = vector.extract_strided_slice %116 {offsets = [0, 0], sizes = [2, 32], strides = [1, 1]} : vector<2x64xf32> to vector<2x32xf32>
    %118 = arith.index_cast %c2_i32 : i32 to index
    %c0_33 = arith.constant 0 : index
    %c0_34 = arith.constant 0 : index
    %119 = vector.load %arg2[%118, %c0_33, %c0_34] : memref<8x2x32xf32, #tpu.memory_space<vmem>>, vector<1x2x32xf32>
    %120 = vector.shape_cast %119 : vector<1x2x32xf32> to vector<2x32xf32>
    %121 = vector.shape_cast %117 : vector<2x32xf32> to vector<1x2x32xf32>
    tpu.vector_store %arg2[%118, %c0_33, %c0_34], %121 {strides = array<i32>} : memref<8x2x32xf32, #tpu.memory_space<vmem>>, vector<1x2x32xf32>,
    %122 = vector.extract_strided_slice %116 {offsets = [0, 32], sizes = [2, 32], strides = [1, 1]} : vector<2x64xf32> to vector<2x32xf32>
    %c7_i32_35 = arith.constant 7 : i32
    %123 = arith.subi %c7_i32_35, %c2_i32 : i32
    %124 = arith.index_cast %123 : i32 to index
    %c0_36 = arith.constant 0 : index
    %c0_37 = arith.constant 0 : index
    %125 = vector.load %arg3[%124, %c0_36, %c0_37] : memref<8x2x32xf32, #tpu.memory_space<vmem>>, vector<1x2x32xf32>
    %126 = vector.shape_cast %125 : vector<1x2x32xf32> to vector<2x32xf32>
    %127 = vector.shape_cast %122 : vector<2x32xf32> to vector<1x2x32xf32>
    tpu.vector_store %arg3[%124, %c0_36, %c0_37], %127 {strides = array<i32>} : memref<8x2x32xf32, #tpu.memory_space<vmem>>, vector<1x2x32xf32>,
    %c3_i32 = arith.constant 3 : i32
    %128 = arith.index_cast %c3_i32 : i32 to index
    %c0_38 = arith.constant 0 : index
    %c0_39 = arith.constant 0 : index
    %129 = vector.load %arg0[%128, %c0_38, %c0_39] : memref<8x2x256xf32, #tpu.memory_space<vmem>>, vector<1x2x256xf32>
    %130 = vector.shape_cast %129 : vector<1x2x256xf32> to vector<2x256xf32>
    %c0_40 = arith.constant 0 : index
    %c0_41 = arith.constant 0 : index
    %131 = vector.load %arg1[%c0_40, %c0_41] : memref<64x256xf32, #tpu.memory_space<vmem>>, vector<64x256xf32>
    %cst_42 = arith.constant dense<0.000000e+00> : vector<2x256xf32>
    %132 = tpu.matmul %116, %131, %cst_42 {dimension_numbers = #tpu.dot_dimension_numbers<[1], [0], [0], [1], [0, 0, 1, 1], [], []>} : vector<2x64xf32>, vector<64x256xf32>, vector<2x256xf32> -> vector<2x256xf32>
    %133 = arith.addf %130, %132 : vector<2x256xf32>
    %134 = vector.extract_strided_slice %133 {offsets = [0, 0], sizes = [2, 64], strides = [1, 1]} : vector<2x256xf32> to vector<2x64xf32>
    %135 = arith.negf %134 : vector<2x64xf32>
    %136 = math.exp %135 : vector<2x64xf32>
    %cst_43 = arith.constant 1.000000e+00 : f32
    %137 = vector.broadcast %cst_43 : f32 to vector<2x64xf32>
    %138 = arith.addf %137, %136 : vector<2x64xf32>
    %139 = arith.divf %137, %138 : vector<2x64xf32>
    %140 = vector.extract_strided_slice %133 {offsets = [0, 64], sizes = [2, 64], strides = [1, 1]} : vector<2x256xf32> to vector<2x64xf32>
    %141 = arith.negf %140 : vector<2x64xf32>
    %142 = math.exp %141 : vector<2x64xf32>
    %cst_44 = arith.constant 1.000000e+00 : f32
    %143 = vector.broadcast %cst_44 : f32 to vector<2x64xf32>
    %144 = arith.addf %143, %142 : vector<2x64xf32>
    %145 = arith.divf %143, %144 : vector<2x64xf32>
    %146 = vector.extract_strided_slice %133 {offsets = [0, 128], sizes = [2, 64], strides = [1, 1]} : vector<2x256xf32> to vector<2x64xf32>
    %147 = math.tanh %146 : vector<2x64xf32>
    %148 = vector.extract_strided_slice %133 {offsets = [0, 192], sizes = [2, 64], strides = [1, 1]} : vector<2x256xf32> to vector<2x64xf32>
    %149 = arith.negf %148 : vector<2x64xf32>
    %150 = math.exp %149 : vector<2x64xf32>
    %cst_45 = arith.constant 1.000000e+00 : f32
    %151 = vector.broadcast %cst_45 : f32 to vector<2x64xf32>
    %152 = arith.addf %151, %150 : vector<2x64xf32>
    %153 = arith.divf %151, %152 : vector<2x64xf32>
    %154 = arith.mulf %145, %114 : vector<2x64xf32>
    %155 = arith.mulf %139, %147 : vector<2x64xf32>
    %156 = arith.addf %154, %155 : vector<2x64xf32>
    %157 = math.tanh %156 : vector<2x64xf32>
    %158 = arith.mulf %153, %157 : vector<2x64xf32>
    %159 = vector.extract_strided_slice %158 {offsets = [0, 0], sizes = [2, 32], strides = [1, 1]} : vector<2x64xf32> to vector<2x32xf32>
    %160 = arith.index_cast %c3_i32 : i32 to index
    %c0_46 = arith.constant 0 : index
    %c0_47 = arith.constant 0 : index
    %161 = vector.load %arg2[%160, %c0_46, %c0_47] : memref<8x2x32xf32, #tpu.memory_space<vmem>>, vector<1x2x32xf32>
    %162 = vector.shape_cast %161 : vector<1x2x32xf32> to vector<2x32xf32>
    %163 = vector.shape_cast %159 : vector<2x32xf32> to vector<1x2x32xf32>
    tpu.vector_store %arg2[%160, %c0_46, %c0_47], %163 {strides = array<i32>} : memref<8x2x32xf32, #tpu.memory_space<vmem>>, vector<1x2x32xf32>,
    %164 = vector.extract_strided_slice %158 {offsets = [0, 32], sizes = [2, 32], strides = [1, 1]} : vector<2x64xf32> to vector<2x32xf32>
    %c7_i32_48 = arith.constant 7 : i32
    %165 = arith.subi %c7_i32_48, %c3_i32 : i32
    %166 = arith.index_cast %165 : i32 to index
    %c0_49 = arith.constant 0 : index
    %c0_50 = arith.constant 0 : index
    %167 = vector.load %arg3[%166, %c0_49, %c0_50] : memref<8x2x32xf32, #tpu.memory_space<vmem>>, vector<1x2x32xf32>
    %168 = vector.shape_cast %167 : vector<1x2x32xf32> to vector<2x32xf32>
    %169 = vector.shape_cast %164 : vector<2x32xf32> to vector<1x2x32xf32>
    tpu.vector_store %arg3[%166, %c0_49, %c0_50], %169 {strides = array<i32>} : memref<8x2x32xf32, #tpu.memory_space<vmem>>, vector<1x2x32xf32>,
    %c4_i32 = arith.constant 4 : i32
    %170 = arith.index_cast %c4_i32 : i32 to index
    %c0_51 = arith.constant 0 : index
    %c0_52 = arith.constant 0 : index
    %171 = vector.load %arg0[%170, %c0_51, %c0_52] : memref<8x2x256xf32, #tpu.memory_space<vmem>>, vector<1x2x256xf32>
    %172 = vector.shape_cast %171 : vector<1x2x256xf32> to vector<2x256xf32>
    %c0_53 = arith.constant 0 : index
    %c0_54 = arith.constant 0 : index
    %173 = vector.load %arg1[%c0_53, %c0_54] : memref<64x256xf32, #tpu.memory_space<vmem>>, vector<64x256xf32>
    %cst_55 = arith.constant dense<0.000000e+00> : vector<2x256xf32>
    %174 = tpu.matmul %158, %173, %cst_55 {dimension_numbers = #tpu.dot_dimension_numbers<[1], [0], [0], [1], [0, 0, 1, 1], [], []>} : vector<2x64xf32>, vector<64x256xf32>, vector<2x256xf32> -> vector<2x256xf32>
    %175 = arith.addf %172, %174 : vector<2x256xf32>
    %176 = vector.extract_strided_slice %175 {offsets = [0, 0], sizes = [2, 64], strides = [1, 1]} : vector<2x256xf32> to vector<2x64xf32>
    %177 = arith.negf %176 : vector<2x64xf32>
    %178 = math.exp %177 : vector<2x64xf32>
    %cst_56 = arith.constant 1.000000e+00 : f32
    %179 = vector.broadcast %cst_56 : f32 to vector<2x64xf32>
    %180 = arith.addf %179, %178 : vector<2x64xf32>
    %181 = arith.divf %179, %180 : vector<2x64xf32>
    %182 = vector.extract_strided_slice %175 {offsets = [0, 64], sizes = [2, 64], strides = [1, 1]} : vector<2x256xf32> to vector<2x64xf32>
    %183 = arith.negf %182 : vector<2x64xf32>
    %184 = math.exp %183 : vector<2x64xf32>
    %cst_57 = arith.constant 1.000000e+00 : f32
    %185 = vector.broadcast %cst_57 : f32 to vector<2x64xf32>
    %186 = arith.addf %185, %184 : vector<2x64xf32>
    %187 = arith.divf %185, %186 : vector<2x64xf32>
    %188 = vector.extract_strided_slice %175 {offsets = [0, 128], sizes = [2, 64], strides = [1, 1]} : vector<2x256xf32> to vector<2x64xf32>
    %189 = math.tanh %188 : vector<2x64xf32>
    %190 = vector.extract_strided_slice %175 {offsets = [0, 192], sizes = [2, 64], strides = [1, 1]} : vector<2x256xf32> to vector<2x64xf32>
    %191 = arith.negf %190 : vector<2x64xf32>
    %192 = math.exp %191 : vector<2x64xf32>
    %cst_58 = arith.constant 1.000000e+00 : f32
    %193 = vector.broadcast %cst_58 : f32 to vector<2x64xf32>
    %194 = arith.addf %193, %192 : vector<2x64xf32>
    %195 = arith.divf %193, %194 : vector<2x64xf32>
    %196 = arith.mulf %187, %156 : vector<2x64xf32>
    %197 = arith.mulf %181, %189 : vector<2x64xf32>
    %198 = arith.addf %196, %197 : vector<2x64xf32>
    %199 = math.tanh %198 : vector<2x64xf32>
    %200 = arith.mulf %195, %199 : vector<2x64xf32>
    %201 = vector.extract_strided_slice %200 {offsets = [0, 0], sizes = [2, 32], strides = [1, 1]} : vector<2x64xf32> to vector<2x32xf32>
    %202 = arith.index_cast %c4_i32 : i32 to index
    %c0_59 = arith.constant 0 : index
    %c0_60 = arith.constant 0 : index
    %203 = vector.load %arg2[%202, %c0_59, %c0_60] : memref<8x2x32xf32, #tpu.memory_space<vmem>>, vector<1x2x32xf32>
    %204 = vector.shape_cast %203 : vector<1x2x32xf32> to vector<2x32xf32>
    %205 = vector.shape_cast %201 : vector<2x32xf32> to vector<1x2x32xf32>
    tpu.vector_store %arg2[%202, %c0_59, %c0_60], %205 {strides = array<i32>} : memref<8x2x32xf32, #tpu.memory_space<vmem>>, vector<1x2x32xf32>,
    %206 = vector.extract_strided_slice %200 {offsets = [0, 32], sizes = [2, 32], strides = [1, 1]} : vector<2x64xf32> to vector<2x32xf32>
    %c7_i32_61 = arith.constant 7 : i32
    %207 = arith.subi %c7_i32_61, %c4_i32 : i32
    %208 = arith.index_cast %207 : i32 to index
    %c0_62 = arith.constant 0 : index
    %c0_63 = arith.constant 0 : index
    %209 = vector.load %arg3[%208, %c0_62, %c0_63] : memref<8x2x32xf32, #tpu.memory_space<vmem>>, vector<1x2x32xf32>
    %210 = vector.shape_cast %209 : vector<1x2x32xf32> to vector<2x32xf32>
    %211 = vector.shape_cast %206 : vector<2x32xf32> to vector<1x2x32xf32>
    tpu.vector_store %arg3[%208, %c0_62, %c0_63], %211 {strides = array<i32>} : memref<8x2x32xf32, #tpu.memory_space<vmem>>, vector<1x2x32xf32>,
    %c5_i32 = arith.constant 5 : i32
    %212 = arith.index_cast %c5_i32 : i32 to index
    %c0_64 = arith.constant 0 : index
    %c0_65 = arith.constant 0 : index
    %213 = vector.load %arg0[%212, %c0_64, %c0_65] : memref<8x2x256xf32, #tpu.memory_space<vmem>>, vector<1x2x256xf32>
    %214 = vector.shape_cast %213 : vector<1x2x256xf32> to vector<2x256xf32>
    %c0_66 = arith.constant 0 : index
    %c0_67 = arith.constant 0 : index
    %215 = vector.load %arg1[%c0_66, %c0_67] : memref<64x256xf32, #tpu.memory_space<vmem>>, vector<64x256xf32>
    %cst_68 = arith.constant dense<0.000000e+00> : vector<2x256xf32>
    %216 = tpu.matmul %200, %215, %cst_68 {dimension_numbers = #tpu.dot_dimension_numbers<[1], [0], [0], [1], [0, 0, 1, 1], [], []>} : vector<2x64xf32>, vector<64x256xf32>, vector<2x256xf32> -> vector<2x256xf32>
    %217 = arith.addf %214, %216 : vector<2x256xf32>
    %218 = vector.extract_strided_slice %217 {offsets = [0, 0], sizes = [2, 64], strides = [1, 1]} : vector<2x256xf32> to vector<2x64xf32>
    %219 = arith.negf %218 : vector<2x64xf32>
    %220 = math.exp %219 : vector<2x64xf32>
    %cst_69 = arith.constant 1.000000e+00 : f32
    %221 = vector.broadcast %cst_69 : f32 to vector<2x64xf32>
    %222 = arith.addf %221, %220 : vector<2x64xf32>
    %223 = arith.divf %221, %222 : vector<2x64xf32>
    %224 = vector.extract_strided_slice %217 {offsets = [0, 64], sizes = [2, 64], strides = [1, 1]} : vector<2x256xf32> to vector<2x64xf32>
    %225 = arith.negf %224 : vector<2x64xf32>
    %226 = math.exp %225 : vector<2x64xf32>
    %cst_70 = arith.constant 1.000000e+00 : f32
    %227 = vector.broadcast %cst_70 : f32 to vector<2x64xf32>
    %228 = arith.addf %227, %226 : vector<2x64xf32>
    %229 = arith.divf %227, %228 : vector<2x64xf32>
    %230 = vector.extract_strided_slice %217 {offsets = [0, 128], sizes = [2, 64], strides = [1, 1]} : vector<2x256xf32> to vector<2x64xf32>
    %231 = math.tanh %230 : vector<2x64xf32>
    %232 = vector.extract_strided_slice %217 {offsets = [0, 192], sizes = [2, 64], strides = [1, 1]} : vector<2x256xf32> to vector<2x64xf32>
    %233 = arith.negf %232 : vector<2x64xf32>
    %234 = math.exp %233 : vector<2x64xf32>
    %cst_71 = arith.constant 1.000000e+00 : f32
    %235 = vector.broadcast %cst_71 : f32 to vector<2x64xf32>
    %236 = arith.addf %235, %234 : vector<2x64xf32>
    %237 = arith.divf %235, %236 : vector<2x64xf32>
    %238 = arith.mulf %229, %198 : vector<2x64xf32>
    %239 = arith.mulf %223, %231 : vector<2x64xf32>
    %240 = arith.addf %238, %239 : vector<2x64xf32>
    %241 = math.tanh %240 : vector<2x64xf32>
    %242 = arith.mulf %237, %241 : vector<2x64xf32>
    %243 = vector.extract_strided_slice %242 {offsets = [0, 0], sizes = [2, 32], strides = [1, 1]} : vector<2x64xf32> to vector<2x32xf32>
    %244 = arith.index_cast %c5_i32 : i32 to index
    %c0_72 = arith.constant 0 : index
    %c0_73 = arith.constant 0 : index
    %245 = vector.load %arg2[%244, %c0_72, %c0_73] : memref<8x2x32xf32, #tpu.memory_space<vmem>>, vector<1x2x32xf32>
    %246 = vector.shape_cast %245 : vector<1x2x32xf32> to vector<2x32xf32>
    %247 = vector.shape_cast %243 : vector<2x32xf32> to vector<1x2x32xf32>
    tpu.vector_store %arg2[%244, %c0_72, %c0_73], %247 {strides = array<i32>} : memref<8x2x32xf32, #tpu.memory_space<vmem>>, vector<1x2x32xf32>,
    %248 = vector.extract_strided_slice %242 {offsets = [0, 32], sizes = [2, 32], strides = [1, 1]} : vector<2x64xf32> to vector<2x32xf32>
    %c7_i32_74 = arith.constant 7 : i32
    %249 = arith.subi %c7_i32_74, %c5_i32 : i32
    %250 = arith.index_cast %249 : i32 to index
    %c0_75 = arith.constant 0 : index
    %c0_76 = arith.constant 0 : index
    %251 = vector.load %arg3[%250, %c0_75, %c0_76] : memref<8x2x32xf32, #tpu.memory_space<vmem>>, vector<1x2x32xf32>
    %252 = vector.shape_cast %251 : vector<1x2x32xf32> to vector<2x32xf32>
    %253 = vector.shape_cast %248 : vector<2x32xf32> to vector<1x2x32xf32>
    tpu.vector_store %arg3[%250, %c0_75, %c0_76], %253 {strides = array<i32>} : memref<8x2x32xf32, #tpu.memory_space<vmem>>, vector<1x2x32xf32>,
    %c6_i32 = arith.constant 6 : i32
    %254 = arith.index_cast %c6_i32 : i32 to index
    %c0_77 = arith.constant 0 : index
    %c0_78 = arith.constant 0 : index
    %255 = vector.load %arg0[%254, %c0_77, %c0_78] : memref<8x2x256xf32, #tpu.memory_space<vmem>>, vector<1x2x256xf32>
    %256 = vector.shape_cast %255 : vector<1x2x256xf32> to vector<2x256xf32>
    %c0_79 = arith.constant 0 : index
    %c0_80 = arith.constant 0 : index
    %257 = vector.load %arg1[%c0_79, %c0_80] : memref<64x256xf32, #tpu.memory_space<vmem>>, vector<64x256xf32>
    %cst_81 = arith.constant dense<0.000000e+00> : vector<2x256xf32>
    %258 = tpu.matmul %242, %257, %cst_81 {dimension_numbers = #tpu.dot_dimension_numbers<[1], [0], [0], [1], [0, 0, 1, 1], [], []>} : vector<2x64xf32>, vector<64x256xf32>, vector<2x256xf32> -> vector<2x256xf32>
    %259 = arith.addf %256, %258 : vector<2x256xf32>
    %260 = vector.extract_strided_slice %259 {offsets = [0, 0], sizes = [2, 64], strides = [1, 1]} : vector<2x256xf32> to vector<2x64xf32>
    %261 = arith.negf %260 : vector<2x64xf32>
    %262 = math.exp %261 : vector<2x64xf32>
    %cst_82 = arith.constant 1.000000e+00 : f32
    %263 = vector.broadcast %cst_82 : f32 to vector<2x64xf32>
    %264 = arith.addf %263, %262 : vector<2x64xf32>
    %265 = arith.divf %263, %264 : vector<2x64xf32>
    %266 = vector.extract_strided_slice %259 {offsets = [0, 64], sizes = [2, 64], strides = [1, 1]} : vector<2x256xf32> to vector<2x64xf32>
    %267 = arith.negf %266 : vector<2x64xf32>
    %268 = math.exp %267 : vector<2x64xf32>
    %cst_83 = arith.constant 1.000000e+00 : f32
    %269 = vector.broadcast %cst_83 : f32 to vector<2x64xf32>
    %270 = arith.addf %269, %268 : vector<2x64xf32>
    %271 = arith.divf %269, %270 : vector<2x64xf32>
    %272 = vector.extract_strided_slice %259 {offsets = [0, 128], sizes = [2, 64], strides = [1, 1]} : vector<2x256xf32> to vector<2x64xf32>
    %273 = math.tanh %272 : vector<2x64xf32>
    %274 = vector.extract_strided_slice %259 {offsets = [0, 192], sizes = [2, 64], strides = [1, 1]} : vector<2x256xf32> to vector<2x64xf32>
    %275 = arith.negf %274 : vector<2x64xf32>
    %276 = math.exp %275 : vector<2x64xf32>
    %cst_84 = arith.constant 1.000000e+00 : f32
    %277 = vector.broadcast %cst_84 : f32 to vector<2x64xf32>
    %278 = arith.addf %277, %276 : vector<2x64xf32>
    %279 = arith.divf %277, %278 : vector<2x64xf32>
    %280 = arith.mulf %271, %240 : vector<2x64xf32>
    %281 = arith.mulf %265, %273 : vector<2x64xf32>
    %282 = arith.addf %280, %281 : vector<2x64xf32>
    %283 = math.tanh %282 : vector<2x64xf32>
    %284 = arith.mulf %279, %283 : vector<2x64xf32>
    %285 = vector.extract_strided_slice %284 {offsets = [0, 0], sizes = [2, 32], strides = [1, 1]} : vector<2x64xf32> to vector<2x32xf32>
    %286 = arith.index_cast %c6_i32 : i32 to index
    %c0_85 = arith.constant 0 : index
    %c0_86 = arith.constant 0 : index
    %287 = vector.load %arg2[%286, %c0_85, %c0_86] : memref<8x2x32xf32, #tpu.memory_space<vmem>>, vector<1x2x32xf32>
    %288 = vector.shape_cast %287 : vector<1x2x32xf32> to vector<2x32xf32>
    %289 = vector.shape_cast %285 : vector<2x32xf32> to vector<1x2x32xf32>
    tpu.vector_store %arg2[%286, %c0_85, %c0_86], %289 {strides = array<i32>} : memref<8x2x32xf32, #tpu.memory_space<vmem>>, vector<1x2x32xf32>,
    %290 = vector.extract_strided_slice %284 {offsets = [0, 32], sizes = [2, 32], strides = [1, 1]} : vector<2x64xf32> to vector<2x32xf32>
    %c7_i32_87 = arith.constant 7 : i32
    %291 = arith.subi %c7_i32_87, %c6_i32 : i32
    %292 = arith.index_cast %291 : i32 to index
    %c0_88 = arith.constant 0 : index
    %c0_89 = arith.constant 0 : index
    %293 = vector.load %arg3[%292, %c0_88, %c0_89] : memref<8x2x32xf32, #tpu.memory_space<vmem>>, vector<1x2x32xf32>
    %294 = vector.shape_cast %293 : vector<1x2x32xf32> to vector<2x32xf32>
    %295 = vector.shape_cast %290 : vector<2x32xf32> to vector<1x2x32xf32>
    tpu.vector_store %arg3[%292, %c0_88, %c0_89], %295 {strides = array<i32>} : memref<8x2x32xf32, #tpu.memory_space<vmem>>, vector<1x2x32xf32>,
    %c7_i32_90 = arith.constant 7 : i32
    %296 = arith.index_cast %c7_i32_90 : i32 to index
    %c0_91 = arith.constant 0 : index
    %c0_92 = arith.constant 0 : index
    %297 = vector.load %arg0[%296, %c0_91, %c0_92] : memref<8x2x256xf32, #tpu.memory_space<vmem>>, vector<1x2x256xf32>
    %298 = vector.shape_cast %297 : vector<1x2x256xf32> to vector<2x256xf32>
    %c0_93 = arith.constant 0 : index
    %c0_94 = arith.constant 0 : index
    %299 = vector.load %arg1[%c0_93, %c0_94] : memref<64x256xf32, #tpu.memory_space<vmem>>, vector<64x256xf32>
    %cst_95 = arith.constant dense<0.000000e+00> : vector<2x256xf32>
    %300 = tpu.matmul %284, %299, %cst_95 {dimension_numbers = #tpu.dot_dimension_numbers<[1], [0], [0], [1], [0, 0, 1, 1], [], []>} : vector<2x64xf32>, vector<64x256xf32>, vector<2x256xf32> -> vector<2x256xf32>
    %301 = arith.addf %298, %300 : vector<2x256xf32>
    %302 = vector.extract_strided_slice %301 {offsets = [0, 0], sizes = [2, 64], strides = [1, 1]} : vector<2x256xf32> to vector<2x64xf32>
    %303 = arith.negf %302 : vector<2x64xf32>
    %304 = math.exp %303 : vector<2x64xf32>
    %cst_96 = arith.constant 1.000000e+00 : f32
    %305 = vector.broadcast %cst_96 : f32 to vector<2x64xf32>
    %306 = arith.addf %305, %304 : vector<2x64xf32>
    %307 = arith.divf %305, %306 : vector<2x64xf32>
    %308 = vector.extract_strided_slice %301 {offsets = [0, 64], sizes = [2, 64], strides = [1, 1]} : vector<2x256xf32> to vector<2x64xf32>
    %309 = arith.negf %308 : vector<2x64xf32>
    %310 = math.exp %309 : vector<2x64xf32>
    %cst_97 = arith.constant 1.000000e+00 : f32
    %311 = vector.broadcast %cst_97 : f32 to vector<2x64xf32>
    %312 = arith.addf %311, %310 : vector<2x64xf32>
    %313 = arith.divf %311, %312 : vector<2x64xf32>
    %314 = vector.extract_strided_slice %301 {offsets = [0, 128], sizes = [2, 64], strides = [1, 1]} : vector<2x256xf32> to vector<2x64xf32>
    %315 = math.tanh %314 : vector<2x64xf32>
    %316 = vector.extract_strided_slice %301 {offsets = [0, 192], sizes = [2, 64], strides = [1, 1]} : vector<2x256xf32> to vector<2x64xf32>
    %317 = arith.negf %316 : vector<2x64xf32>
    %318 = math.exp %317 : vector<2x64xf32>
    %cst_98 = arith.constant 1.000000e+00 : f32
    %319 = vector.broadcast %cst_98 : f32 to vector<2x64xf32>
    %320 = arith.addf %319, %318 : vector<2x64xf32>
    %321 = arith.divf %319, %320 : vector<2x64xf32>
    %322 = arith.mulf %313, %282 : vector<2x64xf32>
    %323 = arith.mulf %307, %315 : vector<2x64xf32>
    %324 = arith.addf %322, %323 : vector<2x64xf32>
    %325 = math.tanh %324 : vector<2x64xf32>
    %326 = arith.mulf %321, %325 : vector<2x64xf32>
    %327 = vector.extract_strided_slice %326 {offsets = [0, 0], sizes = [2, 32], strides = [1, 1]} : vector<2x64xf32> to vector<2x32xf32>
    %328 = arith.index_cast %c7_i32_90 : i32 to index
    %c0_99 = arith.constant 0 : index
    %c0_100 = arith.constant 0 : index
    %329 = vector.load %arg2[%328, %c0_99, %c0_100] : memref<8x2x32xf32, #tpu.memory_space<vmem>>, vector<1x2x32xf32>
    %330 = vector.shape_cast %329 : vector<1x2x32xf32> to vector<2x32xf32>
    %331 = vector.shape_cast %327 : vector<2x32xf32> to vector<1x2x32xf32>
    tpu.vector_store %arg2[%328, %c0_99, %c0_100], %331 {strides = array<i32>} : memref<8x2x32xf32, #tpu.memory_space<vmem>>, vector<1x2x32xf32>,
    %332 = vector.extract_strided_slice %326 {offsets = [0, 32], sizes = [2, 32], strides = [1, 1]} : vector<2x64xf32> to vector<2x32xf32>
    %c7_i32_101 = arith.constant 7 : i32
    %333 = arith.subi %c7_i32_101, %c7_i32_90 : i32
    %334 = arith.index_cast %333 : i32 to index
    %c0_102 = arith.constant 0 : index
    %c0_103 = arith.constant 0 : index
    %335 = vector.load %arg3[%334, %c0_102, %c0_103] : memref<8x2x32xf32, #tpu.memory_space<vmem>>, vector<1x2x32xf32>
    %336 = vector.shape_cast %335 : vector<1x2x32xf32> to vector<2x32xf32>
    %337 = vector.shape_cast %332 : vector<2x32xf32> to vector<1x2x32xf32>
    tpu.vector_store %arg3[%334, %c0_102, %c0_103], %337 {strides = array<i32>} : memref<8x2x32xf32, #tpu.memory_space<vmem>>, vector<1x2x32xf32>,
    %c8_i32 = arith.constant 8 : i32
    %c0_104 = arith.constant 0 : index
    %c0_105 = arith.constant 0 : index
    %338 = vector.load %arg4[%c0_104, %c0_105] : memref<2x64xf32, #tpu.memory_space<vmem>>, vector<2x64xf32>
    tpu.vector_store %arg4[%c0_104, %c0_105], %326 {strides = array<i32>} : memref<2x64xf32, #tpu.memory_space<vmem>>, vector<2x64xf32>,
    %c0_106 = arith.constant 0 : index
    %c0_107 = arith.constant 0 : index
    %339 = vector.load %arg5[%c0_106, %c0_107] : memref<2x64xf32, #tpu.memory_space<vmem>>, vector<2x64xf32>
    tpu.vector_store %arg5[%c0_106, %c0_107], %324 {strides = array<i32>} : memref<2x64xf32, #tpu.memory_space<vmem>>, vector<2x64xf32>,
    return
  }
}

</mosaic_0001>

<llo_original>
// kernel: encoder_forward.3
$region0: #{encoder_forward.3}
  #allocation0 [shape = 'u32[]', space=smem, size = 0x4, offset = 0x4, fixed_abs, tag = 'smem constant byte address 0x4 - core index']
  #allocation1 [shape = 'u32[144,128]{1,0:T(1,128)}', space=vmem, size = 0x12000, scoped, tag = 'internal scratch']
  %s0 = inlined_call_operand.vmem [shape: f32[8,2,256], index: 0, kind: input, shape index: {}]
  %s1 = inlined_call_operand.vmem [shape: f32[64,256], index: 1, kind: input, shape index: {}]
  %s2 = inlined_call_operand.hbm [shape: f32[8,2,32], index: 2, kind: output, shape index: {0}]
  %s3 = inlined_call_operand.hbm [shape: f32[8,2,32], index: 3, kind: output, shape index: {1}]
  %s4 = inlined_call_operand.vmem [shape: f32[2,64], index: 4, kind: output, shape index: {2}]
  %s5 = inlined_call_operand.vmem [shape: f32[2,64], index: 5, kind: output, shape index: {3}]
  %6 = xla_tuple %s2, %s3, %s4, %s5
  %s7 = sld [smem:[#allocation0]]
  $region42: #{encoder_forward.3} parent=0
    _
  %s9 = ssub.s32 1, %s7
  %s10 = scalar_select 0, %s9, %s7
  $region1: #{encoder_forward.3} parent=0
    #allocation2 [shape = 'u8[8192]{0}', space=vmem, size = 0x2000, scoped, tag = 'output window, operand 0, single buffered']
    #allocation3 [shape = 's32[1]{0}', space=sflag, size = 0x4, scoped, tag = 'scoped memory for encoder_forward.3']
    #allocation4 [shape = 'u8[8192]{0}', space=vmem, size = 0x2000, scoped, tag = 'output window, operand 1, single buffered']
    #allocation5 [shape = 's32[1]{0}', space=sflag, size = 0x4, scoped, tag = 'scoped memory for encoder_forward.3']
    %11 = vsyncpa [#allocation3], 0
    %12 = vsyncpa [#allocation5], 0
    // Predicated region
    $region2: #{encoder_forward.3} parent=1 // pred_check
      _
    $region3: #{encoder_forward.3} parent=1 // pred_check_branch
      %14 = sbr.rel (0) target = $region5
    $region4: #{encoder_forward.3} parent=1 // pred_region
      _
    $region5: #{encoder_forward.3} parent=1 // pred_fallthru
      _
    // Predicated region
    $region6: #{encoder_forward.3} parent=1 // pred_check
      _
    $region7: #{encoder_forward.3} parent=1 // pred_check_branch
      %16 = sbr.rel (0) target = $region9
    $region8: #{encoder_forward.3} parent=1 // pred_region
      _
    $region9: #{encoder_forward.3} parent=1 // pred_fallthru
      _
    %v17 = vld [vmem:[%s0] sm:$0xf]
    %v18 = vld [vmem:[%s1] sm:$0xff]
    %v19 = vld [vmem:[%s1 + $0x8] sm:$0xff]
    %v20 = vld [vmem:[%s1 + $0x10] sm:$0xff]
    %v21 = vld [vmem:[%s1 + $0x18] sm:$0xff]
    %v22 = vld [vmem:[%s1 + $0x20] sm:$0xff]
    %v23 = vld [vmem:[%s1 + $0x28] sm:$0xff]
    %v24 = vld [vmem:[%s1 + $0x30] sm:$0xff]
    %v25 = vld [vmem:[%s1 + $0x38] sm:$0xff]
    %v26 = vld [vmem:[%s1 + $0x40] sm:$0xff]
    %v27 = vld [vmem:[%s1 + $0x48] sm:$0xff]
    %v28 = vld [vmem:[%s1 + $0x50] sm:$0xff]
    %v29 = vld [vmem:[%s1 + $0x58] sm:$0xff]
    %v30 = vld [vmem:[%s1 + $0x60] sm:$0xff]
    %v31 = vld [vmem:[%s1 + $0x68] sm:$0xff]
    %v32 = vld [vmem:[%s1 + $0x70] sm:$0xff]
    %v33 = vld [vmem:[%s1 + $0x78] sm:$0xff]
    %vm34 = vcmask 523264
    %v36 = vsel %vm34, 0.0, 0
    %38 = vmatprep.subr.mxu0 0.0
    %39 = vmatpush1.msra.mxu0 0.0
    %40 = vmatprep.subr.mxu0 0.0
    %41 = vmatpush1.msra.mxu0 0.0
    %42 = vmatprep.subr.mxu0 0.0
    %43 = vmatpush1.msra.mxu0 0.0
    %44 = vmatprep.subr.mxu0 0.0
    %45 = vmatpush1.msra.mxu0 0.0
    %46 = vmatprep.subr.mxu0 0.0
    %47 = vmatpush1.msra.mxu0 0.0
    %48 = vmatprep.subr.mxu0 0.0
    %49 = vmatpush1.msra.mxu0 0.0
    %50 = vmatprep.subr.mxu0 0.0
    %51 = vmatpush1.msra.mxu0 0.0
    %52 = vmatprep.subr.mxu0 0.0
    %53 = vmatpush1.msra.mxu0 0.0
    %54 = vmatprep.subr.mxu0 %v33
    %55 = vmatpush1.msra.mxu0 %v32
    %56 = vmatprep.subr.mxu0 %v31
    %57 = vmatpush1.msra.mxu0 %v30
    %58 = vmatprep.subr.mxu0 %v29
    %59 = vmatpush1.msra.mxu0 %v28
    %60 = vmatprep.subr.mxu0 %v27
    %61 = vmatpush1.msra.mxu0 %v26
    %62 = vmatprep.subr.mxu0 %v25
    %63 = vmatpush1.msra.mxu0 %v24
    %64 = vmatprep.subr.mxu0 %v23
    %65 = vmatpush1.msra.mxu0 %v22
    %66 = vmatprep.subr.mxu0 %v21
    %67 = vmatpush1.msra.mxu0 %v20
    %68 = vmatprep.subr.mxu0 %v19
    %69 = vmatpush1.msra.mxu0 %v18
    %70 = vmatprep.subr.mxu0 0.0
    %71 = vmatpush2.msra.mxu0 0.0
    %72 = vmatprep.subr.mxu0 0.0
    %73 = vmatpush2.msra.mxu0 0.0
    %74 = vmatprep.subr.mxu0 0.0
    %75 = vmatpush2.msra.mxu0 0.0
    %76 = vmatprep.subr.mxu0 0.0
    %77 = vmatpush2.msra.mxu0 0.0
    %78 = vmatprep.subr.mxu0 0.0
    %79 = vmatpush2.msra.mxu0 0.0
    %80 = vmatprep.subr.mxu0 0.0
    %81 = vmatpush2.msra.mxu0 0.0
    %82 = vmatprep.subr.mxu0 0.0
    %83 = vmatpush2.msra.mxu0 0.0
    %84 = vmatprep.subr.mxu0 0.0
    %85 = vmatpush2.msra.mxu0 0.0
    %86 = vmatprep.subr.mxu0 0.0
    %87 = vmatpush2.msra.mxu0 0.0
    %88 = vmatprep.subr.mxu0 0.0
    %89 = vmatpush2.msra.mxu0 0.0
    %90 = vmatprep.subr.mxu0 0.0
    %91 = vmatpush2.msra.mxu0 0.0
    %92 = vmatprep.subr.mxu0 0.0
    %93 = vmatpush2.msra.mxu0 0.0
    %94 = vmatprep.subr.mxu0 0.0
    %95 = vmatpush2.msra.mxu0 0.0
    %96 = vmatprep.subr.mxu0 0.0
    %97 = vmatpush2.msra.mxu0 0.0
    %98 = vmatprep.subr.mxu0 0.0
    %99 = vmatpush2.msra.mxu0 0.0
    %100 = vmatprep.subr.mxu0 0.0
    %101 = vmatpush2.msra.mxu0 0.0
    %102 = vmatprep.mubr.f32.mxu0 0.0
    %103 = vmatmul.mubr.f32.gmra.mxu0 %v36
    %v104 = vpop.f32.mrf.mxu0
    %v105 = vadd.f32 0.0, %v104
    %v106 = vpop.f32.mrf.mxu0
    %v107 = vadd.f32 0.0, %v106
    %108 = vdwg.mxu0
    %v111 = vcombine.low %v105, %v107
    %v113 = vunpack.c.l.s4 1983009808
    %v114 = vunpack.c.0.s8 %v113
    %v115 = vlaneseq
    %v116 = vshrl.u32 %v115, 7
    %v117 = vsub.s32 %v114, %v116
    %v118 = vrot.slane %v111, %v117
    %v120 = vadd.f32 %v17, %v118
    %v121 = vxor.u32 %v120, 2147483648
    %v122 = vmul.f32 %v121, 1.442695
    %v123 = vpow.pop %v122
    %v124 = vadd.f32 %v123, 1.0
    %v125 = vrcp.pop %v124
    %v126 = vmul.f32 1.0, %v125
    %v128 = vrot.slane %v120, 2
    %v130 = vtanh.pop %v128
    %131 = vrot.lane.b32.xlu0 %v120, 64
    %v132 = vpop.permute.xlu0 %131
    %v133 = vrot.slane %v132, 2
    %v135 = vxor.u32 %v133, 2147483648
    %v136 = vmul.f32 %v135, 1.442695
    %v137 = vpow.pop %v136
    %v138 = vadd.f32 %v137, 1.0
    %v139 = vrcp.pop %v138
    %v140 = vmul.f32 1.0, %v139
    %v141 = vmul.f32 %v126, 0.0
    %v142 = vmul.f32 %v126, %v130
    %144 = vrot.lane.b32.xlu0 %v142, 64
    %v145 = vpop.permute.xlu0 %144
    %v147 = vadd.f32 %v141, %v145
    %v148 = vtanh.pop %v147
    %150 = vrot.lane.b32.xlu0 %v148, 64
    %v151 = vpop.permute.xlu0 %150
    %v153 = vmul.f32 %v140, %v151
    %vm154 = vcmask 254976
    %155 = vst.msk [vmem:[#allocation2] sm:$0x3] %vm154, %v153
    %v158 = vunpack.c.l.s4 1983009808
    %v159 = vunpack.c.0.s8 %v158
    %v160 = vlaneseq
    %v161 = vshrl.u32 %v160, 7
    %v162 = vsub.s32 %v159, %v161
    %v163 = vrot.slane %v153, %v162
    %164 = vrot.lane.b32.xlu0 %v163, 96
    %v165 = vpop.permute.xlu0 %164
    %s167 = scalar_lea.vmem [#allocation4], 14
    %168 = vst.msk [vmem:[%s167] sm:$0x3] %vm154, %v165
    %s169 = scalar_lea.vmem %s0, 4
    %v170 = vld [vmem:[%s169] sm:$0xf]
    %v171 = vld [vmem:[%s1] sm:$0xff]
    %v172 = vld [vmem:[%s1 + $0x8] sm:$0xff]
    %v173 = vld [vmem:[%s1 + $0x10] sm:$0xff]
    %v174 = vld [vmem:[%s1 + $0x18] sm:$0xff]
    %v175 = vld [vmem:[%s1 + $0x20] sm:$0xff]
    %v176 = vld [vmem:[%s1 + $0x28] sm:$0xff]
    %v177 = vld [vmem:[%s1 + $0x30] sm:$0xff]
    %v178 = vld [vmem:[%s1 + $0x38] sm:$0xff]
    %v179 = vld [vmem:[%s1 + $0x40] sm:$0xff]
    %v180 = vld [vmem:[%s1 + $0x48] sm:$0xff]
    %v181 = vld [vmem:[%s1 + $0x50] sm:$0xff]
    %v182 = vld [vmem:[%s1 + $0x58] sm:$0xff]
    %v183 = vld [vmem:[%s1 + $0x60] sm:$0xff]
    %v184 = vld [vmem:[%s1 + $0x68] sm:$0xff]
    %v185 = vld [vmem:[%s1 + $0x70] sm:$0xff]
    %v186 = vld [vmem:[%s1 + $0x78] sm:$0xff]
    %v187 = vsel %vm34, %v153, 0
    %189 = vmatprep.subr.mxu0 0.0
    %190 = vmatpush1.msra.mxu0 0.0
    %191 = vmatprep.subr.mxu0 0.0
    %192 = vmatpush1.msra.mxu0 0.0
    %193 = vmatprep.subr.mxu0 0.0
    %194 = vmatpush1.msra.mxu0 0.0
    %195 = vmatprep.subr.mxu0 0.0
    %196 = vmatpush1.msra.mxu0 0.0
    %197 = vmatprep.subr.mxu0 0.0
    %198 = vmatpush1.msra.mxu0 0.0
    %199 = vmatprep.subr.mxu0 0.0
    %200 = vmatpush1.msra.mxu0 0.0
    %201 = vmatprep.subr.mxu0 0.0
    %202 = vmatpush1.msra.mxu0 0.0
    %203 = vmatprep.subr.mxu0 0.0
    %204 = vmatpush1.msra.mxu0 0.0
    %205 = vmatprep.subr.mxu0 %v186
    %206 = vmatpush1.msra.mxu0 %v185
    %207 = vmatprep.subr.mxu0 %v184
    %208 = vmatpush1.msra.mxu0 %v183
    %209 = vmatprep.subr.mxu0 %v182
    %210 = vmatpush1.msra.mxu0 %v181
    %211 = vmatprep.subr.mxu0 %v180
    %212 = vmatpush1.msra.mxu0 %v179
    %213 = vmatprep.subr.mxu0 %v178
    %214 = vmatpush1.msra.mxu0 %v177
    %215 = vmatprep.subr.mxu0 %v176
    %216 = vmatpush1.msra.mxu0 %v175
    %217 = vmatprep.subr.mxu0 %v174
    %218 = vmatpush1.msra.mxu0 %v173
    %219 = vmatprep.subr.mxu0 %v172
    %220 = vmatpush1.msra.mxu0 %v171
    %221 = vmatprep.subr.mxu0 0.0
    %222 = vmatpush2.msra.mxu0 0.0
    %223 = vmatprep.subr.mxu0 0.0
    %224 = vmatpush2.msra.mxu0 0.0
    %225 = vmatprep.subr.mxu0 0.0
    %226 = vmatpush2.msra.mxu0 0.0
    %227 = vmatprep.subr.mxu0 0.0
    %228 = vmatpush2.msra.mxu0 0.0
    %229 = vmatprep.subr.mxu0 0.0
    %230 = vmatpush2.msra.mxu0 0.0
    %231 = vmatprep.subr.mxu0 0.0
    %232 = vmatpush2.msra.mxu0 0.0
    %233 = vmatprep.subr.mxu0 0.0
    %234 = vmatpush2.msra.mxu0 0.0
    %235 = vmatprep.subr.mxu0 0.0
    %236 = vmatpush2.msra.mxu0 0.0
    %237 = vmatprep.subr.mxu0 0.0
    %238 = vmatpush2.msra.mxu0 0.0
    %239 = vmatprep.subr.mxu0 0.0
    %240 = vmatpush2.msra.mxu0 0.0
    %241 = vmatprep.subr.mxu0 0.0
    %242 = vmatpush2.msra.mxu0 0.0
    %243 = vmatprep.subr.mxu0 0.0
    %244 = vmatpush2.msra.mxu0 0.0
    %245 = vmatprep.subr.mxu0 0.0
    %246 = vmatpush2.msra.mxu0 0.0
    %247 = vmatprep.subr.mxu0 0.0
    %248 = vmatpush2.msra.mxu0 0.0
    %249 = vmatprep.subr.mxu0 0.0
    %250 = vmatpush2.msra.mxu0 0.0
    %251 = vmatprep.subr.mxu0 0.0
    %252 = vmatpush2.msra.mxu0 0.0
    %253 = vmatprep.mubr.f32.mxu0 0.0
    %254 = vmatmul.mubr.f32.gmra.mxu0 %v187
    %v255 = vpop.f32.mrf.mxu0
    %v256 = vadd.f32 0.0, %v255
    %v257 = vpop.f32.mrf.mxu0
    %v258 = vadd.f32 0.0, %v257
    %259 = vdwg.mxu0
    %v262 = vcombine.low %v256, %v258
    %v264 = vunpack.c.l.s4 1983009808
    %v265 = vunpack.c.0.s8 %v264
    %v266 = vlaneseq
    %v267 = vshrl.u32 %v266, 7
    %v268 = vsub.s32 %v265, %v267
    %v269 = vrot.slane %v262, %v268
    %v271 = vadd.f32 %v170, %v269
    %v272 = vxor.u32 %v271, 2147483648
    %v273 = vmul.f32 %v272, 1.442695
    %v274 = vpow.pop %v273
    %v275 = vadd.f32 %v274, 1.0
    %v276 = vrcp.pop %v275
    %v277 = vmul.f32 1.0, %v276
    %v279 = vrot.slane %v271, 2
    %v281 = vtanh.pop %v279
    %282 = vrot.lane.b32.xlu0 %v271, 64
    %v283 = vpop.permute.xlu0 %282
    %v284 = vrot.slane %v283, 2
    %v286 = vxor.u32 %v284, 2147483648
    %v287 = vmul.f32 %v286, 1.442695
    %v288 = vpow.pop %v287
    %v289 = vadd.f32 %v288, 1.0
    %v290 = vrcp.pop %v289
    %v291 = vmul.f32 1.0, %v290
    %v292 = vmul.f32 %v277, %v147
    %v293 = vmul.f32 %v277, %v281
    %295 = vrot.lane.b32.xlu0 %v293, 64
    %v296 = vpop.permute.xlu0 %295
    %v298 = vadd.f32 %v292, %v296
    %v299 = vtanh.pop %v298
    %301 = vrot.lane.b32.xlu0 %v299, 64
    %v302 = vpop.permute.xlu0 %301
    %v304 = vmul.f32 %v291, %v302
    %s305 = scalar_lea.vmem [#allocation2], 2
    %306 = vst.msk [vmem:[%s305] sm:$0x3] %vm154, %v304
    %v309 = vunpack.c.l.s4 1983009808
    %v310 = vunpack.c.0.s8 %v309
    %v311 = vlaneseq
    %v312 = vshrl.u32 %v311, 7
    %v313 = vsub.s32 %v310, %v312
    %v314 = vrot.slane %v304, %v313
    %315 = vrot.lane.b32.xlu0 %v314, 96
    %v316 = vpop.permute.xlu0 %315
    %s318 = scalar_lea.vmem [#allocation4], 12
    %319 = vst.msk [vmem:[%s318] sm:$0x3] %vm154, %v316
    %s320 = scalar_lea.vmem %s0, 8
    %v321 = vld [vmem:[%s320] sm:$0xf]
    %v322 = vld [vmem:[%s1] sm:$0xff]
    %v323 = vld [vmem:[%s1 + $0x8] sm:$0xff]
    %v324 = vld [vmem:[%s1 + $0x10] sm:$0xff]
    %v325 = vld [vmem:[%s1 + $0x18] sm:$0xff]
    %v326 = vld [vmem:[%s1 + $0x20] sm:$0xff]
    %v327 = vld [vmem:[%s1 + $0x28] sm:$0xff]
    %v328 = vld [vmem:[%s1 + $0x30] sm:$0xff]
    %v329 = vld [vmem:[%s1 + $0x38] sm:$0xff]
    %v330 = vld [vmem:[%s1 + $0x40] sm:$0xff]
    %v331 = vld [vmem:[%s1 + $0x48] sm:$0xff]
    %v332 = vld [vmem:[%s1 + $0x50] sm:$0xff]
    %v333 = vld [vmem:[%s1 + $0x58] sm:$0xff]
    %v334 = vld [vmem:[%s1 + $0x60] sm:$0xff]
    %v335 = vld [vmem:[%s1 + $0x68] sm:$0xff]
    %v336 = vld [vmem:[%s1 + $0x70] sm:$0xff]
    %v337 = vld [vmem:[%s1 + $0x78] sm:$0xff]
    %v338 = vsel %vm34, %v304, 0
    %340 = vmatprep.subr.mxu0 0.0
    %341 = vmatpush1.msra.mxu0 0.0
    %342 = vmatprep.subr.mxu0 0.0
    %343 = vmatpush1.msra.mxu0 0.0
    %344 = vmatprep.subr.mxu0 0.0
    %345 = vmatpush1.msra.mxu0 0.0
    %346 = vmatprep.subr.mxu0 0.0
    %347 = vmatpush1.msra.mxu0 0.0
    %348 = vmatprep.subr.mxu0 0.0
    %349 = vmatpush1.msra.mxu0 0.0
    %350 = vmatprep.subr.mxu0 0.0
    %351 = vmatpush1.msra.mxu0 0.0
    %352 = vmatprep.subr.mxu0 0.0
    %353 = vmatpush1.msra.mxu0 0.0
    %354 = vmatprep.subr.mxu0 0.0
    %355 = vmatpush1.msra.mxu0 0.0
    %356 = vmatprep.subr.mxu0 %v337
    %357 = vmatpush1.msra.mxu0 %v336
    %358 = vmatprep.subr.mxu0 %v335
    %359 = vmatpush1.msra.mxu0 %v334
    %360 = vmatprep.subr.mxu0 %v333
    %361 = vmatpush1.msra.mxu0 %v332
    %362 = vmatprep.subr.mxu0 %v331
    %363 = vmatpush1.msra.mxu0 %v330
    %364 = vmatprep.subr.mxu0 %v329
    %365 = vmatpush1.msra.mxu0 %v328
    %366 = vmatprep.subr.mxu0 %v327
    %367 = vmatpush1.msra.mxu0 %v326
    %368 = vmatprep.subr.mxu0 %v325
    %369 = vmatpush1.msra.mxu0 %v324
    %370 = vmatprep.subr.mxu0 %v323
    %371 = vmatpush1.msra.mxu0 %v322
    %372 = vmatprep.subr.mxu0 0.0
    %373 = vmatpush2.msra.mxu0 0.0
    %374 = vmatprep.subr.mxu0 0.0
    %375 = vmatpush2.msra.mxu0 0.0
    %376 = vmatprep.subr.mxu0 0.0
    %377 = vmatpush2.msra.mxu0 0.0
    %378 = vmatprep.subr.mxu0 0.0
    %379 = vmatpush2.msra.mxu0 0.0
    %380 = vmatprep.subr.mxu0 0.0
    %381 = vmatpush2.msra.mxu0 0.0
    %382 = vmatprep.subr.mxu0 0.0
    %383 = vmatpush2.msra.mxu0 0.0
    %384 = vmatprep.subr.mxu0 0.0
    %385 = vmatpush2.msra.mxu0 0.0
    %386 = vmatprep.subr.mxu0 0.0
    %387 = vmatpush2.msra.mxu0 0.0
    %388 = vmatprep.subr.mxu0 0.0
    %389 = vmatpush2.msra.mxu0 0.0
    %390 = vmatprep.subr.mxu0 0.0
    %391 = vmatpush2.msra.mxu0 0.0
    %392 = vmatprep.subr.mxu0 0.0
    %393 = vmatpush2.msra.mxu0 0.0
    %394 = vmatprep.subr.mxu0 0.0
    %395 = vmatpush2.msra.mxu0 0.0
    %396 = vmatprep.subr.mxu0 0.0
    %397 = vmatpush2.msra.mxu0 0.0
    %398 = vmatprep.subr.mxu0 0.0
    %399 = vmatpush2.msra.mxu0 0.0
    %400 = vmatprep.subr.mxu0 0.0
    %401 = vmatpush2.msra.mxu0 0.0
    %402 = vmatprep.subr.mxu0 0.0
    %403 = vmatpush2.msra.mxu0 0.0
    %404 = vmatprep.mubr.f32.mxu0 0.0
    %405 = vmatmul.mubr.f32.gmra.mxu0 %v338
    %v406 = vpop.f32.mrf.mxu0
    %v407 = vadd.f32 0.0, %v406
    %v408 = vpop.f32.mrf.mxu0
    %v409 = vadd.f32 0.0, %v408
    %410 = vdwg.mxu0
    %v413 = vcombine.low %v407, %v409
    %v415 = vunpack.c.l.s4 1983009808
    %v416 = vunpack.c.0.s8 %v415
    %v417 = vlaneseq
    %v418 = vshrl.u32 %v417, 7
    %v419 = vsub.s32 %v416, %v418
    %v420 = vrot.slane %v413, %v419
    %v422 = vadd.f32 %v321, %v420
    %v423 = vxor.u32 %v422, 2147483648
    %v424 = vmul.f32 %v423, 1.442695
    %v425 = vpow.pop %v424
    %v426 = vadd.f32 %v425, 1.0
    %v427 = vrcp.pop %v426
    %v428 = vmul.f32 1.0, %v427
    %v430 = vrot.slane %v422, 2
    %v432 = vtanh.pop %v430
    %433 = vrot.lane.b32.xlu0 %v422, 64
    %v434 = vpop.permute.xlu0 %433
    %v435 = vrot.slane %v434, 2
    %v437 = vxor.u32 %v435, 2147483648
    %v438 = vmul.f32 %v437, 1.442695
    %v439 = vpow.pop %v438
    %v440 = vadd.f32 %v439, 1.0
    %v441 = vrcp.pop %v440
    %v442 = vmul.f32 1.0, %v441
    %v443 = vmul.f32 %v428, %v298
    %v444 = vmul.f32 %v428, %v432
    %446 = vrot.lane.b32.xlu0 %v444, 64
    %v447 = vpop.permute.xlu0 %446
    %v449 = vadd.f32 %v443, %v447
    %v450 = vtanh.pop %v449
    %452 = vrot.lane.b32.xlu0 %v450, 64
    %v453 = vpop.permute.xlu0 %452
    %v455 = vmul.f32 %v442, %v453
    %s456 = scalar_lea.vmem [#allocation2], 4
    %457 = vst.msk [vmem:[%s456] sm:$0x3] %vm154, %v455
    %v460 = vunpack.c.l.s4 1983009808
    %v461 = vunpack.c.0.s8 %v460
    %v462 = vlaneseq
    %v463 = vshrl.u32 %v462, 7
    %v464 = vsub.s32 %v461, %v463
    %v465 = vrot.slane %v455, %v464
    %466 = vrot.lane.b32.xlu0 %v465, 96
    %v467 = vpop.permute.xlu0 %466
    %s469 = scalar_lea.vmem [#allocation4], 10
    %470 = vst.msk [vmem:[%s469] sm:$0x3] %vm154, %v467
    %s471 = scalar_lea.vmem %s0, 12
    %v472 = vld [vmem:[%s471] sm:$0xf]
    %v473 = vld [vmem:[%s1] sm:$0xff]
    %v474 = vld [vmem:[%s1 + $0x8] sm:$0xff]
    %v475 = vld [vmem:[%s1 + $0x10] sm:$0xff]
    %v476 = vld [vmem:[%s1 + $0x18] sm:$0xff]
    %v477 = vld [vmem:[%s1 + $0x20] sm:$0xff]
    %v478 = vld [vmem:[%s1 + $0x28] sm:$0xff]
    %v479 = vld [vmem:[%s1 + $0x30] sm:$0xff]
    %v480 = vld [vmem:[%s1 + $0x38] sm:$0xff]
    %v481 = vld [vmem:[%s1 + $0x40] sm:$0xff]
    %v482 = vld [vmem:[%s1 + $0x48] sm:$0xff]
    %v483 = vld [vmem:[%s1 + $0x50] sm:$0xff]
    %v484 = vld [vmem:[%s1 + $0x58] sm:$0xff]
    %v485 = vld [vmem:[%s1 + $0x60] sm:$0xff]
    %v486 = vld [vmem:[%s1 + $0x68] sm:$0xff]
    %v487 = vld [vmem:[%s1 + $0x70] sm:$0xff]
    %v488 = vld [vmem:[%s1 + $0x78] sm:$0xff]
    %v489 = vsel %vm34, %v455, 0
    %491 = vmatprep.subr.mxu0 0.0
    %492 = vmatpush1.msra.mxu0 0.0
    %493 = vmatprep.subr.mxu0 0.0
    %494 = vmatpush1.msra.mxu0 0.0
    %495 = vmatprep.subr.mxu0 0.0
    %496 = vmatpush1.msra.mxu0 0.0
    %497 = vmatprep.subr.mxu0 0.0
    %498 = vmatpush1.msra.mxu0 0.0
    %499 = vmatprep.subr.mxu0 0.0
    %500 = vmatpush1.msra.mxu0 0.0
    %501 = vmatprep.subr.mxu0 0.0
    %502 = vmatpush1.msra.mxu0 0.0
    %503 = vmatprep.subr.mxu0 0.0
    %504 = vmatpush1.msra.mxu0 0.0
    %505 = vmatprep.subr.mxu0 0.0
    %506 = vmatpush1.msra.mxu0 0.0
    %507 = vmatprep.subr.mxu0 %v488
    %508 = vmatpush1.msra.mxu0 %v487
    %509 = vmatprep.subr.mxu0 %v486
    %510 = vmatpush1.msra.mxu0 %v485
    %511 = vmatprep.subr.mxu0 %v484
    %512 = vmatpush1.msra.mxu0 %v483
    %513 = vmatprep.subr.mxu0 %v482
    %514 = vmatpush1.msra.mxu0 %v481
    %515 = vmatprep.subr.mxu0 %v480
    %516 = vmatpush1.msra.mxu0 %v479
    %517 = vmatprep.subr.mxu0 %v478
    %518 = vmatpush1.msra.mxu0 %v477
    %519 = vmatprep.subr.mxu0 %v476
    %520 = vmatpush1.msra.mxu0 %v475
    %521 = vmatprep.subr.mxu0 %v474
    %522 = vmatpush1.msra.mxu0 %v473
    %523 = vmatprep.subr.mxu0 0.0
    %524 = vmatpush2.msra.mxu0 0.0
    %525 = vmatprep.subr.mxu0 0.0
    %526 = vmatpush2.msra.mxu0 0.0
    %527 = vmatprep.subr.mxu0 0.0
    %528 = vmatpush2.msra.mxu0 0.0
    %529 = vmatprep.subr.mxu0 0.0
    %530 = vmatpush2.msra.mxu0 0.0
    %531 = vmatprep.subr.mxu0 0.0
    %532 = vmatpush2.msra.mxu0 0.0
    %533 = vmatprep.subr.mxu0 0.0
    %534 = vmatpush2.msra.mxu0 0.0
    %535 = vmatprep.subr.mxu0 0.0
    %536 = vmatpush2.msra.mxu0 0.0
    %537 = vmatprep.subr.mxu0 0.0
    %538 = vmatpush2.msra.mxu0 0.0
    %539 = vmatprep.subr.mxu0 0.0
    %540 = vmatpush2.msra.mxu0 0.0
    %541 = vmatprep.subr.mxu0 0.0
    %542 = vmatpush2.msra.mxu0 0.0
    %543 = vmatprep.subr.mxu0 0.0
    %544 = vmatpush2.msra.mxu0 0.0
    %545 = vmatprep.subr.mxu0 0.0
    %546 = vmatpush2.msra.mxu0 0.0
    %547 = vmatprep.subr.mxu0 0.0
    %548 = vmatpush2.msra.mxu0 0.0
    %549 = vmatprep.subr.mxu0 0.0
    %550 = vmatpush2.msra.mxu0 0.0
    %551 = vmatprep.subr.mxu0 0.0
    %552 = vmatpush2.msra.mxu0 0.0
    %553 = vmatprep.subr.mxu0 0.0
    %554 = vmatpush2.msra.mxu0 0.0
    %555 = vmatprep.mubr.f32.mxu0 0.0
    %556 = vmatmul.mubr.f32.gmra.mxu0 %v489
    %v557 = vpop.f32.mrf.mxu0
    %v558 = vadd.f32 0.0, %v557
    %v559 = vpop.f32.mrf.mxu0
    %v560 = vadd.f32 0.0, %v559
    %561 = vdwg.mxu0
    %v564 = vcombine.low %v558, %v560
    %v566 = vunpack.c.l.s4 1983009808
    %v567 = vunpack.c.0.s8 %v566
    %v568 = vlaneseq
    %v569 = vshrl.u32 %v568, 7
    %v570 = vsub.s32 %v567, %v569
    %v571 = vrot.slane %v564, %v570
    %v573 = vadd.f32 %v472, %v571
    %v574 = vxor.u32 %v573, 2147483648
    %v575 = vmul.f32 %v574, 1.442695
    %v576 = vpow.pop %v575
    %v577 = vadd.f32 %v576, 1.0
    %v578 = vrcp.pop %v577
    %v579 = vmul.f32 1.0, %v578
    %v581 = vrot.slane %v573, 2
    %v583 = vtanh.pop %v581
    %584 = vrot.lane.b32.xlu0 %v573, 64
    %v585 = vpop.permute.xlu0 %584
    %v586 = vrot.slane %v585, 2
    %v588 = vxor.u32 %v586, 2147483648
    %v589 = vmul.f32 %v588, 1.442695
    %v590 = vpow.pop %v589
    %v591 = vadd.f32 %v590, 1.0
    %v592 = vrcp.pop %v591
    %v593 = vmul.f32 1.0, %v592
    %v594 = vmul.f32 %v579, %v449
    %v595 = vmul.f32 %v579, %v583
    %597 = vrot.lane.b32.xlu0 %v595, 64
    %v598 = vpop.permute.xlu0 %597
    %v600 = vadd.f32 %v594, %v598
    %v601 = vtanh.pop %v600
    %603 = vrot.lane.b32.xlu0 %v601, 64
    %v604 = vpop.permute.xlu0 %603
    %v606 = vmul.f32 %v593, %v604
    %s607 = scalar_lea.vmem [#allocation2], 6
    %608 = vst.msk [vmem:[%s607] sm:$0x3] %vm154, %v606
    %v611 = vunpack.c.l.s4 1983009808
    %v612 = vunpack.c.0.s8 %v611
    %v613 = vlaneseq
    %v614 = vshrl.u32 %v613, 7
    %v615 = vsub.s32 %v612, %v614
    %v616 = vrot.slane %v606, %v615
    %617 = vrot.lane.b32.xlu0 %v616, 96
    %v618 = vpop.permute.xlu0 %617
    %s620 = scalar_lea.vmem [#allocation4], 8
    %621 = vst.msk [vmem:[%s620] sm:$0x3] %vm154, %v618
    %s622 = scalar_lea.vmem %s0, 16
    %v623 = vld [vmem:[%s622] sm:$0xf]
    %v624 = vld [vmem:[%s1] sm:$0xff]
    %v625 = vld [vmem:[%s1 + $0x8] sm:$0xff]
    %v626 = vld [vmem:[%s1 + $0x10] sm:$0xff]
    %v627 = vld [vmem:[%s1 + $0x18] sm:$0xff]
    %v628 = vld [vmem:[%s1 + $0x20] sm:$0xff]
    %v629 = vld [vmem:[%s1 + $0x28] sm:$0xff]
    %v630 = vld [vmem:[%s1 + $0x30] sm:$0xff]
    %v631 = vld [vmem:[%s1 + $0x38] sm:$0xff]
    %v632 = vld [vmem:[%s1 + $0x40] sm:$0xff]
    %v633 = vld [vmem:[%s1 + $0x48] sm:$0xff]
    %v634 = vld [vmem:[%s1 + $0x50] sm:$0xff]
    %v635 = vld [vmem:[%s1 + $0x58] sm:$0xff]
    %v636 = vld [vmem:[%s1 + $0x60] sm:$0xff]
    %v637 = vld [vmem:[%s1 + $0x68] sm:$0xff]
    %v638 = vld [vmem:[%s1 + $0x70] sm:$0xff]
    %v639 = vld [vmem:[%s1 + $0x78] sm:$0xff]
    %v640 = vsel %vm34, %v606, 0
    %642 = vmatprep.subr.mxu0 0.0
    %643 = vmatpush1.msra.mxu0 0.0
    %644 = vmatprep.subr.mxu0 0.0
    %645 = vmatpush1.msra.mxu0 0.0
    %646 = vmatprep.subr.mxu0 0.0
    %647 = vmatpush1.msra.mxu0 0.0
    %648 = vmatprep.subr.mxu0 0.0
    %649 = vmatpush1.msra.mxu0 0.0
    %650 = vmatprep.subr.mxu0 0.0
    %651 = vmatpush1.msra.mxu0 0.0
    %652 = vmatprep.subr.mxu0 0.0
    %653 = vmatpush1.msra.mxu0 0.0
    %654 = vmatprep.subr.mxu0 0.0
    %655 = vmatpush1.msra.mxu0 0.0
    %656 = vmatprep.subr.mxu0 0.0
    %657 = vmatpush1.msra.mxu0 0.0
    %658 = vmatprep.subr.mxu0 %v639
    %659 = vmatpush1.msra.mxu0 %v638
    %660 = vmatprep.subr.mxu0 %v637
    %661 = vmatpush1.msra.mxu0 %v636
    %662 = vmatprep.subr.mxu0 %v635
    %663 = vmatpush1.msra.mxu0 %v634
    %664 = vmatprep.subr.mxu0 %v633
    %665 = vmatpush1.msra.mxu0 %v632
    %666 = vmatprep.subr.mxu0 %v631
    %667 = vmatpush1.msra.mxu0 %v630
    %668 = vmatprep.subr.mxu0 %v629
    %669 = vmatpush1.msra.mxu0 %v628
    %670 = vmatprep.subr.mxu0 %v627
    %671 = vmatpush1.msra.mxu0 %v626
    %672 = vmatprep.subr.mxu0 %v625
    %673 = vmatpush1.msra.mxu0 %v624
    %674 = vmatprep.subr.mxu0 0.0
    %675 = vmatpush2.msra.mxu0 0.0
    %676 = vmatprep.subr.mxu0 0.0
    %677 = vmatpush2.msra.mxu0 0.0
    %678 = vmatprep.subr.mxu0 0.0
    %679 = vmatpush2.msra.mxu0 0.0
    %680 = vmatprep.subr.mxu0 0.0
    %681 = vmatpush2.msra.mxu0 0.0
    %682 = vmatprep.subr.mxu0 0.0
    %683 = vmatpush2.msra.mxu0 0.0
    %684 = vmatprep.subr.mxu0 0.0
    %685 = vmatpush2.msra.mxu0 0.0
    %686 = vmatprep.subr.mxu0 0.0
    %687 = vmatpush2.msra.mxu0 0.0
    %688 = vmatprep.subr.mxu0 0.0
    %689 = vmatpush2.msra.mxu0 0.0
    %690 = vmatprep.subr.mxu0 0.0
    %691 = vmatpush2.msra.mxu0 0.0
    %692 = vmatprep.subr.mxu0 0.0
    %693 = vmatpush2.msra.mxu0 0.0
    %694 = vmatprep.subr.mxu0 0.0
    %695 = vmatpush2.msra.mxu0 0.0
    %696 = vmatprep.subr.mxu0 0.0
    %697 = vmatpush2.msra.mxu0 0.0
    %698 = vmatprep.subr.mxu0 0.0
    %699 = vmatpush2.msra.mxu0 0.0
    %700 = vmatprep.subr.mxu0 0.0
    %701 = vmatpush2.msra.mxu0 0.0
    %702 = vmatprep.subr.mxu0 0.0
    %703 = vmatpush2.msra.mxu0 0.0
    %704 = vmatprep.subr.mxu0 0.0
    %705 = vmatpush2.msra.mxu0 0.0
    %706 = vmatprep.mubr.f32.mxu0 0.0
    %707 = vmatmul.mubr.f32.gmra.mxu0 %v640
    %v708 = vpop.f32.mrf.mxu0
    %v709 = vadd.f32 0.0, %v708
    %v710 = vpop.f32.mrf.mxu0
    %v711 = vadd.f32 0.0, %v710
    %712 = vdwg.mxu0
    %v715 = vcombine.low %v709, %v711
    %v717 = vunpack.c.l.s4 1983009808
    %v718 = vunpack.c.0.s8 %v717
    %v719 = vlaneseq
    %v720 = vshrl.u32 %v719, 7
    %v721 = vsub.s32 %v718, %v720
    %v722 = vrot.slane %v715, %v721
    %v724 = vadd.f32 %v623, %v722
    %v725 = vxor.u32 %v724, 2147483648
    %v726 = vmul.f32 %v725, 1.442695
    %v727 = vpow.pop %v726
    %v728 = vadd.f32 %v727, 1.0
    %v729 = vrcp.pop %v728
    %v730 = vmul.f32 1.0, %v729
    %v732 = vrot.slane %v724, 2
    %v734 = vtanh.pop %v732
    %735 = vrot.lane.b32.xlu0 %v724, 64
    %v736 = vpop.permute.xlu0 %735
    %v737 = vrot.slane %v736, 2
    %v739 = vxor.u32 %v737, 2147483648
    %v740 = vmul.f32 %v739, 1.442695
    %v741 = vpow.pop %v740
    %v742 = vadd.f32 %v741, 1.0
    %v743 = vrcp.pop %v742
    %v744 = vmul.f32 1.0, %v743
    %v745 = vmul.f32 %v730, %v600
    %v746 = vmul.f32 %v730, %v734
    %748 = vrot.lane.b32.xlu0 %v746, 64
    %v749 = vpop.permute.xlu0 %748
    %v751 = vadd.f32 %v745, %v749
    %v752 = vtanh.pop %v751
    %754 = vrot.lane.b32.xlu0 %v752, 64
    %v755 = vpop.permute.xlu0 %754
    %v757 = vmul.f32 %v744, %v755
    %s758 = scalar_lea.vmem [#allocation2], 8
    %759 = vst.msk [vmem:[%s758] sm:$0x3] %vm154, %v757
    %v762 = vunpack.c.l.s4 1983009808
    %v763 = vunpack.c.0.s8 %v762
    %v764 = vlaneseq
    %v765 = vshrl.u32 %v764, 7
    %v766 = vsub.s32 %v763, %v765
    %v767 = vrot.slane %v757, %v766
    %768 = vrot.lane.b32.xlu0 %v767, 96
    %v769 = vpop.permute.xlu0 %768
    %s771 = scalar_lea.vmem [#allocation4], 6
    %772 = vst.msk [vmem:[%s771] sm:$0x3] %vm154, %v769
    %s773 = scalar_lea.vmem %s0, 20
    %v774 = vld [vmem:[%s773] sm:$0xf]
    %v775 = vld [vmem:[%s1] sm:$0xff]
    %v776 = vld [vmem:[%s1 + $0x8] sm:$0xff]
    %v777 = vld [vmem:[%s1 + $0x10] sm:$0xff]
    %v778 = vld [vmem:[%s1 + $0x18] sm:$0xff]
    %v779 = vld [vmem:[%s1 + $0x20] sm:$0xff]
    %v780 = vld [vmem:[%s1 + $0x28] sm:$0xff]
    %v781 = vld [vmem:[%s1 + $0x30] sm:$0xff]
    %v782 = vld [vmem:[%s1 + $0x38] sm:$0xff]
    %v783 = vld [vmem:[%s1 + $0x40] sm:$0xff]
    %v784 = vld [vmem:[%s1 + $0x48] sm:$0xff]
    %v785 = vld [vmem:[%s1 + $0x50] sm:$0xff]
    %v786 = vld [vmem:[%s1 + $0x58] sm:$0xff]
    %v787 = vld [vmem:[%s1 + $0x60] sm:$0xff]
    %v788 = vld [vmem:[%s1 + $0x68] sm:$0xff]
    %v789 = vld [vmem:[%s1 + $0x70] sm:$0xff]
    %v790 = vld [vmem:[%s1 + $0x78] sm:$0xff]
    %v791 = vsel %vm34, %v757, 0
    %793 = vmatprep.subr.mxu0 0.0
    %794 = vmatpush1.msra.mxu0 0.0
    %795 = vmatprep.subr.mxu0 0.0
    %796 = vmatpush1.msra.mxu0 0.0
    %797 = vmatprep.subr.mxu0 0.0
    %798 = vmatpush1.msra.mxu0 0.0
    %799 = vmatprep.subr.mxu0 0.0
    %800 = vmatpush1.msra.mxu0 0.0
    %801 = vmatprep.subr.mxu0 0.0
    %802 = vmatpush1.msra.mxu0 0.0
    %803 = vmatprep.subr.mxu0 0.0
    %804 = vmatpush1.msra.mxu0 0.0
    %805 = vmatprep.subr.mxu0 0.0
    %806 = vmatpush1.msra.mxu0 0.0
    %807 = vmatprep.subr.mxu0 0.0
    %808 = vmatpush1.msra.mxu0 0.0
    %809 = vmatprep.subr.mxu0 %v790
    %810 = vmatpush1.msra.mxu0 %v789
    %811 = vmatprep.subr.mxu0 %v788
    %812 = vmatpush1.msra.mxu0 %v787
    %813 = vmatprep.subr.mxu0 %v786
    %814 = vmatpush1.msra.mxu0 %v785
    %815 = vmatprep.subr.mxu0 %v784
    %816 = vmatpush1.msra.mxu0 %v783
    %817 = vmatprep.subr.mxu0 %v782
    %818 = vmatpush1.msra.mxu0 %v781
    %819 = vmatprep.subr.mxu0 %v780
    %820 = vmatpush1.msra.mxu0 %v779
    %821 = vmatprep.subr.mxu0 %v778
    %822 = vmatpush1.msra.mxu0 %v777
    %823 = vmatprep.subr.mxu0 %v776
    %824 = vmatpush1.msra.mxu0 %v775
    %825 = vmatprep.subr.mxu0 0.0
    %826 = vmatpush2.msra.mxu0 0.0
    %827 = vmatprep.subr.mxu0 0.0
    %828 = vmatpush2.msra.mxu0 0.0
    %829 = vmatprep.subr.mxu0 0.0
    %830 = vmatpush2.msra.mxu0 0.0
    %831 = vmatprep.subr.mxu0 0.0
    %832 = vmatpush2.msra.mxu0 0.0
    %833 = vmatprep.subr.mxu0 0.0
    %834 = vmatpush2.msra.mxu0 0.0
    %835 = vmatprep.subr.mxu0 0.0
    %836 = vmatpush2.msra.mxu0 0.0
    %837 = vmatprep.subr.mxu0 0.0
    %838 = vmatpush2.msra.mxu0 0.0
    %839 = vmatprep.subr.mxu0 0.0
    %840 = vmatpush2.msra.mxu0 0.0
    %841 = vmatprep.subr.mxu0 0.0
    %842 = vmatpush2.msra.mxu0 0.0
    %843 = vmatprep.subr.mxu0 0.0
    %844 = vmatpush2.msra.mxu0 0.0
    %845 = vmatprep.subr.mxu0 0.0
    %846 = vmatpush2.msra.mxu0 0.0
    %847 = vmatprep.subr.mxu0 0.0
    %848 = vmatpush2.msra.mxu0 0.0
    %849 = vmatprep.subr.mxu0 0.0
    %850 = vmatpush2.msra.mxu0 0.0
    %851 = vmatprep.subr.mxu0 0.0
    %852 = vmatpush2.msra.mxu0 0.0
    %853 = vmatprep.subr.mxu0 0.0
    %854 = vmatpush2.msra.mxu0 0.0
    %855 = vmatprep.subr.mxu0 0.0
    %856 = vmatpush2.msra.mxu0 0.0
    %857 = vmatprep.mubr.f32.mxu0 0.0
    %858 = vmatmul.mubr.f32.gmra.mxu0 %v791
    %v859 = vpop.f32.mrf.mxu0
    %v860 = vadd.f32 0.0, %v859
    %v861 = vpop.f32.mrf.mxu0
    %v862 = vadd.f32 0.0, %v861
    %863 = vdwg.mxu0
    %v866 = vcombine.low %v860, %v862
    %v868 = vunpack.c.l.s4 1983009808
    %v869 = vunpack.c.0.s8 %v868
    %v870 = vlaneseq
    %v871 = vshrl.u32 %v870, 7
    %v872 = vsub.s32 %v869, %v871
    %v873 = vrot.slane %v866, %v872
    %v875 = vadd.f32 %v774, %v873
    %v876 = vxor.u32 %v875, 2147483648
    %v877 = vmul.f32 %v876, 1.442695
    %v878 = vpow.pop %v877
    %v879 = vadd.f32 %v878, 1.0
    %v880 = vrcp.pop %v879
    %v881 = vmul.f32 1.0, %v880
    %v883 = vrot.slane %v875, 2
    %v885 = vtanh.pop %v883
    %886 = vrot.lane.b32.xlu0 %v875, 64
    %v887 = vpop.permute.xlu0 %886
    %v888 = vrot.slane %v887, 2
    %v890 = vxor.u32 %v888, 2147483648
    %v891 = vmul.f32 %v890, 1.442695
    %v892 = vpow.pop %v891
    %v893 = vadd.f32 %v892, 1.0
    %v894 = vrcp.pop %v893
    %v895 = vmul.f32 1.0, %v894
    %v896 = vmul.f32 %v881, %v751
    %v897 = vmul.f32 %v881, %v885
    %899 = vrot.lane.b32.xlu0 %v897, 64
    %v900 = vpop.permute.xlu0 %899
    %v902 = vadd.f32 %v896, %v900
    %v903 = vtanh.pop %v902
    %905 = vrot.lane.b32.xlu0 %v903, 64
    %v906 = vpop.permute.xlu0 %905
    %v908 = vmul.f32 %v895, %v906
    %s909 = scalar_lea.vmem [#allocation2], 10
    %910 = vst.msk [vmem:[%s909] sm:$0x3] %vm154, %v908
    %v913 = vunpack.c.l.s4 1983009808
    %v914 = vunpack.c.0.s8 %v913
    %v915 = vlaneseq
    %v916 = vshrl.u32 %v915, 7
    %v917 = vsub.s32 %v914, %v916
    %v918 = vrot.slane %v908, %v917
    %919 = vrot.lane.b32.xlu0 %v918, 96
    %v920 = vpop.permute.xlu0 %919
    %s922 = scalar_lea.vmem [#allocation4], 4
    %923 = vst.msk [vmem:[%s922] sm:$0x3] %vm154, %v920
    %s924 = scalar_lea.vmem %s0, 24
    %v925 = vld [vmem:[%s924] sm:$0xf]
    %v926 = vld [vmem:[%s1] sm:$0xff]
    %v927 = vld [vmem:[%s1 + $0x8] sm:$0xff]
    %v928 = vld [vmem:[%s1 + $0x10] sm:$0xff]
    %v929 = vld [vmem:[%s1 + $0x18] sm:$0xff]
    %v930 = vld [vmem:[%s1 + $0x20] sm:$0xff]
    %v931 = vld [vmem:[%s1 + $0x28] sm:$0xff]
    %v932 = vld [vmem:[%s1 + $0x30] sm:$0xff]
    %v933 = vld [vmem:[%s1 + $0x38] sm:$0xff]
    %v934 = vld [vmem:[%s1 + $0x40] sm:$0xff]
    %v935 = vld [vmem:[%s1 + $0x48] sm:$0xff]
    %v936 = vld [vmem:[%s1 + $0x50] sm:$0xff]
    %v937 = vld [vmem:[%s1 + $0x58] sm:$0xff]
    %v938 = vld [vmem:[%s1 + $0x60] sm:$0xff]
    %v939 = vld [vmem:[%s1 + $0x68] sm:$0xff]
    %v940 = vld [vmem:[%s1 + $0x70] sm:$0xff]
    %v941 = vld [vmem:[%s1 + $0x78] sm:$0xff]
    %v942 = vsel %vm34, %v908, 0
    %944 = vmatprep.subr.mxu0 0.0
    %945 = vmatpush1.msra.mxu0 0.0
    %946 = vmatprep.subr.mxu0 0.0
    %947 = vmatpush1.msra.mxu0 0.0
    %948 = vmatprep.subr.mxu0 0.0
    %949 = vmatpush1.msra.mxu0 0.0
    %950 = vmatprep.subr.mxu0 0.0
    %951 = vmatpush1.msra.mxu0 0.0
    %952 = vmatprep.subr.mxu0 0.0
    %953 = vmatpush1.msra.mxu0 0.0
    %954 = vmatprep.subr.mxu0 0.0
    %955 = vmatpush1.msra.mxu0 0.0
    %956 = vmatprep.subr.mxu0 0.0
    %957 = vmatpush1.msra.mxu0 0.0
    %958 = vmatprep.subr.mxu0 0.0
    %959 = vmatpush1.msra.mxu0 0.0
    %960 = vmatprep.subr.mxu0 %v941
    %961 = vmatpush1.msra.mxu0 %v940
    %962 = vmatprep.subr.mxu0 %v939
    %963 = vmatpush1.msra.mxu0 %v938
    %964 = vmatprep.subr.mxu0 %v937
    %965 = vmatpush1.msra.mxu0 %v936
    %966 = vmatprep.subr.mxu0 %v935
    %967 = vmatpush1.msra.mxu0 %v934
    %968 = vmatprep.subr.mxu0 %v933
    %969 = vmatpush1.msra.mxu0 %v932
    %970 = vmatprep.subr.mxu0 %v931
    %971 = vmatpush1.msra.mxu0 %v930
    %972 = vmatprep.subr.mxu0 %v929
    %973 = vmatpush1.msra.mxu0 %v928
    %974 = vmatprep.subr.mxu0 %v927
    %975 = vmatpush1.msra.mxu0 %v926
    %976 = vmatprep.subr.mxu0 0.0
    %977 = vmatpush2.msra.mxu0 0.0
    %978 = vmatprep.subr.mxu0 0.0
    %979 = vmatpush2.msra.mxu0 0.0
    %980 = vmatprep.subr.mxu0 0.0
    %981 = vmatpush2.msra.mxu0 0.0
    %982 = vmatprep.subr.mxu0 0.0
    %983 = vmatpush2.msra.mxu0 0.0
    %984 = vmatprep.subr.mxu0 0.0
    %985 = vmatpush2.msra.mxu0 0.0
    %986 = vmatprep.subr.mxu0 0.0
    %987 = vmatpush2.msra.mxu0 0.0
    %988 = vmatprep.subr.mxu0 0.0
    %989 = vmatpush2.msra.mxu0 0.0
    %990 = vmatprep.subr.mxu0 0.0
    %991 = vmatpush2.msra.mxu0 0.0
    %992 = vmatprep.subr.mxu0 0.0
    %993 = vmatpush2.msra.mxu0 0.0
    %994 = vmatprep.subr.mxu0 0.0
    %995 = vmatpush2.msra.mxu0 0.0
    %996 = vmatprep.subr.mxu0 0.0
    %997 = vmatpush2.msra.mxu0 0.0
    %998 = vmatprep.subr.mxu0 0.0
    %999 = vmatpush2.msra.mxu0 0.0
    %1000 = vmatprep.subr.mxu0 0.0
    %1001 = vmatpush2.msra.mxu0 0.0
    %1002 = vmatprep.subr.mxu0 0.0
    %1003 = vmatpush2.msra.mxu0 0.0
    %1004 = vmatprep.subr.mxu0 0.0
    %1005 = vmatpush2.msra.mxu0 0.0
    %1006 = vmatprep.subr.mxu0 0.0
    %1007 = vmatpush2.msra.mxu0 0.0
    %1008 = vmatprep.mubr.f32.mxu0 0.0
    %1009 = vmatmul.mubr.f32.gmra.mxu0 %v942
    %v1010 = vpop.f32.mrf.mxu0
    %v1011 = vadd.f32 0.0, %v1010
    %v1012 = vpop.f32.mrf.mxu0
    %v1013 = vadd.f32 0.0, %v1012
    %1014 = vdwg.mxu0
    %v1017 = vcombine.low %v1011, %v1013
    %v1019 = vunpack.c.l.s4 1983009808
    %v1020 = vunpack.c.0.s8 %v1019
    %v1021 = vlaneseq
    %v1022 = vshrl.u32 %v1021, 7
    %v1023 = vsub.s32 %v1020, %v1022
    %v1024 = vrot.slane %v1017, %v1023
    %v1026 = vadd.f32 %v925, %v1024
    %v1027 = vxor.u32 %v1026, 2147483648
    %v1028 = vmul.f32 %v1027, 1.442695
    %v1029 = vpow.pop %v1028
    %v1030 = vadd.f32 %v1029, 1.0
    %v1031 = vrcp.pop %v1030
    %v1032 = vmul.f32 1.0, %v1031
    %v1034 = vrot.slane %v1026, 2
    %v1036 = vtanh.pop %v1034
    %1037 = vrot.lane.b32.xlu0 %v1026, 64
    %v1038 = vpop.permute.xlu0 %1037
    %v1039 = vrot.slane %v1038, 2
    %v1041 = vxor.u32 %v1039, 2147483648
    %v1042 = vmul.f32 %v1041, 1.442695
    %v1043 = vpow.pop %v1042
    %v1044 = vadd.f32 %v1043, 1.0
    %v1045 = vrcp.pop %v1044
    %v1046 = vmul.f32 1.0, %v1045
    %v1047 = vmul.f32 %v1032, %v902
    %v1048 = vmul.f32 %v1032, %v1036
    %1050 = vrot.lane.b32.xlu0 %v1048, 64
    %v1051 = vpop.permute.xlu0 %1050
    %v1053 = vadd.f32 %v1047, %v1051
    %v1054 = vtanh.pop %v1053
    %1056 = vrot.lane.b32.xlu0 %v1054, 64
    %v1057 = vpop.permute.xlu0 %1056
    %v1059 = vmul.f32 %v1046, %v1057
    %s1060 = scalar_lea.vmem [#allocation2], 12
    %1061 = vst.msk [vmem:[%s1060] sm:$0x3] %vm154, %v1059
    %v1064 = vunpack.c.l.s4 1983009808
    %v1065 = vunpack.c.0.s8 %v1064
    %v1066 = vlaneseq
    %v1067 = vshrl.u32 %v1066, 7
    %v1068 = vsub.s32 %v1065, %v1067
    %v1069 = vrot.slane %v1059, %v1068
    %1070 = vrot.lane.b32.xlu0 %v1069, 96
    %v1071 = vpop.permute.xlu0 %1070
    %s1073 = scalar_lea.vmem [#allocation4], 2
    %1074 = vst.msk [vmem:[%s1073] sm:$0x3] %vm154, %v1071
    %s1075 = scalar_lea.vmem %s0, 28
    %v1076 = vld [vmem:[%s1075] sm:$0xf]
    %v1077 = vld [vmem:[%s1] sm:$0xff]
    %v1078 = vld [vmem:[%s1 + $0x8] sm:$0xff]
    %v1079 = vld [vmem:[%s1 + $0x10] sm:$0xff]
    %v1080 = vld [vmem:[%s1 + $0x18] sm:$0xff]
    %v1081 = vld [vmem:[%s1 + $0x20] sm:$0xff]
    %v1082 = vld [vmem:[%s1 + $0x28] sm:$0xff]
    %v1083 = vld [vmem:[%s1 + $0x30] sm:$0xff]
    %v1084 = vld [vmem:[%s1 + $0x38] sm:$0xff]
    %v1085 = vld [vmem:[%s1 + $0x40] sm:$0xff]
    %v1086 = vld [vmem:[%s1 + $0x48] sm:$0xff]
    %v1087 = vld [vmem:[%s1 + $0x50] sm:$0xff]
    %v1088 = vld [vmem:[%s1 + $0x58] sm:$0xff]
    %v1089 = vld [vmem:[%s1 + $0x60] sm:$0xff]
    %v1090 = vld [vmem:[%s1 + $0x68] sm:$0xff]
    %v1091 = vld [vmem:[%s1 + $0x70] sm:$0xff]
    %v1092 = vld [vmem:[%s1 + $0x78] sm:$0xff]
    %v1093 = vsel %vm34, %v1059, 0
    %1095 = vmatprep.subr.mxu0 0.0
    %1096 = vmatpush1.msra.mxu0 0.0
    %1097 = vmatprep.subr.mxu0 0.0
    %1098 = vmatpush1.msra.mxu0 0.0
    %1099 = vmatprep.subr.mxu0 0.0
    %1100 = vmatpush1.msra.mxu0 0.0
    %1101 = vmatprep.subr.mxu0 0.0
    %1102 = vmatpush1.msra.mxu0 0.0
    %1103 = vmatprep.subr.mxu0 0.0
    %1104 = vmatpush1.msra.mxu0 0.0
    %1105 = vmatprep.subr.mxu0 0.0
    %1106 = vmatpush1.msra.mxu0 0.0
    %1107 = vmatprep.subr.mxu0 0.0
    %1108 = vmatpush1.msra.mxu0 0.0
    %1109 = vmatprep.subr.mxu0 0.0
    %1110 = vmatpush1.msra.mxu0 0.0
    %1111 = vmatprep.subr.mxu0 %v1092
    %1112 = vmatpush1.msra.mxu0 %v1091
    %1113 = vmatprep.subr.mxu0 %v1090
    %1114 = vmatpush1.msra.mxu0 %v1089
    %1115 = vmatprep.subr.mxu0 %v1088
    %1116 = vmatpush1.msra.mxu0 %v1087
    %1117 = vmatprep.subr.mxu0 %v1086
    %1118 = vmatpush1.msra.mxu0 %v1085
    %1119 = vmatprep.subr.mxu0 %v1084
    %1120 = vmatpush1.msra.mxu0 %v1083
    %1121 = vmatprep.subr.mxu0 %v1082
    %1122 = vmatpush1.msra.mxu0 %v1081
    %1123 = vmatprep.subr.mxu0 %v1080
    %1124 = vmatpush1.msra.mxu0 %v1079
    %1125 = vmatprep.subr.mxu0 %v1078
    %1126 = vmatpush1.msra.mxu0 %v1077
    %1127 = vmatprep.subr.mxu0 0.0
    %1128 = vmatpush2.msra.mxu0 0.0
    %1129 = vmatprep.subr.mxu0 0.0
    %1130 = vmatpush2.msra.mxu0 0.0
    %1131 = vmatprep.subr.mxu0 0.0
    %1132 = vmatpush2.msra.mxu0 0.0
    %1133 = vmatprep.subr.mxu0 0.0
    %1134 = vmatpush2.msra.mxu0 0.0
    %1135 = vmatprep.subr.mxu0 0.0
    %1136 = vmatpush2.msra.mxu0 0.0
    %1137 = vmatprep.subr.mxu0 0.0
    %1138 = vmatpush2.msra.mxu0 0.0
    %1139 = vmatprep.subr.mxu0 0.0
    %1140 = vmatpush2.msra.mxu0 0.0
    %1141 = vmatprep.subr.mxu0 0.0
    %1142 = vmatpush2.msra.mxu0 0.0
    %1143 = vmatprep.subr.mxu0 0.0
    %1144 = vmatpush2.msra.mxu0 0.0
    %1145 = vmatprep.subr.mxu0 0.0
    %1146 = vmatpush2.msra.mxu0 0.0
    %1147 = vmatprep.subr.mxu0 0.0
    %1148 = vmatpush2.msra.mxu0 0.0
    %1149 = vmatprep.subr.mxu0 0.0
    %1150 = vmatpush2.msra.mxu0 0.0
    %1151 = vmatprep.subr.mxu0 0.0
    %1152 = vmatpush2.msra.mxu0 0.0
    %1153 = vmatprep.subr.mxu0 0.0
    %1154 = vmatpush2.msra.mxu0 0.0
    %1155 = vmatprep.subr.mxu0 0.0
    %1156 = vmatpush2.msra.mxu0 0.0
    %1157 = vmatprep.subr.mxu0 0.0
    %1158 = vmatpush2.msra.mxu0 0.0
    %1159 = vmatprep.mubr.f32.mxu0 0.0
    %1160 = vmatmul.mubr.f32.gmra.mxu0 %v1093
    %v1161 = vpop.f32.mrf.mxu0
    %v1162 = vadd.f32 0.0, %v1161
    %v1163 = vpop.f32.mrf.mxu0
    %v1164 = vadd.f32 0.0, %v1163
    %1165 = vdwg.mxu0
    %v1168 = vcombine.low %v1162, %v1164
    %v1170 = vunpack.c.l.s4 1983009808
    %v1171 = vunpack.c.0.s8 %v1170
    %v1172 = vlaneseq
    %v1173 = vshrl.u32 %v1172, 7
    %v1174 = vsub.s32 %v1171, %v1173
    %v1175 = vrot.slane %v1168, %v1174
    %v1177 = vadd.f32 %v1076, %v1175
    %v1178 = vxor.u32 %v1177, 2147483648
    %v1179 = vmul.f32 %v1178, 1.442695
    %v1180 = vpow.pop %v1179
    %v1181 = vadd.f32 %v1180, 1.0
    %v1182 = vrcp.pop %v1181
    %v1183 = vmul.f32 1.0, %v1182
    %v1185 = vrot.slane %v1177, 2
    %v1187 = vtanh.pop %v1185
    %1188 = vrot.lane.b32.xlu0 %v1177, 64
    %v1189 = vpop.permute.xlu0 %1188
    %v1190 = vrot.slane %v1189, 2
    %v1192 = vxor.u32 %v1190, 2147483648
    %v1193 = vmul.f32 %v1192, 1.442695
    %v1194 = vpow.pop %v1193
    %v1195 = vadd.f32 %v1194, 1.0
    %v1196 = vrcp.pop %v1195
    %v1197 = vmul.f32 1.0, %v1196
    %v1198 = vmul.f32 %v1183, %v1053
    %v1199 = vmul.f32 %v1183, %v1187
    %1201 = vrot.lane.b32.xlu0 %v1199, 64
    %v1202 = vpop.permute.xlu0 %1201
    %v1204 = vadd.f32 %v1198, %v1202
    %v1205 = vtanh.pop %v1204
    %1207 = vrot.lane.b32.xlu0 %v1205, 64
    %v1208 = vpop.permute.xlu0 %1207
    %v1210 = vmul.f32 %v1197, %v1208
    %s1211 = scalar_lea.vmem [#allocation2], 14
    %1212 = vst.msk [vmem:[%s1211] sm:$0x3] %vm154, %v1210
    %v1215 = vunpack.c.l.s4 1983009808
    %v1216 = vunpack.c.0.s8 %v1215
    %v1217 = vlaneseq
    %v1218 = vshrl.u32 %v1217, 7
    %v1219 = vsub.s32 %v1216, %v1218
    %v1220 = vrot.slane %v1210, %v1219
    %1221 = vrot.lane.b32.xlu0 %v1220, 96
    %v1222 = vpop.permute.xlu0 %1221
    %1224 = vst.msk [vmem:[#allocation4] sm:$0x3] %vm154, %v1222
    %vm1225 = vcmask 517120
    %1226 = vst.msk [vmem:[%s4] sm:$0x3] %vm1225, %v1210
    %v1229 = vunpack.c.l.s4 1983009808
    %v1230 = vunpack.c.0.s8 %v1229
    %v1231 = vlaneseq
    %v1232 = vshrl.u32 %v1231, 7
    %v1233 = vsub.s32 %v1230, %v1232
    %v1234 = vrot.slane %v1204, %v1233
    %1235 = vrot.lane.b32.xlu0 %v1234, 64
    %v1236 = vpop.permute.xlu0 %1235
    %1238 = vst.msk [vmem:[%s5] sm:$0x3] %vm1225, %v1236
    // Predicated region
    $region10: #{encoder_forward.3} parent=1 // pred_check
      _
    $region11: #{encoder_forward.3} parent=1 // pred_check_branch
      %1240 = sbr.rel (0) target = $region13
    $region12: #{encoder_forward.3} parent=1 // pred_region
      %s1242 = ssub.s32 256, 256
      %1243 = vsyncadd [#allocation3], %s1242
      %s1244 = sshll.u32 [#allocation2], 4
      %s1245 = int_to_ptr.vmem [resolvable:$true] %s1244
      %1250 = dma.vmem_to_hbm [thread:$0]  %s1245, 256, %s2, [#allocation3], 32, 32, 2
    $region13: #{encoder_forward.3} parent=1 // pred_fallthru
      _
    // Predicated region
    $region14: #{encoder_forward.3} parent=1 // pred_check
      _
    $region15: #{encoder_forward.3} parent=1 // pred_check_branch
      %1252 = sbr.rel (0) target = $region17
    $region16: #{encoder_forward.3} parent=1 // pred_region
      %s1254 = ssub.s32 256, 256
      %1255 = vsyncadd [#allocation5], %s1254
      %s1256 = sshll.u32 [#allocation4], 4
      %s1257 = int_to_ptr.vmem [resolvable:$true] %s1256
      %1262 = dma.vmem_to_hbm [thread:$0]  %s1257, 256, %s3, [#allocation5], 32, 32, 2
    $region17: #{encoder_forward.3} parent=1 // pred_fallthru
      _
    // Predicated region
    $region18: #{encoder_forward.3} parent=1 // pred_check
      _
    $region19: #{encoder_forward.3} parent=1 // pred_check_branch
      %1264 = sbr.rel (0) target = $region21
    $region20: #{encoder_forward.3} parent=1 // pred_region
      _
    $region21: #{encoder_forward.3} parent=1 // pred_fallthru
      _
    // Predicated region
    $region22: #{encoder_forward.3} parent=1 // pred_check
      _
    $region23: #{encoder_forward.3} parent=1 // pred_check_branch
      %1266 = sbr.rel (0) target = $region25
    $region24: #{encoder_forward.3} parent=1 // pred_region
      _
    $region25: #{encoder_forward.3} parent=1 // pred_fallthru
      _
    // Predicated region
    $region26: #{encoder_forward.3} parent=1 // pred_check
      _
    $region27: #{encoder_forward.3} parent=1 // pred_check_branch
      %1268 = sbr.rel (0) target = $region29
    $region28: #{encoder_forward.3} parent=1 // pred_region
      %1269 = dma.done [#allocation3], 256
    $region29: #{encoder_forward.3} parent=1 // pred_fallthru
      _
    // Predicated region
    $region30: #{encoder_forward.3} parent=1 // pred_check
      _
    $region31: #{encoder_forward.3} parent=1 // pred_check_branch
      %1271 = sbr.rel (0) target = $region33
    $region32: #{encoder_forward.3} parent=1 // pred_region
      %1272 = dma.done [#allocation5], 256
    $region33: #{encoder_forward.3} parent=1 // pred_fallthru
      _
    // Predicated region
    $region34: #{encoder_forward.3} parent=1 // pred_check
      _
    $region35: #{encoder_forward.3} parent=1 // pred_check_branch
      %1274 = sbr.rel (0) target = $region37
    $region36: #{encoder_forward.3} parent=1 // pred_region
      _
    $region37: #{encoder_forward.3} parent=1 // pred_fallthru
      _
    // Predicated region
    $region38: #{encoder_forward.3} parent=1 // pred_check
      _
    $region39: #{encoder_forward.3} parent=1 // pred_check_branch
      %1276 = sbr.rel (0) target = $region41
    $region40: #{encoder_forward.3} parent=1 // pred_region
      _
    $region41: #{encoder_forward.3} parent=1 // pred_fallthru
      _
    %1277 = vsyncpa [#allocation3], 1
    %1278 = vsyncpa [#allocation5], 1

// kernel: encoder_forward.2
$region0: #{encoder_forward.2}
  #allocation0 [shape = 'u32[]', space=smem, size = 0x4, offset = 0x4, fixed_abs, tag = 'smem constant byte address 0x4 - core index']
  #allocation1 [shape = 'u32[144,128]{1,0:T(1,128)}', space=vmem, size = 0x12000, scoped, tag = 'internal scratch']
  %s0 = inlined_call_operand.vmem [shape: f32[8,2,256], index: 0, kind: input, shape index: {}]
  %s1 = inlined_call_operand.vmem [shape: f32[64,256], index: 1, kind: input, shape index: {}]
  %s2 = inlined_call_operand.vmem [shape: f32[8,2,32], index: 2, kind: output, shape index: {0}]
  %s3 = inlined_call_operand.vmem [shape: f32[8,2,32], index: 3, kind: output, shape index: {1}]
  %s4 = inlined_call_operand.vmem [shape: f32[2,64], index: 4, kind: output, shape index: {2}]
  %s5 = inlined_call_operand.vmem [shape: f32[2,64], index: 5, kind: output, shape index: {3}]
  %6 = xla_tuple %s2, %s3, %s4, %s5
  %s7 = sld [smem:[#allocation0]]
  $region42: #{encoder_forward.2} parent=0
    _
  %s9 = ssub.s32 1, %s7
  %s10 = scalar_select 0, %s9, %s7
  // Predicated region
  $region2: #{encoder_forward.2} parent=0 // pred_check
    _
  $region3: #{encoder_forward.2} parent=0 // pred_check_branch
    %12 = sbr.rel (0) target = $region5
  $region4: #{encoder_forward.2} parent=0 // pred_region
    _
  $region5: #{encoder_forward.2} parent=0 // pred_fallthru
    _
  // Predicated region
  $region6: #{encoder_forward.2} parent=0 // pred_check
    _
  $region7: #{encoder_forward.2} parent=0 // pred_check_branch
    %14 = sbr.rel (0) target = $region9
  $region8: #{encoder_forward.2} parent=0 // pred_region
    _
  $region9: #{encoder_forward.2} parent=0 // pred_fallthru
    _
  %v15 = vld [vmem:[%s0] sm:$0xf]
  %v16 = vld [vmem:[%s1] sm:$0xff]
  %v17 = vld [vmem:[%s1 + $0x8] sm:$0xff]
  %v18 = vld [vmem:[%s1 + $0x10] sm:$0xff]
  %v19 = vld [vmem:[%s1 + $0x18] sm:$0xff]
  %v20 = vld [vmem:[%s1 + $0x20] sm:$0xff]
  %v21 = vld [vmem:[%s1 + $0x28] sm:$0xff]
  %v22 = vld [vmem:[%s1 + $0x30] sm:$0xff]
  %v23 = vld [vmem:[%s1 + $0x38] sm:$0xff]
  %v24 = vld [vmem:[%s1 + $0x40] sm:$0xff]
  %v25 = vld [vmem:[%s1 + $0x48] sm:$0xff]
  %v26 = vld [vmem:[%s1 + $0x50] sm:$0xff]
  %v27 = vld [vmem:[%s1 + $0x58] sm:$0xff]
  %v28 = vld [vmem:[%s1 + $0x60] sm:$0xff]
  %v29 = vld [vmem:[%s1 + $0x68] sm:$0xff]
  %v30 = vld [vmem:[%s1 + $0x70] sm:$0xff]
  %v31 = vld [vmem:[%s1 + $0x78] sm:$0xff]
  %vm32 = vcmask 523264
  %v34 = vsel %vm32, 0.0, 0
  %36 = vmatprep.subr.mxu0 0.0
  %37 = vmatpush1.msra.mxu0 0.0
  %38 = vmatprep.subr.mxu0 0.0
  %39 = vmatpush1.msra.mxu0 0.0
  %40 = vmatprep.subr.mxu0 0.0
  %41 = vmatpush1.msra.mxu0 0.0
  %42 = vmatprep.subr.mxu0 0.0
  %43 = vmatpush1.msra.mxu0 0.0
  %44 = vmatprep.subr.mxu0 0.0
  %45 = vmatpush1.msra.mxu0 0.0
  %46 = vmatprep.subr.mxu0 0.0
  %47 = vmatpush1.msra.mxu0 0.0
  %48 = vmatprep.subr.mxu0 0.0
  %49 = vmatpush1.msra.mxu0 0.0
  %50 = vmatprep.subr.mxu0 0.0
  %51 = vmatpush1.msra.mxu0 0.0
  %52 = vmatprep.subr.mxu0 %v31
  %53 = vmatpush1.msra.mxu0 %v30
  %54 = vmatprep.subr.mxu0 %v29
  %55 = vmatpush1.msra.mxu0 %v28
  %56 = vmatprep.subr.mxu0 %v27
  %57 = vmatpush1.msra.mxu0 %v26
  %58 = vmatprep.subr.mxu0 %v25
  %59 = vmatpush1.msra.mxu0 %v24
  %60 = vmatprep.subr.mxu0 %v23
  %61 = vmatpush1.msra.mxu0 %v22
  %62 = vmatprep.subr.mxu0 %v21
  %63 = vmatpush1.msra.mxu0 %v20
  %64 = vmatprep.subr.mxu0 %v19
  %65 = vmatpush1.msra.mxu0 %v18
  %66 = vmatprep.subr.mxu0 %v17
  %67 = vmatpush1.msra.mxu0 %v16
  %68 = vmatprep.subr.mxu0 0.0
  %69 = vmatpush2.msra.mxu0 0.0
  %70 = vmatprep.subr.mxu0 0.0
  %71 = vmatpush2.msra.mxu0 0.0
  %72 = vmatprep.subr.mxu0 0.0
  %73 = vmatpush2.msra.mxu0 0.0
  %74 = vmatprep.subr.mxu0 0.0
  %75 = vmatpush2.msra.mxu0 0.0
  %76 = vmatprep.subr.mxu0 0.0
  %77 = vmatpush2.msra.mxu0 0.0
  %78 = vmatprep.subr.mxu0 0.0
  %79 = vmatpush2.msra.mxu0 0.0
  %80 = vmatprep.subr.mxu0 0.0
  %81 = vmatpush2.msra.mxu0 0.0
  %82 = vmatprep.subr.mxu0 0.0
  %83 = vmatpush2.msra.mxu0 0.0
  %84 = vmatprep.subr.mxu0 0.0
  %85 = vmatpush2.msra.mxu0 0.0
  %86 = vmatprep.subr.mxu0 0.0
  %87 = vmatpush2.msra.mxu0 0.0
  %88 = vmatprep.subr.mxu0 0.0
  %89 = vmatpush2.msra.mxu0 0.0
  %90 = vmatprep.subr.mxu0 0.0
  %91 = vmatpush2.msra.mxu0 0.0
  %92 = vmatprep.subr.mxu0 0.0
  %93 = vmatpush2.msra.mxu0 0.0
  %94 = vmatprep.subr.mxu0 0.0
  %95 = vmatpush2.msra.mxu0 0.0
  %96 = vmatprep.subr.mxu0 0.0
  %97 = vmatpush2.msra.mxu0 0.0
  %98 = vmatprep.subr.mxu0 0.0
  %99 = vmatpush2.msra.mxu0 0.0
  %100 = vmatprep.mubr.f32.mxu0 0.0
  %101 = vmatmul.mubr.f32.gmra.mxu0 %v34
  %v102 = vpop.f32.mrf.mxu0
  %v103 = vadd.f32 0.0, %v102
  %v104 = vpop.f32.mrf.mxu0
  %v105 = vadd.f32 0.0, %v104
  %106 = vdwg.mxu0
  %v109 = vcombine.low %v103, %v105
  %v111 = vunpack.c.l.s4 1983009808
  %v112 = vunpack.c.0.s8 %v111
  %v113 = vlaneseq
  %v114 = vshrl.u32 %v113, 7
  %v115 = vsub.s32 %v112, %v114
  %v116 = vrot.slane %v109, %v115
  %v118 = vadd.f32 %v15, %v116
  %v119 = vxor.u32 %v118, 2147483648
  %v120 = vmul.f32 %v119, 1.442695
  %v121 = vpow.pop %v120
  %v122 = vadd.f32 %v121, 1.0
  %v123 = vrcp.pop %v122
  %v124 = vmul.f32 1.0, %v123
  %v126 = vrot.slane %v118, 2
  %v128 = vtanh.pop %v126
  %129 = vrot.lane.b32.xlu0 %v118, 64
  %v130 = vpop.permute.xlu0 %129
  %v131 = vrot.slane %v130, 2
  %v133 = vxor.u32 %v131, 2147483648
  %v134 = vmul.f32 %v133, 1.442695
  %v135 = vpow.pop %v134
  %v136 = vadd.f32 %v135, 1.0
  %v137 = vrcp.pop %v136
  %v138 = vmul.f32 1.0, %v137
  %v139 = vmul.f32 %v124, 0.0
  %v140 = vmul.f32 %v124, %v128
  %142 = vrot.lane.b32.xlu0 %v140, 64
  %v143 = vpop.permute.xlu0 %142
  %v145 = vadd.f32 %v139, %v143
  %v146 = vtanh.pop %v145
  %148 = vrot.lane.b32.xlu0 %v146, 64
  %v149 = vpop.permute.xlu0 %148
  %v151 = vmul.f32 %v138, %v149
  %vm152 = vcmask 254976
  %153 = vst.msk [vmem:[%s2] sm:$0x3] %vm152, %v151
  %v156 = vunpack.c.l.s4 1983009808
  %v157 = vunpack.c.0.s8 %v156
  %v158 = vlaneseq
  %v159 = vshrl.u32 %v158, 7
  %v160 = vsub.s32 %v157, %v159
  %v161 = vrot.slane %v151, %v160
  %162 = vrot.lane.b32.xlu0 %v161, 96
  %v163 = vpop.permute.xlu0 %162
  %s165 = scalar_lea.vmem %s3, 14
  %166 = vst.msk [vmem:[%s165] sm:$0x3] %vm152, %v163
  %s167 = scalar_lea.vmem %s0, 4
  %v168 = vld [vmem:[%s167] sm:$0xf]
  %v169 = vld [vmem:[%s1] sm:$0xff]
  %v170 = vld [vmem:[%s1 + $0x8] sm:$0xff]
  %v171 = vld [vmem:[%s1 + $0x10] sm:$0xff]
  %v172 = vld [vmem:[%s1 + $0x18] sm:$0xff]
  %v173 = vld [vmem:[%s1 + $0x20] sm:$0xff]
  %v174 = vld [vmem:[%s1 + $0x28] sm:$0xff]
  %v175 = vld [vmem:[%s1 + $0x30] sm:$0xff]
  %v176 = vld [vmem:[%s1 + $0x38] sm:$0xff]
  %v177 = vld [vmem:[%s1 + $0x40] sm:$0xff]
  %v178 = vld [vmem:[%s1 + $0x48] sm:$0xff]
  %v179 = vld [vmem:[%s1 + $0x50] sm:$0xff]
  %v180 = vld [vmem:[%s1 + $0x58] sm:$0xff]
  %v181 = vld [vmem:[%s1 + $0x60] sm:$0xff]
  %v182 = vld [vmem:[%s1 + $0x68] sm:$0xff]
  %v183 = vld [vmem:[%s1 + $0x70] sm:$0xff]
  %v184 = vld [vmem:[%s1 + $0x78] sm:$0xff]
  %v185 = vsel %vm32, %v151, 0
  %187 = vmatprep.subr.mxu0 0.0
  %188 = vmatpush1.msra.mxu0 0.0
  %189 = vmatprep.subr.mxu0 0.0
  %190 = vmatpush1.msra.mxu0 0.0
  %191 = vmatprep.subr.mxu0 0.0
  %192 = vmatpush1.msra.mxu0 0.0
  %193 = vmatprep.subr.mxu0 0.0
  %194 = vmatpush1.msra.mxu0 0.0
  %195 = vmatprep.subr.mxu0 0.0
  %196 = vmatpush1.msra.mxu0 0.0
  %197 = vmatprep.subr.mxu0 0.0
  %198 = vmatpush1.msra.mxu0 0.0
  %199 = vmatprep.subr.mxu0 0.0
  %200 = vmatpush1.msra.mxu0 0.0
  %201 = vmatprep.subr.mxu0 0.0
  %202 = vmatpush1.msra.mxu0 0.0
  %203 = vmatprep.subr.mxu0 %v184
  %204 = vmatpush1.msra.mxu0 %v183
  %205 = vmatprep.subr.mxu0 %v182
  %206 = vmatpush1.msra.mxu0 %v181
  %207 = vmatprep.subr.mxu0 %v180
  %208 = vmatpush1.msra.mxu0 %v179
  %209 = vmatprep.subr.mxu0 %v178
  %210 = vmatpush1.msra.mxu0 %v177
  %211 = vmatprep.subr.mxu0 %v176
  %212 = vmatpush1.msra.mxu0 %v175
  %213 = vmatprep.subr.mxu0 %v174
  %214 = vmatpush1.msra.mxu0 %v173
  %215 = vmatprep.subr.mxu0 %v172
  %216 = vmatpush1.msra.mxu0 %v171
  %217 = vmatprep.subr.mxu0 %v170
  %218 = vmatpush1.msra.mxu0 %v169
  %219 = vmatprep.subr.mxu0 0.0
  %220 = vmatpush2.msra.mxu0 0.0
  %221 = vmatprep.subr.mxu0 0.0
  %222 = vmatpush2.msra.mxu0 0.0
  %223 = vmatprep.subr.mxu0 0.0
  %224 = vmatpush2.msra.mxu0 0.0
  %225 = vmatprep.subr.mxu0 0.0
  %226 = vmatpush2.msra.mxu0 0.0
  %227 = vmatprep.subr.mxu0 0.0
  %228 = vmatpush2.msra.mxu0 0.0
  %229 = vmatprep.subr.mxu0 0.0
  %230 = vmatpush2.msra.mxu0 0.0
  %231 = vmatprep.subr.mxu0 0.0
  %232 = vmatpush2.msra.mxu0 0.0
  %233 = vmatprep.subr.mxu0 0.0
  %234 = vmatpush2.msra.mxu0 0.0
  %235 = vmatprep.subr.mxu0 0.0
  %236 = vmatpush2.msra.mxu0 0.0
  %237 = vmatprep.subr.mxu0 0.0
  %238 = vmatpush2.msra.mxu0 0.0
  %239 = vmatprep.subr.mxu0 0.0
  %240 = vmatpush2.msra.mxu0 0.0
  %241 = vmatprep.subr.mxu0 0.0
  %242 = vmatpush2.msra.mxu0 0.0
  %243 = vmatprep.subr.mxu0 0.0
  %244 = vmatpush2.msra.mxu0 0.0
  %245 = vmatprep.subr.mxu0 0.0
  %246 = vmatpush2.msra.mxu0 0.0
  %247 = vmatprep.subr.mxu0 0.0
  %248 = vmatpush2.msra.mxu0 0.0
  %249 = vmatprep.subr.mxu0 0.0
  %250 = vmatpush2.msra.mxu0 0.0
  %251 = vmatprep.mubr.f32.mxu0 0.0
  %252 = vmatmul.mubr.f32.gmra.mxu0 %v185
  %v253 = vpop.f32.mrf.mxu0
  %v254 = vadd.f32 0.0, %v253
  %v255 = vpop.f32.mrf.mxu0
  %v256 = vadd.f32 0.0, %v255
  %257 = vdwg.mxu0
  %v260 = vcombine.low %v254, %v256
  %v262 = vunpack.c.l.s4 1983009808
  %v263 = vunpack.c.0.s8 %v262
  %v264 = vlaneseq
  %v265 = vshrl.u32 %v264, 7
  %v266 = vsub.s32 %v263, %v265
  %v267 = vrot.slane %v260, %v266
  %v269 = vadd.f32 %v168, %v267
  %v270 = vxor.u32 %v269, 2147483648
  %v271 = vmul.f32 %v270, 1.442695
  %v272 = vpow.pop %v271
  %v273 = vadd.f32 %v272, 1.0
  %v274 = vrcp.pop %v273
  %v275 = vmul.f32 1.0, %v274
  %v277 = vrot.slane %v269, 2
  %v279 = vtanh.pop %v277
  %280 = vrot.lane.b32.xlu0 %v269, 64
  %v281 = vpop.permute.xlu0 %280
  %v282 = vrot.slane %v281, 2
  %v284 = vxor.u32 %v282, 2147483648
  %v285 = vmul.f32 %v284, 1.442695
  %v286 = vpow.pop %v285
  %v287 = vadd.f32 %v286, 1.0
  %v288 = vrcp.pop %v287
  %v289 = vmul.f32 1.0, %v288
  %v290 = vmul.f32 %v275, %v145
  %v291 = vmul.f32 %v275, %v279
  %293 = vrot.lane.b32.xlu0 %v291, 64
  %v294 = vpop.permute.xlu0 %293
  %v296 = vadd.f32 %v290, %v294
  %v297 = vtanh.pop %v296
  %299 = vrot.lane.b32.xlu0 %v297, 64
  %v300 = vpop.permute.xlu0 %299
  %v302 = vmul.f32 %v289, %v300
  %s303 = scalar_lea.vmem %s2, 2
  %304 = vst.msk [vmem:[%s303] sm:$0x3] %vm152, %v302
  %v307 = vunpack.c.l.s4 1983009808
  %v308 = vunpack.c.0.s8 %v307
  %v309 = vlaneseq
  %v310 = vshrl.u32 %v309, 7
  %v311 = vsub.s32 %v308, %v310
  %v312 = vrot.slane %v302, %v311
  %313 = vrot.lane.b32.xlu0 %v312, 96
  %v314 = vpop.permute.xlu0 %313
  %s316 = scalar_lea.vmem %s3, 12
  %317 = vst.msk [vmem:[%s316] sm:$0x3] %vm152, %v314
  %s318 = scalar_lea.vmem %s0, 8
  %v319 = vld [vmem:[%s318] sm:$0xf]
  %v320 = vld [vmem:[%s1] sm:$0xff]
  %v321 = vld [vmem:[%s1 + $0x8] sm:$0xff]
  %v322 = vld [vmem:[%s1 + $0x10] sm:$0xff]
  %v323 = vld [vmem:[%s1 + $0x18] sm:$0xff]
  %v324 = vld [vmem:[%s1 + $0x20] sm:$0xff]
  %v325 = vld [vmem:[%s1 + $0x28] sm:$0xff]
  %v326 = vld [vmem:[%s1 + $0x30] sm:$0xff]
  %v327 = vld [vmem:[%s1 + $0x38] sm:$0xff]
  %v328 = vld [vmem:[%s1 + $0x40] sm:$0xff]
  %v329 = vld [vmem:[%s1 + $0x48] sm:$0xff]
  %v330 = vld [vmem:[%s1 + $0x50] sm:$0xff]
  %v331 = vld [vmem:[%s1 + $0x58] sm:$0xff]
  %v332 = vld [vmem:[%s1 + $0x60] sm:$0xff]
  %v333 = vld [vmem:[%s1 + $0x68] sm:$0xff]
  %v334 = vld [vmem:[%s1 + $0x70] sm:$0xff]
  %v335 = vld [vmem:[%s1 + $0x78] sm:$0xff]
  %v336 = vsel %vm32, %v302, 0
  %338 = vmatprep.subr.mxu0 0.0
  %339 = vmatpush1.msra.mxu0 0.0
  %340 = vmatprep.subr.mxu0 0.0
  %341 = vmatpush1.msra.mxu0 0.0
  %342 = vmatprep.subr.mxu0 0.0
  %343 = vmatpush1.msra.mxu0 0.0
  %344 = vmatprep.subr.mxu0 0.0
  %345 = vmatpush1.msra.mxu0 0.0
  %346 = vmatprep.subr.mxu0 0.0
  %347 = vmatpush1.msra.mxu0 0.0
  %348 = vmatprep.subr.mxu0 0.0
  %349 = vmatpush1.msra.mxu0 0.0
  %350 = vmatprep.subr.mxu0 0.0
  %351 = vmatpush1.msra.mxu0 0.0
  %352 = vmatprep.subr.mxu0 0.0
  %353 = vmatpush1.msra.mxu0 0.0
  %354 = vmatprep.subr.mxu0 %v335
  %355 = vmatpush1.msra.mxu0 %v334
  %356 = vmatprep.subr.mxu0 %v333
  %357 = vmatpush1.msra.mxu0 %v332
  %358 = vmatprep.subr.mxu0 %v331
  %359 = vmatpush1.msra.mxu0 %v330
  %360 = vmatprep.subr.mxu0 %v329
  %361 = vmatpush1.msra.mxu0 %v328
  %362 = vmatprep.subr.mxu0 %v327
  %363 = vmatpush1.msra.mxu0 %v326
  %364 = vmatprep.subr.mxu0 %v325
  %365 = vmatpush1.msra.mxu0 %v324
  %366 = vmatprep.subr.mxu0 %v323
  %367 = vmatpush1.msra.mxu0 %v322
  %368 = vmatprep.subr.mxu0 %v321
  %369 = vmatpush1.msra.mxu0 %v320
  %370 = vmatprep.subr.mxu0 0.0
  %371 = vmatpush2.msra.mxu0 0.0
  %372 = vmatprep.subr.mxu0 0.0
  %373 = vmatpush2.msra.mxu0 0.0
  %374 = vmatprep.subr.mxu0 0.0
  %375 = vmatpush2.msra.mxu0 0.0
  %376 = vmatprep.subr.mxu0 0.0
  %377 = vmatpush2.msra.mxu0 0.0
  %378 = vmatprep.subr.mxu0 0.0
  %379 = vmatpush2.msra.mxu0 0.0
  %380 = vmatprep.subr.mxu0 0.0
  %381 = vmatpush2.msra.mxu0 0.0
  %382 = vmatprep.subr.mxu0 0.0
  %383 = vmatpush2.msra.mxu0 0.0
  %384 = vmatprep.subr.mxu0 0.0
  %385 = vmatpush2.msra.mxu0 0.0
  %386 = vmatprep.subr.mxu0 0.0
  %387 = vmatpush2.msra.mxu0 0.0
  %388 = vmatprep.subr.mxu0 0.0
  %389 = vmatpush2.msra.mxu0 0.0
  %390 = vmatprep.subr.mxu0 0.0
  %391 = vmatpush2.msra.mxu0 0.0
  %392 = vmatprep.subr.mxu0 0.0
  %393 = vmatpush2.msra.mxu0 0.0
  %394 = vmatprep.subr.mxu0 0.0
  %395 = vmatpush2.msra.mxu0 0.0
  %396 = vmatprep.subr.mxu0 0.0
  %397 = vmatpush2.msra.mxu0 0.0
  %398 = vmatprep.subr.mxu0 0.0
  %399 = vmatpush2.msra.mxu0 0.0
  %400 = vmatprep.subr.mxu0 0.0
  %401 = vmatpush2.msra.mxu0 0.0
  %402 = vmatprep.mubr.f32.mxu0 0.0
  %403 = vmatmul.mubr.f32.gmra.mxu0 %v336
  %v404 = vpop.f32.mrf.mxu0
  %v405 = vadd.f32 0.0, %v404
  %v406 = vpop.f32.mrf.mxu0
  %v407 = vadd.f32 0.0, %v406
  %408 = vdwg.mxu0
  %v411 = vcombine.low %v405, %v407
  %v413 = vunpack.c.l.s4 1983009808
  %v414 = vunpack.c.0.s8 %v413
  %v415 = vlaneseq
  %v416 = vshrl.u32 %v415, 7
  %v417 = vsub.s32 %v414, %v416
  %v418 = vrot.slane %v411, %v417
  %v420 = vadd.f32 %v319, %v418
  %v421 = vxor.u32 %v420, 2147483648
  %v422 = vmul.f32 %v421, 1.442695
  %v423 = vpow.pop %v422
  %v424 = vadd.f32 %v423, 1.0
  %v425 = vrcp.pop %v424
  %v426 = vmul.f32 1.0, %v425
  %v428 = vrot.slane %v420, 2
  %v430 = vtanh.pop %v428
  %431 = vrot.lane.b32.xlu0 %v420, 64
  %v432 = vpop.permute.xlu0 %431
  %v433 = vrot.slane %v432, 2
  %v435 = vxor.u32 %v433, 2147483648
  %v436 = vmul.f32 %v435, 1.442695
  %v437 = vpow.pop %v436
  %v438 = vadd.f32 %v437, 1.0
  %v439 = vrcp.pop %v438
  %v440 = vmul.f32 1.0, %v439
  %v441 = vmul.f32 %v426, %v296
  %v442 = vmul.f32 %v426, %v430
  %444 = vrot.lane.b32.xlu0 %v442, 64
  %v445 = vpop.permute.xlu0 %444
  %v447 = vadd.f32 %v441, %v445
  %v448 = vtanh.pop %v447
  %450 = vrot.lane.b32.xlu0 %v448, 64
  %v451 = vpop.permute.xlu0 %450
  %v453 = vmul.f32 %v440, %v451
  %s454 = scalar_lea.vmem %s2, 4
  %455 = vst.msk [vmem:[%s454] sm:$0x3] %vm152, %v453
  %v458 = vunpack.c.l.s4 1983009808
  %v459 = vunpack.c.0.s8 %v458
  %v460 = vlaneseq
  %v461 = vshrl.u32 %v460, 7
  %v462 = vsub.s32 %v459, %v461
  %v463 = vrot.slane %v453, %v462
  %464 = vrot.lane.b32.xlu0 %v463, 96
  %v465 = vpop.permute.xlu0 %464
  %s467 = scalar_lea.vmem %s3, 10
  %468 = vst.msk [vmem:[%s467] sm:$0x3] %vm152, %v465
  %s469 = scalar_lea.vmem %s0, 12
  %v470 = vld [vmem:[%s469] sm:$0xf]
  %v471 = vld [vmem:[%s1] sm:$0xff]
  %v472 = vld [vmem:[%s1 + $0x8] sm:$0xff]
  %v473 = vld [vmem:[%s1 + $0x10] sm:$0xff]
  %v474 = vld [vmem:[%s1 + $0x18] sm:$0xff]
  %v475 = vld [vmem:[%s1 + $0x20] sm:$0xff]
  %v476 = vld [vmem:[%s1 + $0x28] sm:$0xff]
  %v477 = vld [vmem:[%s1 + $0x30] sm:$0xff]
  %v478 = vld [vmem:[%s1 + $0x38] sm:$0xff]
  %v479 = vld [vmem:[%s1 + $0x40] sm:$0xff]
  %v480 = vld [vmem:[%s1 + $0x48] sm:$0xff]
  %v481 = vld [vmem:[%s1 + $0x50] sm:$0xff]
  %v482 = vld [vmem:[%s1 + $0x58] sm:$0xff]
  %v483 = vld [vmem:[%s1 + $0x60] sm:$0xff]
  %v484 = vld [vmem:[%s1 + $0x68] sm:$0xff]
  %v485 = vld [vmem:[%s1 + $0x70] sm:$0xff]
  %v486 = vld [vmem:[%s1 + $0x78] sm:$0xff]
  %v487 = vsel %vm32, %v453, 0
  %489 = vmatprep.subr.mxu0 0.0
  %490 = vmatpush1.msra.mxu0 0.0
  %491 = vmatprep.subr.mxu0 0.0
  %492 = vmatpush1.msra.mxu0 0.0
  %493 = vmatprep.subr.mxu0 0.0
  %494 = vmatpush1.msra.mxu0 0.0
  %495 = vmatprep.subr.mxu0 0.0
  %496 = vmatpush1.msra.mxu0 0.0
  %497 = vmatprep.subr.mxu0 0.0
  %498 = vmatpush1.msra.mxu0 0.0
  %499 = vmatprep.subr.mxu0 0.0
  %500 = vmatpush1.msra.mxu0 0.0
  %501 = vmatprep.subr.mxu0 0.0
  %502 = vmatpush1.msra.mxu0 0.0
  %503 = vmatprep.subr.mxu0 0.0
  %504 = vmatpush1.msra.mxu0 0.0
  %505 = vmatprep.subr.mxu0 %v486
  %506 = vmatpush1.msra.mxu0 %v485
  %507 = vmatprep.subr.mxu0 %v484
  %508 = vmatpush1.msra.mxu0 %v483
  %509 = vmatprep.subr.mxu0 %v482
  %510 = vmatpush1.msra.mxu0 %v481
  %511 = vmatprep.subr.mxu0 %v480
  %512 = vmatpush1.msra.mxu0 %v479
  %513 = vmatprep.subr.mxu0 %v478
  %514 = vmatpush1.msra.mxu0 %v477
  %515 = vmatprep.subr.mxu0 %v476
  %516 = vmatpush1.msra.mxu0 %v475
  %517 = vmatprep.subr.mxu0 %v474
  %518 = vmatpush1.msra.mxu0 %v473
  %519 = vmatprep.subr.mxu0 %v472
  %520 = vmatpush1.msra.mxu0 %v471
  %521 = vmatprep.subr.mxu0 0.0
  %522 = vmatpush2.msra.mxu0 0.0
  %523 = vmatprep.subr.mxu0 0.0
  %524 = vmatpush2.msra.mxu0 0.0
  %525 = vmatprep.subr.mxu0 0.0
  %526 = vmatpush2.msra.mxu0 0.0
  %527 = vmatprep.subr.mxu0 0.0
  %528 = vmatpush2.msra.mxu0 0.0
  %529 = vmatprep.subr.mxu0 0.0
  %530 = vmatpush2.msra.mxu0 0.0
  %531 = vmatprep.subr.mxu0 0.0
  %532 = vmatpush2.msra.mxu0 0.0
  %533 = vmatprep.subr.mxu0 0.0
  %534 = vmatpush2.msra.mxu0 0.0
  %535 = vmatprep.subr.mxu0 0.0
  %536 = vmatpush2.msra.mxu0 0.0
  %537 = vmatprep.subr.mxu0 0.0
  %538 = vmatpush2.msra.mxu0 0.0
  %539 = vmatprep.subr.mxu0 0.0
  %540 = vmatpush2.msra.mxu0 0.0
  %541 = vmatprep.subr.mxu0 0.0
  %542 = vmatpush2.msra.mxu0 0.0
  %543 = vmatprep.subr.mxu0 0.0
  %544 = vmatpush2.msra.mxu0 0.0
  %545 = vmatprep.subr.mxu0 0.0
  %546 = vmatpush2.msra.mxu0 0.0
  %547 = vmatprep.subr.mxu0 0.0
  %548 = vmatpush2.msra.mxu0 0.0
  %549 = vmatprep.subr.mxu0 0.0
  %550 = vmatpush2.msra.mxu0 0.0
  %551 = vmatprep.subr.mxu0 0.0
  %552 = vmatpush2.msra.mxu0 0.0
  %553 = vmatprep.mubr.f32.mxu0 0.0
  %554 = vmatmul.mubr.f32.gmra.mxu0 %v487
  %v555 = vpop.f32.mrf.mxu0
  %v556 = vadd.f32 0.0, %v555
  %v557 = vpop.f32.mrf.mxu0
  %v558 = vadd.f32 0.0, %v557
  %559 = vdwg.mxu0
  %v562 = vcombine.low %v556, %v558
  %v564 = vunpack.c.l.s4 1983009808
  %v565 = vunpack.c.0.s8 %v564
  %v566 = vlaneseq
  %v567 = vshrl.u32 %v566, 7
  %v568 = vsub.s32 %v565, %v567
  %v569 = vrot.slane %v562, %v568
  %v571 = vadd.f32 %v470, %v569
  %v572 = vxor.u32 %v571, 2147483648
  %v573 = vmul.f32 %v572, 1.442695
  %v574 = vpow.pop %v573
  %v575 = vadd.f32 %v574, 1.0
  %v576 = vrcp.pop %v575
  %v577 = vmul.f32 1.0, %v576
  %v579 = vrot.slane %v571, 2
  %v581 = vtanh.pop %v579
  %582 = vrot.lane.b32.xlu0 %v571, 64
  %v583 = vpop.permute.xlu0 %582
  %v584 = vrot.slane %v583, 2
  %v586 = vxor.u32 %v584, 2147483648
  %v587 = vmul.f32 %v586, 1.442695
  %v588 = vpow.pop %v587
  %v589 = vadd.f32 %v588, 1.0
  %v590 = vrcp.pop %v589
  %v591 = vmul.f32 1.0, %v590
  %v592 = vmul.f32 %v577, %v447
  %v593 = vmul.f32 %v577, %v581
  %595 = vrot.lane.b32.xlu0 %v593, 64
  %v596 = vpop.permute.xlu0 %595
  %v598 = vadd.f32 %v592, %v596
  %v599 = vtanh.pop %v598
  %601 = vrot.lane.b32.xlu0 %v599, 64
  %v602 = vpop.permute.xlu0 %601
  %v604 = vmul.f32 %v591, %v602
  %s605 = scalar_lea.vmem %s2, 6
  %606 = vst.msk [vmem:[%s605] sm:$0x3] %vm152, %v604
  %v609 = vunpack.c.l.s4 1983009808
  %v610 = vunpack.c.0.s8 %v609
  %v611 = vlaneseq
  %v612 = vshrl.u32 %v611, 7
  %v613 = vsub.s32 %v610, %v612
  %v614 = vrot.slane %v604, %v613
  %615 = vrot.lane.b32.xlu0 %v614, 96
  %v616 = vpop.permute.xlu0 %615
  %s618 = scalar_lea.vmem %s3, 8
  %619 = vst.msk [vmem:[%s618] sm:$0x3] %vm152, %v616
  %s620 = scalar_lea.vmem %s0, 16
  %v621 = vld [vmem:[%s620] sm:$0xf]
  %v622 = vld [vmem:[%s1] sm:$0xff]
  %v623 = vld [vmem:[%s1 + $0x8] sm:$0xff]
  %v624 = vld [vmem:[%s1 + $0x10] sm:$0xff]
  %v625 = vld [vmem:[%s1 + $0x18] sm:$0xff]
  %v626 = vld [vmem:[%s1 + $0x20] sm:$0xff]
  %v627 = vld [vmem:[%s1 + $0x28] sm:$0xff]
  %v628 = vld [vmem:[%s1 + $0x30] sm:$0xff]
  %v629 = vld [vmem:[%s1 + $0x38] sm:$0xff]
  %v630 = vld [vmem:[%s1 + $0x40] sm:$0xff]
  %v631 = vld [vmem:[%s1 + $0x48] sm:$0xff]
  %v632 = vld [vmem:[%s1 + $0x50] sm:$0xff]
  %v633 = vld [vmem:[%s1 + $0x58] sm:$0xff]
  %v634 = vld [vmem:[%s1 + $0x60] sm:$0xff]
  %v635 = vld [vmem:[%s1 + $0x68] sm:$0xff]
  %v636 = vld [vmem:[%s1 + $0x70] sm:$0xff]
  %v637 = vld [vmem:[%s1 + $0x78] sm:$0xff]
  %v638 = vsel %vm32, %v604, 0
  %640 = vmatprep.subr.mxu0 0.0
  %641 = vmatpush1.msra.mxu0 0.0
  %642 = vmatprep.subr.mxu0 0.0
  %643 = vmatpush1.msra.mxu0 0.0
  %644 = vmatprep.subr.mxu0 0.0
  %645 = vmatpush1.msra.mxu0 0.0
  %646 = vmatprep.subr.mxu0 0.0
  %647 = vmatpush1.msra.mxu0 0.0
  %648 = vmatprep.subr.mxu0 0.0
  %649 = vmatpush1.msra.mxu0 0.0
  %650 = vmatprep.subr.mxu0 0.0
  %651 = vmatpush1.msra.mxu0 0.0
  %652 = vmatprep.subr.mxu0 0.0
  %653 = vmatpush1.msra.mxu0 0.0
  %654 = vmatprep.subr.mxu0 0.0
  %655 = vmatpush1.msra.mxu0 0.0
  %656 = vmatprep.subr.mxu0 %v637
  %657 = vmatpush1.msra.mxu0 %v636
  %658 = vmatprep.subr.mxu0 %v635
  %659 = vmatpush1.msra.mxu0 %v634
  %660 = vmatprep.subr.mxu0 %v633
  %661 = vmatpush1.msra.mxu0 %v632
  %662 = vmatprep.subr.mxu0 %v631
  %663 = vmatpush1.msra.mxu0 %v630
  %664 = vmatprep.subr.mxu0 %v629
  %665 = vmatpush1.msra.mxu0 %v628
  %666 = vmatprep.subr.mxu0 %v627
  %667 = vmatpush1.msra.mxu0 %v626
  %668 = vmatprep.subr.mxu0 %v625
  %669 = vmatpush1.msra.mxu0 %v624
  %670 = vmatprep.subr.mxu0 %v623
  %671 = vmatpush1.msra.mxu0 %v622
  %672 = vmatprep.subr.mxu0 0.0
  %673 = vmatpush2.msra.mxu0 0.0
  %674 = vmatprep.subr.mxu0 0.0
  %675 = vmatpush2.msra.mxu0 0.0
  %676 = vmatprep.subr.mxu0 0.0
  %677 = vmatpush2.msra.mxu0 0.0
  %678 = vmatprep.subr.mxu0 0.0
  %679 = vmatpush2.msra.mxu0 0.0
  %680 = vmatprep.subr.mxu0 0.0
  %681 = vmatpush2.msra.mxu0 0.0
  %682 = vmatprep.subr.mxu0 0.0
  %683 = vmatpush2.msra.mxu0 0.0
  %684 = vmatprep.subr.mxu0 0.0
  %685 = vmatpush2.msra.mxu0 0.0
  %686 = vmatprep.subr.mxu0 0.0
  %687 = vmatpush2.msra.mxu0 0.0
  %688 = vmatprep.subr.mxu0 0.0
  %689 = vmatpush2.msra.mxu0 0.0
  %690 = vmatprep.subr.mxu0 0.0
  %691 = vmatpush2.msra.mxu0 0.0
  %692 = vmatprep.subr.mxu0 0.0
  %693 = vmatpush2.msra.mxu0 0.0
  %694 = vmatprep.subr.mxu0 0.0
  %695 = vmatpush2.msra.mxu0 0.0
  %696 = vmatprep.subr.mxu0 0.0
  %697 = vmatpush2.msra.mxu0 0.0
  %698 = vmatprep.subr.mxu0 0.0
  %699 = vmatpush2.msra.mxu0 0.0
  %700 = vmatprep.subr.mxu0 0.0
  %701 = vmatpush2.msra.mxu0 0.0
  %702 = vmatprep.subr.mxu0 0.0
  %703 = vmatpush2.msra.mxu0 0.0
  %704 = vmatprep.mubr.f32.mxu0 0.0
  %705 = vmatmul.mubr.f32.gmra.mxu0 %v638
  %v706 = vpop.f32.mrf.mxu0
  %v707 = vadd.f32 0.0, %v706
  %v708 = vpop.f32.mrf.mxu0
  %v709 = vadd.f32 0.0, %v708
  %710 = vdwg.mxu0
  %v713 = vcombine.low %v707, %v709
  %v715 = vunpack.c.l.s4 1983009808
  %v716 = vunpack.c.0.s8 %v715
  %v717 = vlaneseq
  %v718 = vshrl.u32 %v717, 7
  %v719 = vsub.s32 %v716, %v718
  %v720 = vrot.slane %v713, %v719
  %v722 = vadd.f32 %v621, %v720
  %v723 = vxor.u32 %v722, 2147483648
  %v724 = vmul.f32 %v723, 1.442695
  %v725 = vpow.pop %v724
  %v726 = vadd.f32 %v725, 1.0
  %v727 = vrcp.pop %v726
  %v728 = vmul.f32 1.0, %v727
  %v730 = vrot.slane %v722, 2
  %v732 = vtanh.pop %v730
  %733 = vrot.lane.b32.xlu0 %v722, 64
  %v734 = vpop.permute.xlu0 %733
  %v735 = vrot.slane %v734, 2
  %v737 = vxor.u32 %v735, 2147483648
  %v738 = vmul.f32 %v737, 1.442695
  %v739 = vpow.pop %v738
  %v740 = vadd.f32 %v739, 1.0
  %v741 = vrcp.pop %v740
  %v742 = vmul.f32 1.0, %v741
  %v743 = vmul.f32 %v728, %v598
  %v744 = vmul.f32 %v728, %v732
  %746 = vrot.lane.b32.xlu0 %v744, 64
  %v747 = vpop.permute.xlu0 %746
  %v749 = vadd.f32 %v743, %v747
  %v750 = vtanh.pop %v749
  %752 = vrot.lane.b32.xlu0 %v750, 64
  %v753 = vpop.permute.xlu0 %752
  %v755 = vmul.f32 %v742, %v753
  %s756 = scalar_lea.vmem %s2, 8
  %757 = vst.msk [vmem:[%s756] sm:$0x3] %vm152, %v755
  %v760 = vunpack.c.l.s4 1983009808
  %v761 = vunpack.c.0.s8 %v760
  %v762 = vlaneseq
  %v763 = vshrl.u32 %v762, 7
  %v764 = vsub.s32 %v761, %v763
  %v765 = vrot.slane %v755, %v764
  %766 = vrot.lane.b32.xlu0 %v765, 96
  %v767 = vpop.permute.xlu0 %766
  %s769 = scalar_lea.vmem %s3, 6
  %770 = vst.msk [vmem:[%s769] sm:$0x3] %vm152, %v767
  %s771 = scalar_lea.vmem %s0, 20
  %v772 = vld [vmem:[%s771] sm:$0xf]
  %v773 = vld [vmem:[%s1] sm:$0xff]
  %v774 = vld [vmem:[%s1 + $0x8] sm:$0xff]
  %v775 = vld [vmem:[%s1 + $0x10] sm:$0xff]
  %v776 = vld [vmem:[%s1 + $0x18] sm:$0xff]
  %v777 = vld [vmem:[%s1 + $0x20] sm:$0xff]
  %v778 = vld [vmem:[%s1 + $0x28] sm:$0xff]
  %v779 = vld [vmem:[%s1 + $0x30] sm:$0xff]
  %v780 = vld [vmem:[%s1 + $0x38] sm:$0xff]
  %v781 = vld [vmem:[%s1 + $0x40] sm:$0xff]
  %v782 = vld [vmem:[%s1 + $0x48] sm:$0xff]
  %v783 = vld [vmem:[%s1 + $0x50] sm:$0xff]
  %v784 = vld [vmem:[%s1 + $0x58] sm:$0xff]
  %v785 = vld [vmem:[%s1 + $0x60] sm:$0xff]
  %v786 = vld [vmem:[%s1 + $0x68] sm:$0xff]
  %v787 = vld [vmem:[%s1 + $0x70] sm:$0xff]
  %v788 = vld [vmem:[%s1 + $0x78] sm:$0xff]
  %v789 = vsel %vm32, %v755, 0
  %791 = vmatprep.subr.mxu0 0.0
  %792 = vmatpush1.msra.mxu0 0.0
  %793 = vmatprep.subr.mxu0 0.0
  %794 = vmatpush1.msra.mxu0 0.0
  %795 = vmatprep.subr.mxu0 0.0
  %796 = vmatpush1.msra.mxu0 0.0
  %797 = vmatprep.subr.mxu0 0.0
  %798 = vmatpush1.msra.mxu0 0.0
  %799 = vmatprep.subr.mxu0 0.0
  %800 = vmatpush1.msra.mxu0 0.0
  %801 = vmatprep.subr.mxu0 0.0
  %802 = vmatpush1.msra.mxu0 0.0
  %803 = vmatprep.subr.mxu0 0.0
  %804 = vmatpush1.msra.mxu0 0.0
  %805 = vmatprep.subr.mxu0 0.0
  %806 = vmatpush1.msra.mxu0 0.0
  %807 = vmatprep.subr.mxu0 %v788
  %808 = vmatpush1.msra.mxu0 %v787
  %809 = vmatprep.subr.mxu0 %v786
  %810 = vmatpush1.msra.mxu0 %v785
  %811 = vmatprep.subr.mxu0 %v784
  %812 = vmatpush1.msra.mxu0 %v783
  %813 = vmatprep.subr.mxu0 %v782
  %814 = vmatpush1.msra.mxu0 %v781
  %815 = vmatprep.subr.mxu0 %v780
  %816 = vmatpush1.msra.mxu0 %v779
  %817 = vmatprep.subr.mxu0 %v778
  %818 = vmatpush1.msra.mxu0 %v777
  %819 = vmatprep.subr.mxu0 %v776
  %820 = vmatpush1.msra.mxu0 %v775
  %821 = vmatprep.subr.mxu0 %v774
  %822 = vmatpush1.msra.mxu0 %v773
  %823 = vmatprep.subr.mxu0 0.0
  %824 = vmatpush2.msra.mxu0 0.0
  %825 = vmatprep.subr.mxu0 0.0
  %826 = vmatpush2.msra.mxu0 0.0
  %827 = vmatprep.subr.mxu0 0.0
  %828 = vmatpush2.msra.mxu0 0.0
  %829 = vmatprep.subr.mxu0 0.0
  %830 = vmatpush2.msra.mxu0 0.0
  %831 = vmatprep.subr.mxu0 0.0
  %832 = vmatpush2.msra.mxu0 0.0
  %833 = vmatprep.subr.mxu0 0.0
  %834 = vmatpush2.msra.mxu0 0.0
  %835 = vmatprep.subr.mxu0 0.0
  %836 = vmatpush2.msra.mxu0 0.0
  %837 = vmatprep.subr.mxu0 0.0
  %838 = vmatpush2.msra.mxu0 0.0
  %839 = vmatprep.subr.mxu0 0.0
  %840 = vmatpush2.msra.mxu0 0.0
  %841 = vmatprep.subr.mxu0 0.0
  %842 = vmatpush2.msra.mxu0 0.0
  %843 = vmatprep.subr.mxu0 0.0
  %844 = vmatpush2.msra.mxu0 0.0
  %845 = vmatprep.subr.mxu0 0.0
  %846 = vmatpush2.msra.mxu0 0.0
  %847 = vmatprep.subr.mxu0 0.0
  %848 = vmatpush2.msra.mxu0 0.0
  %849 = vmatprep.subr.mxu0 0.0
  %850 = vmatpush2.msra.mxu0 0.0
  %851 = vmatprep.subr.mxu0 0.0
  %852 = vmatpush2.msra.mxu0 0.0
  %853 = vmatprep.subr.mxu0 0.0
  %854 = vmatpush2.msra.mxu0 0.0
  %855 = vmatprep.mubr.f32.mxu0 0.0
  %856 = vmatmul.mubr.f32.gmra.mxu0 %v789
  %v857 = vpop.f32.mrf.mxu0
  %v858 = vadd.f32 0.0, %v857
  %v859 = vpop.f32.mrf.mxu0
  %v860 = vadd.f32 0.0, %v859
  %861 = vdwg.mxu0
  %v864 = vcombine.low %v858, %v860
  %v866 = vunpack.c.l.s4 1983009808
  %v867 = vunpack.c.0.s8 %v866
  %v868 = vlaneseq
  %v869 = vshrl.u32 %v868, 7
  %v870 = vsub.s32 %v867, %v869
  %v871 = vrot.slane %v864, %v870
  %v873 = vadd.f32 %v772, %v871
  %v874 = vxor.u32 %v873, 2147483648
  %v875 = vmul.f32 %v874, 1.442695
  %v876 = vpow.pop %v875
  %v877 = vadd.f32 %v876, 1.0
  %v878 = vrcp.pop %v877
  %v879 = vmul.f32 1.0, %v878
  %v881 = vrot.slane %v873, 2
  %v883 = vtanh.pop %v881
  %884 = vrot.lane.b32.xlu0 %v873, 64
  %v885 = vpop.permute.xlu0 %884
  %v886 = vrot.slane %v885, 2
  %v888 = vxor.u32 %v886, 2147483648
  %v889 = vmul.f32 %v888, 1.442695
  %v890 = vpow.pop %v889
  %v891 = vadd.f32 %v890, 1.0
  %v892 = vrcp.pop %v891
  %v893 = vmul.f32 1.0, %v892
  %v894 = vmul.f32 %v879, %v749
  %v895 = vmul.f32 %v879, %v883
  %897 = vrot.lane.b32.xlu0 %v895, 64
  %v898 = vpop.permute.xlu0 %897
  %v900 = vadd.f32 %v894, %v898
  %v901 = vtanh.pop %v900
  %903 = vrot.lane.b32.xlu0 %v901, 64
  %v904 = vpop.permute.xlu0 %903
  %v906 = vmul.f32 %v893, %v904
  %s907 = scalar_lea.vmem %s2, 10
  %908 = vst.msk [vmem:[%s907] sm:$0x3] %vm152, %v906
  %v911 = vunpack.c.l.s4 1983009808
  %v912 = vunpack.c.0.s8 %v911
  %v913 = vlaneseq
  %v914 = vshrl.u32 %v913, 7
  %v915 = vsub.s32 %v912, %v914
  %v916 = vrot.slane %v906, %v915
  %917 = vrot.lane.b32.xlu0 %v916, 96
  %v918 = vpop.permute.xlu0 %917
  %s920 = scalar_lea.vmem %s3, 4
  %921 = vst.msk [vmem:[%s920] sm:$0x3] %vm152, %v918
  %s922 = scalar_lea.vmem %s0, 24
  %v923 = vld [vmem:[%s922] sm:$0xf]
  %v924 = vld [vmem:[%s1] sm:$0xff]
  %v925 = vld [vmem:[%s1 + $0x8] sm:$0xff]
  %v926 = vld [vmem:[%s1 + $0x10] sm:$0xff]
  %v927 = vld [vmem:[%s1 + $0x18] sm:$0xff]
  %v928 = vld [vmem:[%s1 + $0x20] sm:$0xff]
  %v929 = vld [vmem:[%s1 + $0x28] sm:$0xff]
  %v930 = vld [vmem:[%s1 + $0x30] sm:$0xff]
  %v931 = vld [vmem:[%s1 + $0x38] sm:$0xff]
  %v932 = vld [vmem:[%s1 + $0x40] sm:$0xff]
  %v933 = vld [vmem:[%s1 + $0x48] sm:$0xff]
  %v934 = vld [vmem:[%s1 + $0x50] sm:$0xff]
  %v935 = vld [vmem:[%s1 + $0x58] sm:$0xff]
  %v936 = vld [vmem:[%s1 + $0x60] sm:$0xff]
  %v937 = vld [vmem:[%s1 + $0x68] sm:$0xff]
  %v938 = vld [vmem:[%s1 + $0x70] sm:$0xff]
  %v939 = vld [vmem:[%s1 + $0x78] sm:$0xff]
  %v940 = vsel %vm32, %v906, 0
  %942 = vmatprep.subr.mxu0 0.0
  %943 = vmatpush1.msra.mxu0 0.0
  %944 = vmatprep.subr.mxu0 0.0
  %945 = vmatpush1.msra.mxu0 0.0
  %946 = vmatprep.subr.mxu0 0.0
  %947 = vmatpush1.msra.mxu0 0.0
  %948 = vmatprep.subr.mxu0 0.0
  %949 = vmatpush1.msra.mxu0 0.0
  %950 = vmatprep.subr.mxu0 0.0
  %951 = vmatpush1.msra.mxu0 0.0
  %952 = vmatprep.subr.mxu0 0.0
  %953 = vmatpush1.msra.mxu0 0.0
  %954 = vmatprep.subr.mxu0 0.0
  %955 = vmatpush1.msra.mxu0 0.0
  %956 = vmatprep.subr.mxu0 0.0
  %957 = vmatpush1.msra.mxu0 0.0
  %958 = vmatprep.subr.mxu0 %v939
  %959 = vmatpush1.msra.mxu0 %v938
  %960 = vmatprep.subr.mxu0 %v937
  %961 = vmatpush1.msra.mxu0 %v936
  %962 = vmatprep.subr.mxu0 %v935
  %963 = vmatpush1.msra.mxu0 %v934
  %964 = vmatprep.subr.mxu0 %v933
  %965 = vmatpush1.msra.mxu0 %v932
  %966 = vmatprep.subr.mxu0 %v931
  %967 = vmatpush1.msra.mxu0 %v930
  %968 = vmatprep.subr.mxu0 %v929
  %969 = vmatpush1.msra.mxu0 %v928
  %970 = vmatprep.subr.mxu0 %v927
  %971 = vmatpush1.msra.mxu0 %v926
  %972 = vmatprep.subr.mxu0 %v925
  %973 = vmatpush1.msra.mxu0 %v924
  %974 = vmatprep.subr.mxu0 0.0
  %975 = vmatpush2.msra.mxu0 0.0
  %976 = vmatprep.subr.mxu0 0.0
  %977 = vmatpush2.msra.mxu0 0.0
  %978 = vmatprep.subr.mxu0 0.0
  %979 = vmatpush2.msra.mxu0 0.0
  %980 = vmatprep.subr.mxu0 0.0
  %981 = vmatpush2.msra.mxu0 0.0
  %982 = vmatprep.subr.mxu0 0.0
  %983 = vmatpush2.msra.mxu0 0.0
  %984 = vmatprep.subr.mxu0 0.0
  %985 = vmatpush2.msra.mxu0 0.0
  %986 = vmatprep.subr.mxu0 0.0
  %987 = vmatpush2.msra.mxu0 0.0
  %988 = vmatprep.subr.mxu0 0.0
  %989 = vmatpush2.msra.mxu0 0.0
  %990 = vmatprep.subr.mxu0 0.0
  %991 = vmatpush2.msra.mxu0 0.0
  %992 = vmatprep.subr.mxu0 0.0
  %993 = vmatpush2.msra.mxu0 0.0
  %994 = vmatprep.subr.mxu0 0.0
  %995 = vmatpush2.msra.mxu0 0.0
  %996 = vmatprep.subr.mxu0 0.0
  %997 = vmatpush2.msra.mxu0 0.0
  %998 = vmatprep.subr.mxu0 0.0
  %999 = vmatpush2.msra.mxu0 0.0
  %1000 = vmatprep.subr.mxu0 0.0
  %1001 = vmatpush2.msra.mxu0 0.0
  %1002 = vmatprep.subr.mxu0 0.0
  %1003 = vmatpush2.msra.mxu0 0.0
  %1004 = vmatprep.subr.mxu0 0.0
  %1005 = vmatpush2.msra.mxu0 0.0
  %1006 = vmatprep.mubr.f32.mxu0 0.0
  %1007 = vmatmul.mubr.f32.gmra.mxu0 %v940
  %v1008 = vpop.f32.mrf.mxu0
  %v1009 = vadd.f32 0.0, %v1008
  %v1010 = vpop.f32.mrf.mxu0
  %v1011 = vadd.f32 0.0, %v1010
  %1012 = vdwg.mxu0
  %v1015 = vcombine.low %v1009, %v1011
  %v1017 = vunpack.c.l.s4 1983009808
  %v1018 = vunpack.c.0.s8 %v1017
  %v1019 = vlaneseq
  %v1020 = vshrl.u32 %v1019, 7
  %v1021 = vsub.s32 %v1018, %v1020
  %v1022 = vrot.slane %v1015, %v1021
  %v1024 = vadd.f32 %v923, %v1022
  %v1025 = vxor.u32 %v1024, 2147483648
  %v1026 = vmul.f32 %v1025, 1.442695
  %v1027 = vpow.pop %v1026
  %v1028 = vadd.f32 %v1027, 1.0
  %v1029 = vrcp.pop %v1028
  %v1030 = vmul.f32 1.0, %v1029
  %v1032 = vrot.slane %v1024, 2
  %v1034 = vtanh.pop %v1032
  %1035 = vrot.lane.b32.xlu0 %v1024, 64
  %v1036 = vpop.permute.xlu0 %1035
  %v1037 = vrot.slane %v1036, 2
  %v1039 = vxor.u32 %v1037, 2147483648
  %v1040 = vmul.f32 %v1039, 1.442695
  %v1041 = vpow.pop %v1040
  %v1042 = vadd.f32 %v1041, 1.0
  %v1043 = vrcp.pop %v1042
  %v1044 = vmul.f32 1.0, %v1043
  %v1045 = vmul.f32 %v1030, %v900
  %v1046 = vmul.f32 %v1030, %v1034
  %1048 = vrot.lane.b32.xlu0 %v1046, 64
  %v1049 = vpop.permute.xlu0 %1048
  %v1051 = vadd.f32 %v1045, %v1049
  %v1052 = vtanh.pop %v1051
  %1054 = vrot.lane.b32.xlu0 %v1052, 64
  %v1055 = vpop.permute.xlu0 %1054
  %v1057 = vmul.f32 %v1044, %v1055
  %s1058 = scalar_lea.vmem %s2, 12
  %1059 = vst.msk [vmem:[%s1058] sm:$0x3] %vm152, %v1057
  %v1062 = vunpack.c.l.s4 1983009808
  %v1063 = vunpack.c.0.s8 %v1062
  %v1064 = vlaneseq
  %v1065 = vshrl.u32 %v1064, 7
  %v1066 = vsub.s32 %v1063, %v1065
  %v1067 = vrot.slane %v1057, %v1066
  %1068 = vrot.lane.b32.xlu0 %v1067, 96
  %v1069 = vpop.permute.xlu0 %1068
  %s1071 = scalar_lea.vmem %s3, 2
  %1072 = vst.msk [vmem:[%s1071] sm:$0x3] %vm152, %v1069
  %s1073 = scalar_lea.vmem %s0, 28
  %v1074 = vld [vmem:[%s1073] sm:$0xf]
  %v1075 = vld [vmem:[%s1] sm:$0xff]
  %v1076 = vld [vmem:[%s1 + $0x8] sm:$0xff]
  %v1077 = vld [vmem:[%s1 + $0x10] sm:$0xff]
  %v1078 = vld [vmem:[%s1 + $0x18] sm:$0xff]
  %v1079 = vld [vmem:[%s1 + $0x20] sm:$0xff]
  %v1080 = vld [vmem:[%s1 + $0x28] sm:$0xff]
  %v1081 = vld [vmem:[%s1 + $0x30] sm:$0xff]
  %v1082 = vld [vmem:[%s1 + $0x38] sm:$0xff]
  %v1083 = vld [vmem:[%s1 + $0x40] sm:$0xff]
  %v1084 = vld [vmem:[%s1 + $0x48] sm:$0xff]
  %v1085 = vld [vmem:[%s1 + $0x50] sm:$0xff]
  %v1086 = vld [vmem:[%s1 + $0x58] sm:$0xff]
  %v1087 = vld [vmem:[%s1 + $0x60] sm:$0xff]
  %v1088 = vld [vmem:[%s1 + $0x68] sm:$0xff]
  %v1089 = vld [vmem:[%s1 + $0x70] sm:$0xff]
  %v1090 = vld [vmem:[%s1 + $0x78] sm:$0xff]
  %v1091 = vsel %vm32, %v1057, 0
  %1093 = vmatprep.subr.mxu0 0.0
  %1094 = vmatpush1.msra.mxu0 0.0
  %1095 = vmatprep.subr.mxu0 0.0
  %1096 = vmatpush1.msra.mxu0 0.0
  %1097 = vmatprep.subr.mxu0 0.0
  %1098 = vmatpush1.msra.mxu0 0.0
  %1099 = vmatprep.subr.mxu0 0.0
  %1100 = vmatpush1.msra.mxu0 0.0
  %1101 = vmatprep.subr.mxu0 0.0
  %1102 = vmatpush1.msra.mxu0 0.0
  %1103 = vmatprep.subr.mxu0 0.0
  %1104 = vmatpush1.msra.mxu0 0.0
  %1105 = vmatprep.subr.mxu0 0.0
  %1106 = vmatpush1.msra.mxu0 0.0
  %1107 = vmatprep.subr.mxu0 0.0
  %1108 = vmatpush1.msra.mxu0 0.0
  %1109 = vmatprep.subr.mxu0 %v1090
  %1110 = vmatpush1.msra.mxu0 %v1089
  %1111 = vmatprep.subr.mxu0 %v1088
  %1112 = vmatpush1.msra.mxu0 %v1087
  %1113 = vmatprep.subr.mxu0 %v1086
  %1114 = vmatpush1.msra.mxu0 %v1085
  %1115 = vmatprep.subr.mxu0 %v1084
  %1116 = vmatpush1.msra.mxu0 %v1083
  %1117 = vmatprep.subr.mxu0 %v1082
  %1118 = vmatpush1.msra.mxu0 %v1081
  %1119 = vmatprep.subr.mxu0 %v1080
  %1120 = vmatpush1.msra.mxu0 %v1079
  %1121 = vmatprep.subr.mxu0 %v1078
  %1122 = vmatpush1.msra.mxu0 %v1077
  %1123 = vmatprep.subr.mxu0 %v1076
  %1124 = vmatpush1.msra.mxu0 %v1075
  %1125 = vmatprep.subr.mxu0 0.0
  %1126 = vmatpush2.msra.mxu0 0.0
  %1127 = vmatprep.subr.mxu0 0.0
  %1128 = vmatpush2.msra.mxu0 0.0
  %1129 = vmatprep.subr.mxu0 0.0
  %1130 = vmatpush2.msra.mxu0 0.0
  %1131 = vmatprep.subr.mxu0 0.0
  %1132 = vmatpush2.msra.mxu0 0.0
  %1133 = vmatprep.subr.mxu0 0.0
  %1134 = vmatpush2.msra.mxu0 0.0
  %1135 = vmatprep.subr.mxu0 0.0
  %1136 = vmatpush2.msra.mxu0 0.0
  %1137 = vmatprep.subr.mxu0 0.0
  %1138 = vmatpush2.msra.mxu0 0.0
  %1139 = vmatprep.subr.mxu0 0.0
  %1140 = vmatpush2.msra.mxu0 0.0
  %1141 = vmatprep.subr.mxu0 0.0
  %1142 = vmatpush2.msra.mxu0 0.0
  %1143 = vmatprep.subr.mxu0 0.0
  %1144 = vmatpush2.msra.mxu0 0.0
  %1145 = vmatprep.subr.mxu0 0.0
  %1146 = vmatpush2.msra.mxu0 0.0
  %1147 = vmatprep.subr.mxu0 0.0
  %1148 = vmatpush2.msra.mxu0 0.0
  %1149 = vmatprep.subr.mxu0 0.0
  %1150 = vmatpush2.msra.mxu0 0.0
  %1151 = vmatprep.subr.mxu0 0.0
  %1152 = vmatpush2.msra.mxu0 0.0
  %1153 = vmatprep.subr.mxu0 0.0
  %1154 = vmatpush2.msra.mxu0 0.0
  %1155 = vmatprep.subr.mxu0 0.0
  %1156 = vmatpush2.msra.mxu0 0.0
  %1157 = vmatprep.mubr.f32.mxu0 0.0
  %1158 = vmatmul.mubr.f32.gmra.mxu0 %v1091
  %v1159 = vpop.f32.mrf.mxu0
  %v1160 = vadd.f32 0.0, %v1159
  %v1161 = vpop.f32.mrf.mxu0
  %v1162 = vadd.f32 0.0, %v1161
  %1163 = vdwg.mxu0
  %v1166 = vcombine.low %v1160, %v1162
  %v1168 = vunpack.c.l.s4 1983009808
  %v1169 = vunpack.c.0.s8 %v1168
  %v1170 = vlaneseq
  %v1171 = vshrl.u32 %v1170, 7
  %v1172 = vsub.s32 %v1169, %v1171
  %v1173 = vrot.slane %v1166, %v1172
  %v1175 = vadd.f32 %v1074, %v1173
  %v1176 = vxor.u32 %v1175, 2147483648
  %v1177 = vmul.f32 %v1176, 1.442695
  %v1178 = vpow.pop %v1177
  %v1179 = vadd.f32 %v1178, 1.0
  %v1180 = vrcp.pop %v1179
  %v1181 = vmul.f32 1.0, %v1180
  %v1183 = vrot.slane %v1175, 2
  %v1185 = vtanh.pop %v1183
  %1186 = vrot.lane.b32.xlu0 %v1175, 64
  %v1187 = vpop.permute.xlu0 %1186
  %v1188 = vrot.slane %v1187, 2
  %v1190 = vxor.u32 %v1188, 2147483648
  %v1191 = vmul.f32 %v1190, 1.442695
  %v1192 = vpow.pop %v1191
  %v1193 = vadd.f32 %v1192, 1.0
  %v1194 = vrcp.pop %v1193
  %v1195 = vmul.f32 1.0, %v1194
  %v1196 = vmul.f32 %v1181, %v1051
  %v1197 = vmul.f32 %v1181, %v1185
  %1199 = vrot.lane.b32.xlu0 %v1197, 64
  %v1200 = vpop.permute.xlu0 %1199
  %v1202 = vadd.f32 %v1196, %v1200
  %v1203 = vtanh.pop %v1202
  %1205 = vrot.lane.b32.xlu0 %v1203, 64
  %v1206 = vpop.permute.xlu0 %1205
  %v1208 = vmul.f32 %v1195, %v1206
  %s1209 = scalar_lea.vmem %s2, 14
  %1210 = vst.msk [vmem:[%s1209] sm:$0x3] %vm152, %v1208
  %v1213 = vunpack.c.l.s4 1983009808
  %v1214 = vunpack.c.0.s8 %v1213
  %v1215 = vlaneseq
  %v1216 = vshrl.u32 %v1215, 7
  %v1217 = vsub.s32 %v1214, %v1216
  %v1218 = vrot.slane %v1208, %v1217
  %1219 = vrot.lane.b32.xlu0 %v1218, 96
  %v1220 = vpop.permute.xlu0 %1219
  %1222 = vst.msk [vmem:[%s3] sm:$0x3] %vm152, %v1220
  %vm1223 = vcmask 517120
  %1224 = vst.msk [vmem:[%s4] sm:$0x3] %vm1223, %v1208
  %v1227 = vunpack.c.l.s4 1983009808
  %v1228 = vunpack.c.0.s8 %v1227
  %v1229 = vlaneseq
  %v1230 = vshrl.u32 %v1229, 7
  %v1231 = vsub.s32 %v1228, %v1230
  %v1232 = vrot.slane %v1202, %v1231
  %1233 = vrot.lane.b32.xlu0 %v1232, 64
  %v1234 = vpop.permute.xlu0 %1233
  %1236 = vst.msk [vmem:[%s5] sm:$0x3] %vm1223, %v1234
  // Predicated region
  $region10: #{encoder_forward.2} parent=0 // pred_check
    _
  $region11: #{encoder_forward.2} parent=0 // pred_check_branch
    %1238 = sbr.rel (0) target = $region13
  $region12: #{encoder_forward.2} parent=0 // pred_region
    _
  $region13: #{encoder_forward.2} parent=0 // pred_fallthru
    _
  // Predicated region
  $region14: #{encoder_forward.2} parent=0 // pred_check
    _
  $region15: #{encoder_forward.2} parent=0 // pred_check_branch
    %1240 = sbr.rel (0) target = $region17
  $region16: #{encoder_forward.2} parent=0 // pred_region
    _
  $region17: #{encoder_forward.2} parent=0 // pred_fallthru
    _
  // Predicated region
  $region18: #{encoder_forward.2} parent=0 // pred_check
    _
  $region19: #{encoder_forward.2} parent=0 // pred_check_branch
    %1242 = sbr.rel (0) target = $region21
  $region20: #{encoder_forward.2} parent=0 // pred_region
    _
  $region21: #{encoder_forward.2} parent=0 // pred_fallthru
    _
  // Predicated region
  $region22: #{encoder_forward.2} parent=0 // pred_check
    _
  $region23: #{encoder_forward.2} parent=0 // pred_check_branch
    %1244 = sbr.rel (0) target = $region25
  $region24: #{encoder_forward.2} parent=0 // pred_region
    _
  $region25: #{encoder_forward.2} parent=0 // pred_fallthru
    _
  // Predicated region
  $region26: #{encoder_forward.2} parent=0 // pred_check
    _
  $region27: #{encoder_forward.2} parent=0 // pred_check_branch
    %1246 = sbr.rel (0) target = $region29
  $region28: #{encoder_forward.2} parent=0 // pred_region
    _
  $region29: #{encoder_forward.2} parent=0 // pred_fallthru
    _
  // Predicated region
  $region30: #{encoder_forward.2} parent=0 // pred_check
    _
  $region31: #{encoder_forward.2} parent=0 // pred_check_branch
    %1248 = sbr.rel (0) target = $region33
  $region32: #{encoder_forward.2} parent=0 // pred_region
    _
  $region33: #{encoder_forward.2} parent=0 // pred_fallthru
    _
  // Predicated region
  $region34: #{encoder_forward.2} parent=0 // pred_check
    _
  $region35: #{encoder_forward.2} parent=0 // pred_check_branch
    %1250 = sbr.rel (0) target = $region37
  $region36: #{encoder_forward.2} parent=0 // pred_region
    _
  $region37: #{encoder_forward.2} parent=0 // pred_fallthru
    _
  // Predicated region
  $region38: #{encoder_forward.2} parent=0 // pred_check
    _
  $region39: #{encoder_forward.2} parent=0 // pred_check_branch
    %1252 = sbr.rel (0) target = $region41
  $region40: #{encoder_forward.2} parent=0 // pred_region
    _
  $region41: #{encoder_forward.2} parent=0 // pred_fallthru
    _

</llo_original>
